<compile_context>
chip_gen: v5e
topology: v5e:2x2
jax: 0.10.0
libtpu: 0.0.40
codegen_flags: <defaults>
</compile_context>

<pallas_src>
import functools
import math

import jax
import jax.numpy as jnp
from jax import lax
from jax.experimental import pallas as pl
from jax.experimental.pallas import tpu as pltpu


def _mhsa_kernel(x_ref, wqkv_ref, bqkv_ref, wo_ref, bo_ref, o_ref,
                 qkv_ref, ctx_ref, *, nhead):
    # x_ref:   (Bblk, S, D) bf16       wqkv_ref: (D, 3D) bf16   bqkv_ref: (1, 3D) f32
    # wo_ref:  (D, D) bf16 (in, out)   bo_ref:   (1, D)  f32
    # qkv_ref: (M, 3D) bf16 scratch    ctx_ref:  (M, D)  bf16 scratch
    Bblk, S, D = x_ref.shape
    d_k = D // nhead
    M = Bblk * S

    # ---- Fused QKV projection: one MXU matmul with N = 3D (scale folded in). ----
    x2 = x_ref[...].reshape(M, D)                                       # bf16
    qkv = jnp.dot(x2, wqkv_ref[...], preferred_element_type=jnp.float32)
    # Single bf16 cast of the big (M, 3D) intermediate, staged in VMEM so the
    # per-head 64-lane-offset slices below are strided loads, not vreg shuffles.
    qkv_ref[...] = (qkv + bqkv_ref[...]).astype(jnp.bfloat16)

    # ---- Per-head attention (static unroll; batched over the batch-block). ----
    for h in range(nhead):
        lo = h * d_k
        qh = qkv_ref[:, lo:lo + d_k].reshape(Bblk, S, d_k)              # bf16
        kh = qkv_ref[:, D + lo:D + lo + d_k].reshape(Bblk, S, d_k)
        vh = qkv_ref[:, 2 * D + lo:2 * D + lo + d_k].reshape(Bblk, S, d_k)

        # scores[b,i,j] = qh[b,i,:] . kh[b,j,:]  (1/sqrt(d_k) already in wq)
        scores = lax.dot_general(
            qh, kh,
            dimension_numbers=(((2,), (2,)), ((0,), (0,))),
            preferred_element_type=jnp.float32)                         # (Bblk,S,S) f32

        # Numerically-stable softmax in f32; reciprocal on the EUP.
        m = jnp.max(scores, axis=-1, keepdims=True)
        p = jnp.exp(scores - m)
        l = jnp.sum(p, axis=-1, keepdims=True)
        attn = p * pl.reciprocal(l, approx=True)

        # ctx[b,i,:] = sum_j attn[b,i,j] * vh[b,j,:]
        ctx = lax.dot_general(
            attn.astype(jnp.bfloat16), vh,
            dimension_numbers=(((2,), (1,)), ((0,), (0,))),
            preferred_element_type=jnp.float32)                         # (Bblk,S,d_k) f32

        # Head concat fused into the scratch layout (column block h).
        ctx_ref[:, lo:lo + d_k] = ctx.reshape(M, d_k).astype(jnp.bfloat16)

    # ---- Output projection: single K = D contraction instead of 8 K = d_k. ----
    out = jnp.dot(ctx_ref[...], wo_ref[...], preferred_element_type=jnp.float32)
    out = out + bo_ref[...]
    o_ref[...] = out.reshape(Bblk, S, D).astype(o_ref.dtype)


def multi_head_self_attention(x, params, nhead, block_b=None):
    """x: (B, S, D) float32. params: dict of PyTorch-layout weights/biases."""
    B, S, D = x.shape
    assert D % nhead == 0
    d_k = D // nhead
    scale = 1.0 / math.sqrt(d_k)
    out_dtype = x.dtype

    f32 = jnp.float32
    # PyTorch nn.Linear weights are (out, in); transpose to (in, out) so y = x @ W + b.
    # Fold the attention scale into the Q projection (weights + bias), then fuse QKV.
    wq = params["wq"].astype(f32).T * scale
    wk = params["wk"].astype(f32).T
    wv = params["wv"].astype(f32).T
    wqkv = jnp.concatenate([wq, wk, wv], axis=1).astype(jnp.bfloat16)    # (D, 3D)
    bqkv = jnp.concatenate(
        [params["bq"].astype(f32) * scale,
         params["bk"].astype(f32),
         params["bv"].astype(f32)]).reshape(1, 3 * D)                    # f32

    # fc_out weight as (in, out): rows are head-major, matching the ctx scratch layout.
    wo = params["wo"].astype(f32).T.astype(jnp.bfloat16)                 # (D, D)
    bo = params["bo"].astype(f32).reshape(1, D)

    xb = x.astype(jnp.bfloat16)

    # Per-step VMEM footprint estimate (sized against v7x's 64 MiB ceiling).
    def vmem_bytes(bb):
        m = bb * S
        return (2 * bb * S * D * 2            # x block, double-buffered bf16
                + 2 * bb * S * D * 4          # out block, double-buffered f32
                + 2 * (D * 3 * D + D * D) * 2 # weight buffers (bf16)
                + 2 * 4 * D * 4               # bias buffers (f32)
                + m * 3 * D * 2               # staged qkv scratch (bf16)
                + m * D * 2                   # ctx scratch (bf16)
                + bb * S * S * 4)             # one f32 scores tile

    # Block-size selection: prefer ONE fat grid step (weight-DMA bound regime;
    # megacore sharding would duplicate the ~2 MiB weight stream into both
    # TensorCores). Only split when each step still sees >= 256 rows.
    if block_b is None:
        block_b = B
        if B % 2 == 0 and (B // 2) * S >= 256:
            block_b = B // 2
    while B % block_b:
        block_b -= 1
    vmem_budget = 48 * 1024 * 1024
    while block_b > 1 and (vmem_bytes(block_b) > vmem_budget or B % block_b):
        block_b -= 1
    grid = (B // block_b,)
    M = block_b * S

    # Advisory cost estimate so XLA schedules the host-side weight prep around us.
    flops = 2 * B * S * D * (4 * D) + 4 * B * S * S * D
    transcendentals = B * nhead * S * S
    bytes_accessed = (wqkv.size * 2 + wo.size * 2 + bqkv.size * 4 + bo.size * 4
                      + xb.size * 2 + B * S * D * 4)

    kernel = functools.partial(_mhsa_kernel, nhead=nhead)
    return pl.pallas_call(
        kernel,
        out_shape=jax.ShapeDtypeStruct((B, S, D), out_dtype),
        grid_spec=pltpu.PrefetchScalarGridSpec(
            num_scalar_prefetch=0,
            grid=grid,
            in_specs=[
                pl.BlockSpec((block_b, S, D), lambda b: (b, 0, 0)),      # x
                # Constant index_maps below: Pallas keeps a single resident
                # copy of the weights (no re-DMA across grid steps).
                pl.BlockSpec((D, 3 * D), lambda b: (0, 0)),              # fused W_qkv
                pl.BlockSpec((1, 3 * D), lambda b: (0, 0)),              # fused b_qkv
                pl.BlockSpec((D, D), lambda b: (0, 0)),                  # W_out
                pl.BlockSpec((1, D), lambda b: (0, 0)),                  # b_out
            ],
            out_specs=pl.BlockSpec((block_b, S, D), lambda b: (b, 0, 0)),
            scratch_shapes=[
                pltpu.VMEM((M, 3 * D), jnp.bfloat16),   # staged bf16 qkv
                pltpu.VMEM((M, D), jnp.bfloat16),       # concat-free head contexts
            ],
        ),
        compiler_params=pltpu.CompilerParams(
            dimension_semantics=("parallel",),
            vmem_limit_bytes=min(64 * 1024 * 1024,
                                 max(32 * 1024 * 1024, 2 * vmem_bytes(block_b)))),
        cost_estimate=pl.CostEstimate(
            flops=flops,
            transcendentals=transcendentals,
            bytes_accessed=bytes_accessed),
    )(xb, wqkv, bqkv, wo, bo)


def _reference(x, params, nhead):
    """Pure-JAX f32 reference mirroring the PyTorch forward."""
    B, S, D = x.shape
    d_k = D // nhead

    def lin(x, w, b):  # w is PyTorch (out, in)
        return x @ w.T + b

    q = lin(x, params["wq"], params["bq"]).reshape(B, S, nhead, d_k).transpose(0, 2, 1, 3)
    k = lin(x, params["wk"], params["bk"]).reshape(B, S, nhead, d_k).transpose(0, 2, 1, 3)
    v = lin(x, params["wv"], params["bv"]).reshape(B, S, nhead, d_k).transpose(0, 2, 1, 3)
    scores = jnp.einsum("bhqd,bhkd->bhqk", q, k) / math.sqrt(d_k)
    attn = jax.nn.softmax(scores, axis=-1)
    out = jnp.einsum("bhqk,bhkd->bhqd", attn, v)
    out = out.transpose(0, 2, 1, 3).reshape(B, S, D)
    return lin(out, params["wo"], params["bo"])


if __name__ == "__main__":
    d_model = 512
    nhead = 8
    batch = 2
    seq = 16

    key = jax.random.PRNGKey(0)
    keys = jax.random.split(key, 9)
    init = lambda k, shape, s=0.02: (s * jax.random.normal(k, shape)).astype(jnp.float32)

    params = {
        "wq": init(keys[0], (d_model, d_model)), "bq": init(keys[1], (d_model,)),
        "wk": init(keys[2], (d_model, d_model)), "bk": init(keys[3], (d_model,)),
        "wv": init(keys[4], (d_model, d_model)), "bv": init(keys[5], (d_model,)),
        "wo": init(keys[6], (d_model, d_model)), "bo": init(keys[7], (d_model,)),
    }
    x = jax.random.normal(keys[8], (batch, seq, d_model), dtype=jnp.float32)

    out = multi_head_self_attention(x, params, nhead)
    out = jax.block_until_ready(out)

    ref = _reference(x, params, nhead)
    assert out.shape == (batch, seq, d_model)
    # bf16 matmul inputs + approx reciprocal => loosened tolerance vs f32 reference.
    assert jnp.allclose(out, ref, atol=1e-2, rtol=1e-2), "mismatch vs reference"

    print("KERNEL_OK")
</pallas_src>

<mosaic_0001>
module attributes {stable_mosaic.version = 11 : i64} {
  func.func @_mhsa_kernel(%arg0: i32, %arg1: memref<2x16x512xbf16, #tpu.memory_space<vmem>>, %arg2: memref<512x1536xbf16, #tpu.memory_space<vmem>>, %arg3: memref<1x1536xf32, #tpu.memory_space<vmem>>, %arg4: memref<512x512xbf16, #tpu.memory_space<vmem>>, %arg5: memref<1x512xf32, #tpu.memory_space<vmem>>, %arg6: memref<2x16x512xf32, #tpu.memory_space<vmem>>, %arg7: memref<32x1536xbf16, #tpu.memory_space<vmem>>, %arg8: memref<32x512xbf16, #tpu.memory_space<vmem>>) attributes {dimension_semantics = [#tpu.dimension_semantics<parallel>], iteration_bounds = array<i64: 1>, scalar_prefetch = 0 : i64, scratch_operands = 2 : i64, tpu.core_type = #tpu.core_type<tc>, window_params = [{transform_indices = @transform_0, window_bounds = array<i64: 2, 16, 512>}, {pipeline_mode = #tpu.pipeline_mode<synchronous>, transform_indices = @transform_1, window_bounds = array<i64: 512, 1536>}, {pipeline_mode = #tpu.pipeline_mode<synchronous>, transform_indices = @transform_2, window_bounds = array<i64: 1, 1536>}, {pipeline_mode = #tpu.pipeline_mode<synchronous>, transform_indices = @transform_3, window_bounds = array<i64: 512, 512>}, {pipeline_mode = #tpu.pipeline_mode<synchronous>, transform_indices = @transform_4, window_bounds = array<i64: 1, 512>}, {transform_indices = @transform_5, window_bounds = array<i64: 2, 16, 512>}]} {
    %c0 = arith.constant 0 : index
    %c0_0 = arith.constant 0 : index
    %c0_1 = arith.constant 0 : index
    %0 = vector.load %arg1[%c0, %c0_0, %c0_1] : memref<2x16x512xbf16, #tpu.memory_space<vmem>>, vector<2x16x512xbf16>
    %1 = vector.shape_cast %0 : vector<2x16x512xbf16> to vector<32x512xbf16>
    %c0_2 = arith.constant 0 : index
    %c0_3 = arith.constant 0 : index
    %2 = vector.load %arg2[%c0_2, %c0_3] : memref<512x1536xbf16, #tpu.memory_space<vmem>>, vector<512x1536xbf16>
    %cst = arith.constant dense<0.000000e+00> : vector<32x1536xf32>
    %3 = tpu.matmul %1, %2, %cst {dimension_numbers = #tpu.dot_dimension_numbers<[1], [0], [0], [1], [0, 0, 1, 1], [], []>} : vector<32x512xbf16>, vector<512x1536xbf16>, vector<32x1536xf32> -> vector<32x1536xf32>
    %c0_4 = arith.constant 0 : index
    %c0_5 = arith.constant 0 : index
    %4 = vector.load %arg3[%c0_4, %c0_5] : memref<1x1536xf32, #tpu.memory_space<vmem>>, vector<1x1536xf32>
    %5 = vector.broadcast %4 : vector<1x1536xf32> to vector<32x1536xf32>
    %6 = arith.addf %3, %5 : vector<32x1536xf32>
    %7 = arith.truncf %6 : vector<32x1536xf32> to vector<32x1536xbf16>
    %c0_6 = arith.constant 0 : index
    %c0_7 = arith.constant 0 : index
    %8 = vector.load %arg7[%c0_6, %c0_7] : memref<32x1536xbf16, #tpu.memory_space<vmem>>, vector<32x1536xbf16>
    tpu.vector_store %arg7[%c0_6, %c0_7], %7 {strides = array<i32>} : memref<32x1536xbf16, #tpu.memory_space<vmem>>, vector<32x1536xbf16>,
    %c0_8 = arith.constant 0 : index
    %c0_9 = arith.constant 0 : index
    %9 = vector.load %arg7[%c0_8, %c0_9] : memref<32x1536xbf16, #tpu.memory_space<vmem>>, vector<32x64xbf16>
    %10 = vector.shape_cast %9 : vector<32x64xbf16> to vector<2x16x64xbf16>
    %c0_10 = arith.constant 0 : index
    %c512 = arith.constant 512 : index
    %11 = vector.load %arg7[%c0_10, %c512] : memref<32x1536xbf16, #tpu.memory_space<vmem>>, vector<32x64xbf16>
    %12 = vector.shape_cast %11 : vector<32x64xbf16> to vector<2x16x64xbf16>
    %c0_11 = arith.constant 0 : index
    %c1024 = arith.constant 1024 : index
    %13 = vector.load %arg7[%c0_11, %c1024] : memref<32x1536xbf16, #tpu.memory_space<vmem>>, vector<32x64xbf16>
    %14 = vector.shape_cast %13 : vector<32x64xbf16> to vector<2x16x64xbf16>
    %cst_12 = arith.constant dense<0.000000e+00> : vector<2x16x16xf32>
    %15 = tpu.matmul %10, %12, %cst_12 {dimension_numbers = #tpu.dot_dimension_numbers<[2], [2], [1], [1], [0, 0, 0, 1, 1, 1], [0], [0]>} : vector<2x16x64xbf16>, vector<2x16x64xbf16>, vector<2x16x16xf32> -> vector<2x16x16xf32>
    %cst_13 = arith.constant dense<0xFF800000> : vector<2x16xf32>
    %16 = vector.multi_reduction <maximumf>, %15, %cst_13 [2] : vector<2x16x16xf32> to vector<2x16xf32>
    %17 = vector.shape_cast %16 : vector<2x16xf32> to vector<2x16x1xf32>
    %18 = vector.broadcast %17 : vector<2x16x1xf32> to vector<2x16x16xf32>
    %19 = arith.subf %15, %18 : vector<2x16x16xf32>
    %20 = math.exp %19 : vector<2x16x16xf32>
    %cst_14 = arith.constant dense<0.000000e+00> : vector<2x16xf32>
    %21 = vector.multi_reduction <add>, %20, %cst_14 [2] : vector<2x16x16xf32> to vector<2x16xf32>
    %22 = vector.shape_cast %21 : vector<2x16xf32> to vector<2x16x1xf32>
    %23 = tpu.reciprocal %22 {approx = true} : vector<2x16x1xf32> -> vector<2x16x1xf32>
    %24 = vector.broadcast %23 : vector<2x16x1xf32> to vector<2x16x16xf32>
    %25 = arith.mulf %20, %24 : vector<2x16x16xf32>
    %26 = arith.truncf %25 : vector<2x16x16xf32> to vector<2x16x16xbf16>
    %cst_15 = arith.constant dense<0.000000e+00> : vector<2x16x64xf32>
    %27 = tpu.matmul %26, %14, %cst_15 {dimension_numbers = #tpu.dot_dimension_numbers<[2], [1], [1], [2], [0, 0, 0, 1, 1, 2], [0], [0]>} : vector<2x16x16xbf16>, vector<2x16x64xbf16>, vector<2x16x64xf32> -> vector<2x16x64xf32>
    %28 = vector.shape_cast %27 : vector<2x16x64xf32> to vector<32x64xf32>
    %29 = arith.truncf %28 : vector<32x64xf32> to vector<32x64xbf16>
    %c0_16 = arith.constant 0 : index
    %c0_17 = arith.constant 0 : index
    %30 = vector.load %arg8[%c0_16, %c0_17] : memref<32x512xbf16, #tpu.memory_space<vmem>>, vector<32x64xbf16>
    tpu.vector_store %arg8[%c0_16, %c0_17], %29 {strides = array<i32>} : memref<32x512xbf16, #tpu.memory_space<vmem>>, vector<32x64xbf16>,
    %c0_18 = arith.constant 0 : index
    %c64 = arith.constant 64 : index
    %31 = vector.load %arg7[%c0_18, %c64] : memref<32x1536xbf16, #tpu.memory_space<vmem>>, vector<32x64xbf16>
    %32 = vector.shape_cast %31 : vector<32x64xbf16> to vector<2x16x64xbf16>
    %c0_19 = arith.constant 0 : index
    %c576 = arith.constant 576 : index
    %33 = vector.load %arg7[%c0_19, %c576] : memref<32x1536xbf16, #tpu.memory_space<vmem>>, vector<32x64xbf16>
    %34 = vector.shape_cast %33 : vector<32x64xbf16> to vector<2x16x64xbf16>
    %c0_20 = arith.constant 0 : index
    %c1088 = arith.constant 1088 : index
    %35 = vector.load %arg7[%c0_20, %c1088] : memref<32x1536xbf16, #tpu.memory_space<vmem>>, vector<32x64xbf16>
    %36 = vector.shape_cast %35 : vector<32x64xbf16> to vector<2x16x64xbf16>
    %cst_21 = arith.constant dense<0.000000e+00> : vector<2x16x16xf32>
    %37 = tpu.matmul %32, %34, %cst_21 {dimension_numbers = #tpu.dot_dimension_numbers<[2], [2], [1], [1], [0, 0, 0, 1, 1, 1], [0], [0]>} : vector<2x16x64xbf16>, vector<2x16x64xbf16>, vector<2x16x16xf32> -> vector<2x16x16xf32>
    %cst_22 = arith.constant dense<0xFF800000> : vector<2x16xf32>
    %38 = vector.multi_reduction <maximumf>, %37, %cst_22 [2] : vector<2x16x16xf32> to vector<2x16xf32>
    %39 = vector.shape_cast %38 : vector<2x16xf32> to vector<2x16x1xf32>
    %40 = vector.broadcast %39 : vector<2x16x1xf32> to vector<2x16x16xf32>
    %41 = arith.subf %37, %40 : vector<2x16x16xf32>
    %42 = math.exp %41 : vector<2x16x16xf32>
    %cst_23 = arith.constant dense<0.000000e+00> : vector<2x16xf32>
    %43 = vector.multi_reduction <add>, %42, %cst_23 [2] : vector<2x16x16xf32> to vector<2x16xf32>
    %44 = vector.shape_cast %43 : vector<2x16xf32> to vector<2x16x1xf32>
    %45 = tpu.reciprocal %44 {approx = true} : vector<2x16x1xf32> -> vector<2x16x1xf32>
    %46 = vector.broadcast %45 : vector<2x16x1xf32> to vector<2x16x16xf32>
    %47 = arith.mulf %42, %46 : vector<2x16x16xf32>
    %48 = arith.truncf %47 : vector<2x16x16xf32> to vector<2x16x16xbf16>
    %cst_24 = arith.constant dense<0.000000e+00> : vector<2x16x64xf32>
    %49 = tpu.matmul %48, %36, %cst_24 {dimension_numbers = #tpu.dot_dimension_numbers<[2], [1], [1], [2], [0, 0, 0, 1, 1, 2], [0], [0]>} : vector<2x16x16xbf16>, vector<2x16x64xbf16>, vector<2x16x64xf32> -> vector<2x16x64xf32>
    %50 = vector.shape_cast %49 : vector<2x16x64xf32> to vector<32x64xf32>
    %51 = arith.truncf %50 : vector<32x64xf32> to vector<32x64xbf16>
    %c0_25 = arith.constant 0 : index
    %c64_26 = arith.constant 64 : index
    %52 = vector.load %arg8[%c0_25, %c64_26] : memref<32x512xbf16, #tpu.memory_space<vmem>>, vector<32x64xbf16>
    tpu.vector_store %arg8[%c0_25, %c64_26], %51 {strides = array<i32>} : memref<32x512xbf16, #tpu.memory_space<vmem>>, vector<32x64xbf16>,
    %c0_27 = arith.constant 0 : index
    %c128 = arith.constant 128 : index
    %53 = vector.load %arg7[%c0_27, %c128] : memref<32x1536xbf16, #tpu.memory_space<vmem>>, vector<32x64xbf16>
    %54 = vector.shape_cast %53 : vector<32x64xbf16> to vector<2x16x64xbf16>
    %c0_28 = arith.constant 0 : index
    %c640 = arith.constant 640 : index
    %55 = vector.load %arg7[%c0_28, %c640] : memref<32x1536xbf16, #tpu.memory_space<vmem>>, vector<32x64xbf16>
    %56 = vector.shape_cast %55 : vector<32x64xbf16> to vector<2x16x64xbf16>
    %c0_29 = arith.constant 0 : index
    %c1152 = arith.constant 1152 : index
    %57 = vector.load %arg7[%c0_29, %c1152] : memref<32x1536xbf16, #tpu.memory_space<vmem>>, vector<32x64xbf16>
    %58 = vector.shape_cast %57 : vector<32x64xbf16> to vector<2x16x64xbf16>
    %cst_30 = arith.constant dense<0.000000e+00> : vector<2x16x16xf32>
    %59 = tpu.matmul %54, %56, %cst_30 {dimension_numbers = #tpu.dot_dimension_numbers<[2], [2], [1], [1], [0, 0, 0, 1, 1, 1], [0], [0]>} : vector<2x16x64xbf16>, vector<2x16x64xbf16>, vector<2x16x16xf32> -> vector<2x16x16xf32>
    %cst_31 = arith.constant dense<0xFF800000> : vector<2x16xf32>
    %60 = vector.multi_reduction <maximumf>, %59, %cst_31 [2] : vector<2x16x16xf32> to vector<2x16xf32>
    %61 = vector.shape_cast %60 : vector<2x16xf32> to vector<2x16x1xf32>
    %62 = vector.broadcast %61 : vector<2x16x1xf32> to vector<2x16x16xf32>
    %63 = arith.subf %59, %62 : vector<2x16x16xf32>
    %64 = math.exp %63 : vector<2x16x16xf32>
    %cst_32 = arith.constant dense<0.000000e+00> : vector<2x16xf32>
    %65 = vector.multi_reduction <add>, %64, %cst_32 [2] : vector<2x16x16xf32> to vector<2x16xf32>
    %66 = vector.shape_cast %65 : vector<2x16xf32> to vector<2x16x1xf32>
    %67 = tpu.reciprocal %66 {approx = true} : vector<2x16x1xf32> -> vector<2x16x1xf32>
    %68 = vector.broadcast %67 : vector<2x16x1xf32> to vector<2x16x16xf32>
    %69 = arith.mulf %64, %68 : vector<2x16x16xf32>
    %70 = arith.truncf %69 : vector<2x16x16xf32> to vector<2x16x16xbf16>
    %cst_33 = arith.constant dense<0.000000e+00> : vector<2x16x64xf32>
    %71 = tpu.matmul %70, %58, %cst_33 {dimension_numbers = #tpu.dot_dimension_numbers<[2], [1], [1], [2], [0, 0, 0, 1, 1, 2], [0], [0]>} : vector<2x16x16xbf16>, vector<2x16x64xbf16>, vector<2x16x64xf32> -> vector<2x16x64xf32>
    %72 = vector.shape_cast %71 : vector<2x16x64xf32> to vector<32x64xf32>
    %73 = arith.truncf %72 : vector<32x64xf32> to vector<32x64xbf16>
    %c0_34 = arith.constant 0 : index
    %c128_35 = arith.constant 128 : index
    %74 = vector.load %arg8[%c0_34, %c128_35] : memref<32x512xbf16, #tpu.memory_space<vmem>>, vector<32x64xbf16>
    tpu.vector_store %arg8[%c0_34, %c128_35], %73 {strides = array<i32>} : memref<32x512xbf16, #tpu.memory_space<vmem>>, vector<32x64xbf16>,
    %c0_36 = arith.constant 0 : index
    %c192 = arith.constant 192 : index
    %75 = vector.load %arg7[%c0_36, %c192] : memref<32x1536xbf16, #tpu.memory_space<vmem>>, vector<32x64xbf16>
    %76 = vector.shape_cast %75 : vector<32x64xbf16> to vector<2x16x64xbf16>
    %c0_37 = arith.constant 0 : index
    %c704 = arith.constant 704 : index
    %77 = vector.load %arg7[%c0_37, %c704] : memref<32x1536xbf16, #tpu.memory_space<vmem>>, vector<32x64xbf16>
    %78 = vector.shape_cast %77 : vector<32x64xbf16> to vector<2x16x64xbf16>
    %c0_38 = arith.constant 0 : index
    %c1216 = arith.constant 1216 : index
    %79 = vector.load %arg7[%c0_38, %c1216] : memref<32x1536xbf16, #tpu.memory_space<vmem>>, vector<32x64xbf16>
    %80 = vector.shape_cast %79 : vector<32x64xbf16> to vector<2x16x64xbf16>
    %cst_39 = arith.constant dense<0.000000e+00> : vector<2x16x16xf32>
    %81 = tpu.matmul %76, %78, %cst_39 {dimension_numbers = #tpu.dot_dimension_numbers<[2], [2], [1], [1], [0, 0, 0, 1, 1, 1], [0], [0]>} : vector<2x16x64xbf16>, vector<2x16x64xbf16>, vector<2x16x16xf32> -> vector<2x16x16xf32>
    %cst_40 = arith.constant dense<0xFF800000> : vector<2x16xf32>
    %82 = vector.multi_reduction <maximumf>, %81, %cst_40 [2] : vector<2x16x16xf32> to vector<2x16xf32>
    %83 = vector.shape_cast %82 : vector<2x16xf32> to vector<2x16x1xf32>
    %84 = vector.broadcast %83 : vector<2x16x1xf32> to vector<2x16x16xf32>
    %85 = arith.subf %81, %84 : vector<2x16x16xf32>
    %86 = math.exp %85 : vector<2x16x16xf32>
    %cst_41 = arith.constant dense<0.000000e+00> : vector<2x16xf32>
    %87 = vector.multi_reduction <add>, %86, %cst_41 [2] : vector<2x16x16xf32> to vector<2x16xf32>
    %88 = vector.shape_cast %87 : vector<2x16xf32> to vector<2x16x1xf32>
    %89 = tpu.reciprocal %88 {approx = true} : vector<2x16x1xf32> -> vector<2x16x1xf32>
    %90 = vector.broadcast %89 : vector<2x16x1xf32> to vector<2x16x16xf32>
    %91 = arith.mulf %86, %90 : vector<2x16x16xf32>
    %92 = arith.truncf %91 : vector<2x16x16xf32> to vector<2x16x16xbf16>
    %cst_42 = arith.constant dense<0.000000e+00> : vector<2x16x64xf32>
    %93 = tpu.matmul %92, %80, %cst_42 {dimension_numbers = #tpu.dot_dimension_numbers<[2], [1], [1], [2], [0, 0, 0, 1, 1, 2], [0], [0]>} : vector<2x16x16xbf16>, vector<2x16x64xbf16>, vector<2x16x64xf32> -> vector<2x16x64xf32>
    %94 = vector.shape_cast %93 : vector<2x16x64xf32> to vector<32x64xf32>
    %95 = arith.truncf %94 : vector<32x64xf32> to vector<32x64xbf16>
    %c0_43 = arith.constant 0 : index
    %c192_44 = arith.constant 192 : index
    %96 = vector.load %arg8[%c0_43, %c192_44] : memref<32x512xbf16, #tpu.memory_space<vmem>>, vector<32x64xbf16>
    tpu.vector_store %arg8[%c0_43, %c192_44], %95 {strides = array<i32>} : memref<32x512xbf16, #tpu.memory_space<vmem>>, vector<32x64xbf16>,
    %c0_45 = arith.constant 0 : index
    %c256 = arith.constant 256 : index
    %97 = vector.load %arg7[%c0_45, %c256] : memref<32x1536xbf16, #tpu.memory_space<vmem>>, vector<32x64xbf16>
    %98 = vector.shape_cast %97 : vector<32x64xbf16> to vector<2x16x64xbf16>
    %c0_46 = arith.constant 0 : index
    %c768 = arith.constant 768 : index
    %99 = vector.load %arg7[%c0_46, %c768] : memref<32x1536xbf16, #tpu.memory_space<vmem>>, vector<32x64xbf16>
    %100 = vector.shape_cast %99 : vector<32x64xbf16> to vector<2x16x64xbf16>
    %c0_47 = arith.constant 0 : index
    %c1280 = arith.constant 1280 : index
    %101 = vector.load %arg7[%c0_47, %c1280] : memref<32x1536xbf16, #tpu.memory_space<vmem>>, vector<32x64xbf16>
    %102 = vector.shape_cast %101 : vector<32x64xbf16> to vector<2x16x64xbf16>
    %cst_48 = arith.constant dense<0.000000e+00> : vector<2x16x16xf32>
    %103 = tpu.matmul %98, %100, %cst_48 {dimension_numbers = #tpu.dot_dimension_numbers<[2], [2], [1], [1], [0, 0, 0, 1, 1, 1], [0], [0]>} : vector<2x16x64xbf16>, vector<2x16x64xbf16>, vector<2x16x16xf32> -> vector<2x16x16xf32>
    %cst_49 = arith.constant dense<0xFF800000> : vector<2x16xf32>
    %104 = vector.multi_reduction <maximumf>, %103, %cst_49 [2] : vector<2x16x16xf32> to vector<2x16xf32>
    %105 = vector.shape_cast %104 : vector<2x16xf32> to vector<2x16x1xf32>
    %106 = vector.broadcast %105 : vector<2x16x1xf32> to vector<2x16x16xf32>
    %107 = arith.subf %103, %106 : vector<2x16x16xf32>
    %108 = math.exp %107 : vector<2x16x16xf32>
    %cst_50 = arith.constant dense<0.000000e+00> : vector<2x16xf32>
    %109 = vector.multi_reduction <add>, %108, %cst_50 [2] : vector<2x16x16xf32> to vector<2x16xf32>
    %110 = vector.shape_cast %109 : vector<2x16xf32> to vector<2x16x1xf32>
    %111 = tpu.reciprocal %110 {approx = true} : vector<2x16x1xf32> -> vector<2x16x1xf32>
    %112 = vector.broadcast %111 : vector<2x16x1xf32> to vector<2x16x16xf32>
    %113 = arith.mulf %108, %112 : vector<2x16x16xf32>
    %114 = arith.truncf %113 : vector<2x16x16xf32> to vector<2x16x16xbf16>
    %cst_51 = arith.constant dense<0.000000e+00> : vector<2x16x64xf32>
    %115 = tpu.matmul %114, %102, %cst_51 {dimension_numbers = #tpu.dot_dimension_numbers<[2], [1], [1], [2], [0, 0, 0, 1, 1, 2], [0], [0]>} : vector<2x16x16xbf16>, vector<2x16x64xbf16>, vector<2x16x64xf32> -> vector<2x16x64xf32>
    %116 = vector.shape_cast %115 : vector<2x16x64xf32> to vector<32x64xf32>
    %117 = arith.truncf %116 : vector<32x64xf32> to vector<32x64xbf16>
    %c0_52 = arith.constant 0 : index
    %c256_53 = arith.constant 256 : index
    %118 = vector.load %arg8[%c0_52, %c256_53] : memref<32x512xbf16, #tpu.memory_space<vmem>>, vector<32x64xbf16>
    tpu.vector_store %arg8[%c0_52, %c256_53], %117 {strides = array<i32>} : memref<32x512xbf16, #tpu.memory_space<vmem>>, vector<32x64xbf16>,
    %c0_54 = arith.constant 0 : index
    %c320 = arith.constant 320 : index
    %119 = vector.load %arg7[%c0_54, %c320] : memref<32x1536xbf16, #tpu.memory_space<vmem>>, vector<32x64xbf16>
    %120 = vector.shape_cast %119 : vector<32x64xbf16> to vector<2x16x64xbf16>
    %c0_55 = arith.constant 0 : index
    %c832 = arith.constant 832 : index
    %121 = vector.load %arg7[%c0_55, %c832] : memref<32x1536xbf16, #tpu.memory_space<vmem>>, vector<32x64xbf16>
    %122 = vector.shape_cast %121 : vector<32x64xbf16> to vector<2x16x64xbf16>
    %c0_56 = arith.constant 0 : index
    %c1344 = arith.constant 1344 : index
    %123 = vector.load %arg7[%c0_56, %c1344] : memref<32x1536xbf16, #tpu.memory_space<vmem>>, vector<32x64xbf16>
    %124 = vector.shape_cast %123 : vector<32x64xbf16> to vector<2x16x64xbf16>
    %cst_57 = arith.constant dense<0.000000e+00> : vector<2x16x16xf32>
    %125 = tpu.matmul %120, %122, %cst_57 {dimension_numbers = #tpu.dot_dimension_numbers<[2], [2], [1], [1], [0, 0, 0, 1, 1, 1], [0], [0]>} : vector<2x16x64xbf16>, vector<2x16x64xbf16>, vector<2x16x16xf32> -> vector<2x16x16xf32>
    %cst_58 = arith.constant dense<0xFF800000> : vector<2x16xf32>
    %126 = vector.multi_reduction <maximumf>, %125, %cst_58 [2] : vector<2x16x16xf32> to vector<2x16xf32>
    %127 = vector.shape_cast %126 : vector<2x16xf32> to vector<2x16x1xf32>
    %128 = vector.broadcast %127 : vector<2x16x1xf32> to vector<2x16x16xf32>
    %129 = arith.subf %125, %128 : vector<2x16x16xf32>
    %130 = math.exp %129 : vector<2x16x16xf32>
    %cst_59 = arith.constant dense<0.000000e+00> : vector<2x16xf32>
    %131 = vector.multi_reduction <add>, %130, %cst_59 [2] : vector<2x16x16xf32> to vector<2x16xf32>
    %132 = vector.shape_cast %131 : vector<2x16xf32> to vector<2x16x1xf32>
    %133 = tpu.reciprocal %132 {approx = true} : vector<2x16x1xf32> -> vector<2x16x1xf32>
    %134 = vector.broadcast %133 : vector<2x16x1xf32> to vector<2x16x16xf32>
    %135 = arith.mulf %130, %134 : vector<2x16x16xf32>
    %136 = arith.truncf %135 : vector<2x16x16xf32> to vector<2x16x16xbf16>
    %cst_60 = arith.constant dense<0.000000e+00> : vector<2x16x64xf32>
    %137 = tpu.matmul %136, %124, %cst_60 {dimension_numbers = #tpu.dot_dimension_numbers<[2], [1], [1], [2], [0, 0, 0, 1, 1, 2], [0], [0]>} : vector<2x16x16xbf16>, vector<2x16x64xbf16>, vector<2x16x64xf32> -> vector<2x16x64xf32>
    %138 = vector.shape_cast %137 : vector<2x16x64xf32> to vector<32x64xf32>
    %139 = arith.truncf %138 : vector<32x64xf32> to vector<32x64xbf16>
    %c0_61 = arith.constant 0 : index
    %c320_62 = arith.constant 320 : index
    %140 = vector.load %arg8[%c0_61, %c320_62] : memref<32x512xbf16, #tpu.memory_space<vmem>>, vector<32x64xbf16>
    tpu.vector_store %arg8[%c0_61, %c320_62], %139 {strides = array<i32>} : memref<32x512xbf16, #tpu.memory_space<vmem>>, vector<32x64xbf16>,
    %c0_63 = arith.constant 0 : index
    %c384 = arith.constant 384 : index
    %141 = vector.load %arg7[%c0_63, %c384] : memref<32x1536xbf16, #tpu.memory_space<vmem>>, vector<32x64xbf16>
    %142 = vector.shape_cast %141 : vector<32x64xbf16> to vector<2x16x64xbf16>
    %c0_64 = arith.constant 0 : index
    %c896 = arith.constant 896 : index
    %143 = vector.load %arg7[%c0_64, %c896] : memref<32x1536xbf16, #tpu.memory_space<vmem>>, vector<32x64xbf16>
    %144 = vector.shape_cast %143 : vector<32x64xbf16> to vector<2x16x64xbf16>
    %c0_65 = arith.constant 0 : index
    %c1408 = arith.constant 1408 : index
    %145 = vector.load %arg7[%c0_65, %c1408] : memref<32x1536xbf16, #tpu.memory_space<vmem>>, vector<32x64xbf16>
    %146 = vector.shape_cast %145 : vector<32x64xbf16> to vector<2x16x64xbf16>
    %cst_66 = arith.constant dense<0.000000e+00> : vector<2x16x16xf32>
    %147 = tpu.matmul %142, %144, %cst_66 {dimension_numbers = #tpu.dot_dimension_numbers<[2], [2], [1], [1], [0, 0, 0, 1, 1, 1], [0], [0]>} : vector<2x16x64xbf16>, vector<2x16x64xbf16>, vector<2x16x16xf32> -> vector<2x16x16xf32>
    %cst_67 = arith.constant dense<0xFF800000> : vector<2x16xf32>
    %148 = vector.multi_reduction <maximumf>, %147, %cst_67 [2] : vector<2x16x16xf32> to vector<2x16xf32>
    %149 = vector.shape_cast %148 : vector<2x16xf32> to vector<2x16x1xf32>
    %150 = vector.broadcast %149 : vector<2x16x1xf32> to vector<2x16x16xf32>
    %151 = arith.subf %147, %150 : vector<2x16x16xf32>
    %152 = math.exp %151 : vector<2x16x16xf32>
    %cst_68 = arith.constant dense<0.000000e+00> : vector<2x16xf32>
    %153 = vector.multi_reduction <add>, %152, %cst_68 [2] : vector<2x16x16xf32> to vector<2x16xf32>
    %154 = vector.shape_cast %153 : vector<2x16xf32> to vector<2x16x1xf32>
    %155 = tpu.reciprocal %154 {approx = true} : vector<2x16x1xf32> -> vector<2x16x1xf32>
    %156 = vector.broadcast %155 : vector<2x16x1xf32> to vector<2x16x16xf32>
    %157 = arith.mulf %152, %156 : vector<2x16x16xf32>
    %158 = arith.truncf %157 : vector<2x16x16xf32> to vector<2x16x16xbf16>
    %cst_69 = arith.constant dense<0.000000e+00> : vector<2x16x64xf32>
    %159 = tpu.matmul %158, %146, %cst_69 {dimension_numbers = #tpu.dot_dimension_numbers<[2], [1], [1], [2], [0, 0, 0, 1, 1, 2], [0], [0]>} : vector<2x16x16xbf16>, vector<2x16x64xbf16>, vector<2x16x64xf32> -> vector<2x16x64xf32>
    %160 = vector.shape_cast %159 : vector<2x16x64xf32> to vector<32x64xf32>
    %161 = arith.truncf %160 : vector<32x64xf32> to vector<32x64xbf16>
    %c0_70 = arith.constant 0 : index
    %c384_71 = arith.constant 384 : index
    %162 = vector.load %arg8[%c0_70, %c384_71] : memref<32x512xbf16, #tpu.memory_space<vmem>>, vector<32x64xbf16>
    tpu.vector_store %arg8[%c0_70, %c384_71], %161 {strides = array<i32>} : memref<32x512xbf16, #tpu.memory_space<vmem>>, vector<32x64xbf16>,
    %c0_72 = arith.constant 0 : index
    %c448 = arith.constant 448 : index
    %163 = vector.load %arg7[%c0_72, %c448] : memref<32x1536xbf16, #tpu.memory_space<vmem>>, vector<32x64xbf16>
    %164 = vector.shape_cast %163 : vector<32x64xbf16> to vector<2x16x64xbf16>
    %c0_73 = arith.constant 0 : index
    %c960 = arith.constant 960 : index
    %165 = vector.load %arg7[%c0_73, %c960] : memref<32x1536xbf16, #tpu.memory_space<vmem>>, vector<32x64xbf16>
    %166 = vector.shape_cast %165 : vector<32x64xbf16> to vector<2x16x64xbf16>
    %c0_74 = arith.constant 0 : index
    %c1472 = arith.constant 1472 : index
    %167 = vector.load %arg7[%c0_74, %c1472] : memref<32x1536xbf16, #tpu.memory_space<vmem>>, vector<32x64xbf16>
    %168 = vector.shape_cast %167 : vector<32x64xbf16> to vector<2x16x64xbf16>
    %cst_75 = arith.constant dense<0.000000e+00> : vector<2x16x16xf32>
    %169 = tpu.matmul %164, %166, %cst_75 {dimension_numbers = #tpu.dot_dimension_numbers<[2], [2], [1], [1], [0, 0, 0, 1, 1, 1], [0], [0]>} : vector<2x16x64xbf16>, vector<2x16x64xbf16>, vector<2x16x16xf32> -> vector<2x16x16xf32>
    %cst_76 = arith.constant dense<0xFF800000> : vector<2x16xf32>
    %170 = vector.multi_reduction <maximumf>, %169, %cst_76 [2] : vector<2x16x16xf32> to vector<2x16xf32>
    %171 = vector.shape_cast %170 : vector<2x16xf32> to vector<2x16x1xf32>
    %172 = vector.broadcast %171 : vector<2x16x1xf32> to vector<2x16x16xf32>
    %173 = arith.subf %169, %172 : vector<2x16x16xf32>
    %174 = math.exp %173 : vector<2x16x16xf32>
    %cst_77 = arith.constant dense<0.000000e+00> : vector<2x16xf32>
    %175 = vector.multi_reduction <add>, %174, %cst_77 [2] : vector<2x16x16xf32> to vector<2x16xf32>
    %176 = vector.shape_cast %175 : vector<2x16xf32> to vector<2x16x1xf32>
    %177 = tpu.reciprocal %176 {approx = true} : vector<2x16x1xf32> -> vector<2x16x1xf32>
    %178 = vector.broadcast %177 : vector<2x16x1xf32> to vector<2x16x16xf32>
    %179 = arith.mulf %174, %178 : vector<2x16x16xf32>
    %180 = arith.truncf %179 : vector<2x16x16xf32> to vector<2x16x16xbf16>
    %cst_78 = arith.constant dense<0.000000e+00> : vector<2x16x64xf32>
    %181 = tpu.matmul %180, %168, %cst_78 {dimension_numbers = #tpu.dot_dimension_numbers<[2], [1], [1], [2], [0, 0, 0, 1, 1, 2], [0], [0]>} : vector<2x16x16xbf16>, vector<2x16x64xbf16>, vector<2x16x64xf32> -> vector<2x16x64xf32>
    %182 = vector.shape_cast %181 : vector<2x16x64xf32> to vector<32x64xf32>
    %183 = arith.truncf %182 : vector<32x64xf32> to vector<32x64xbf16>
    %c0_79 = arith.constant 0 : index
    %c448_80 = arith.constant 448 : index
    %184 = vector.load %arg8[%c0_79, %c448_80] : memref<32x512xbf16, #tpu.memory_space<vmem>>, vector<32x64xbf16>
    tpu.vector_store %arg8[%c0_79, %c448_80], %183 {strides = array<i32>} : memref<32x512xbf16, #tpu.memory_space<vmem>>, vector<32x64xbf16>,
    %c0_81 = arith.constant 0 : index
    %c0_82 = arith.constant 0 : index
    %185 = vector.load %arg8[%c0_81, %c0_82] : memref<32x512xbf16, #tpu.memory_space<vmem>>, vector<32x512xbf16>
    %c0_83 = arith.constant 0 : index
    %c0_84 = arith.constant 0 : index
    %186 = vector.load %arg4[%c0_83, %c0_84] : memref<512x512xbf16, #tpu.memory_space<vmem>>, vector<512x512xbf16>
    %cst_85 = arith.constant dense<0.000000e+00> : vector<32x512xf32>
    %187 = tpu.matmul %185, %186, %cst_85 {dimension_numbers = #tpu.dot_dimension_numbers<[1], [0], [0], [1], [0, 0, 1, 1], [], []>} : vector<32x512xbf16>, vector<512x512xbf16>, vector<32x512xf32> -> vector<32x512xf32>
    %c0_86 = arith.constant 0 : index
    %c0_87 = arith.constant 0 : index
    %188 = vector.load %arg5[%c0_86, %c0_87] : memref<1x512xf32, #tpu.memory_space<vmem>>, vector<1x512xf32>
    %189 = vector.broadcast %188 : vector<1x512xf32> to vector<32x512xf32>
    %190 = arith.addf %187, %189 : vector<32x512xf32>
    %191 = vector.shape_cast %190 : vector<32x512xf32> to vector<2x16x512xf32>
    %c0_88 = arith.constant 0 : index
    %c0_89 = arith.constant 0 : index
    %c0_90 = arith.constant 0 : index
    %192 = vector.load %arg6[%c0_88, %c0_89, %c0_90] : memref<2x16x512xf32, #tpu.memory_space<vmem>>, vector<2x16x512xf32>
    tpu.vector_store %arg6[%c0_88, %c0_89, %c0_90], %191 {strides = array<i32>} : memref<2x16x512xf32, #tpu.memory_space<vmem>>, vector<2x16x512xf32>,
    return
  }
  func.func @transform_0(%arg0: i32) -> (i32, i32, i32) {
    %c0_i32 = arith.constant 0 : i32
    %c0_i32_0 = arith.constant 0 : i32
    %c0_i32_1 = arith.constant 0 : i32
    return %arg0, %c0_i32, %c0_i32_0 : i32, i32, i32
  }
  func.func @transform_1(%arg0: i32) -> (i32, i32) {
    %c0_i32 = arith.constant 0 : i32
    %c0_i32_0 = arith.constant 0 : i32
    %c0_i32_1 = arith.constant 0 : i32
    return %c0_i32, %c0_i32_0 : i32, i32
  }
  func.func @transform_2(%arg0: i32) -> (i32, i32) {
    %c0_i32 = arith.constant 0 : i32
    %c0_i32_0 = arith.constant 0 : i32
    %c0_i32_1 = arith.constant 0 : i32
    return %c0_i32, %c0_i32_0 : i32, i32
  }
  func.func @transform_3(%arg0: i32) -> (i32, i32) {
    %c0_i32 = arith.constant 0 : i32
    %c0_i32_0 = arith.constant 0 : i32
    %c0_i32_1 = arith.constant 0 : i32
    return %c0_i32, %c0_i32_0 : i32, i32
  }
  func.func @transform_4(%arg0: i32) -> (i32, i32) {
    %c0_i32 = arith.constant 0 : i32
    %c0_i32_0 = arith.constant 0 : i32
    %c0_i32_1 = arith.constant 0 : i32
    return %c0_i32, %c0_i32_0 : i32, i32
  }
  func.func @transform_5(%arg0: i32) -> (i32, i32, i32) {
    %c0_i32 = arith.constant 0 : i32
    %c0_i32_0 = arith.constant 0 : i32
    %c0_i32_1 = arith.constant 0 : i32
    return %arg0, %c0_i32, %c0_i32_0 : i32, i32, i32
  }
}

</mosaic_0001>

<llo_original>
// kernel: tpu_custom_call.1
$region0: #{tpu_custom_call.1}
  #allocation0 [shape = 'u32[]', space=smem, size = 0x4, offset = 0x4, fixed_abs, tag = 'smem constant byte address 0x4 - core index']
  #allocation1 [shape = 'u32[72,128]{1,0:T(1,128)}', space=vmem, size = 0x9000, scoped, tag = 'internal scratch']
  #allocation2 [shape = 'bf16[32,1536]{1,0:T(8,128)(2,1)}', space=vmem, size = 0x18000, scoped, tag = 'scratch operand']
  #allocation3 [shape = 'bf16[32,512]{1,0:T(8,128)(2,1)}', space=vmem, size = 0x8000, scoped, tag = 'scratch operand']
  %s0 = inlined_call_operand.hbm [shape: bf16[2,16,512], index: 0, kind: input, shape index: {}]
  %s1 = inlined_call_operand.hbm [shape: bf16[512,1536], index: 1, kind: input, shape index: {}]
  %s2 = inlined_call_operand.hbm [shape: f32[1,1536], index: 2, kind: input, shape index: {}]
  %s3 = inlined_call_operand.hbm [shape: bf16[512,512], index: 3, kind: input, shape index: {}]
  %s4 = inlined_call_operand.hbm [shape: f32[1,512], index: 4, kind: input, shape index: {}]
  %s5 = inlined_call_operand.hbm [shape: f32[2,16,512], index: 5, kind: output, shape index: {}]
  %s6 = sld [smem:[#allocation0]]
  $region50: #{tpu_custom_call.1} parent=0
    _
  %s8 = ssub.s32 1, %s6
  %s9 = scalar_select 0, %s8, %s6
  $region1: #{tpu_custom_call.1} parent=0
    #allocation4 [shape = 'u8[32768]{0}', space=vmem, size = 0x8000, scoped, tag = 'input window, operand 0, single buffered']
    #allocation5 [shape = 's32[1]{0}', space=sflag, size = 0x4, scoped, tag = 'scoped memory for tpu_custom_call.1']
    #allocation6 [shape = 's32[1]{0}', space=sflag, size = 0x4, scoped, tag = 'scoped memory for tpu_custom_call.1']
    #allocation7 [shape = 'u8[1572864]{0}', space=vmem, size = 0x180000, scoped, tag = 'input window, operand 1, single buffered']
    #allocation8 [shape = 's32[1]{0}', space=sflag, size = 0x4, scoped, tag = 'scoped memory for tpu_custom_call.1']
    #allocation9 [shape = 'u8[6144]{0}', space=vmem, size = 0x1800, scoped, tag = 'input window, operand 2, single buffered']
    #allocation10 [shape = 'u8[524288]{0}', space=vmem, size = 0x80000, scoped, tag = 'input window, operand 3, single buffered']
    #allocation11 [shape = 's32[1]{0}', space=sflag, size = 0x4, scoped, tag = 'scoped memory for tpu_custom_call.1']
    #allocation12 [shape = 'u8[2048]{0}', space=vmem, size = 0x800, scoped, tag = 'input window, operand 4, single buffered']
    #allocation13 [shape = 'u8[65536]{0}', space=vmem, size = 0x10000, scoped, tag = 'output window, operand 0, single buffered']
    %10 = vsyncpa [#allocation5], 0
    %11 = vsyncpa [#allocation8], 0
    %12 = vsyncpa [#allocation11], 0
    %13 = vsyncpa [#allocation6], 0
    // Predicated region
    $region2: #{tpu_custom_call.1} parent=1 // pred_check
      _
    $region3: #{tpu_custom_call.1} parent=1 // pred_check_branch
      %15 = sbr.rel (0) target = $region5
    $region4: #{tpu_custom_call.1} parent=1 // pred_region
      %17 = vsyncadd [#allocation5], 0
      %s18 = sshll.u32 %s0, 4
      %s19 = int_to_ptr.hbm [resolvable:$true] %s18
      %s20 = sshll.u32 [#allocation4], 4
      %s21 = int_to_ptr.vmem [resolvable:$true] %s20
      %26 = dma.hbm_to_vmem [thread:$0]  %s19, 1024, %s21, [#allocation5], 256, 256, 16
    $region5: #{tpu_custom_call.1} parent=1 // pred_fallthru
      _
    // Predicated region
    $region6: #{tpu_custom_call.1} parent=1 // pred_check
      _
    $region7: #{tpu_custom_call.1} parent=1 // pred_check_branch
      %28 = sbr.rel (0) target = $region9
    $region8: #{tpu_custom_call.1} parent=1 // pred_region
      %30 = vsyncadd [#allocation8], 0
      %s31 = sshll.u32 %s1, 4
      %s32 = int_to_ptr.hbm [resolvable:$true] %s31
      %s33 = sshll.u32 [#allocation7], 4
      %s34 = int_to_ptr.vmem [resolvable:$true] %s33
      %39 = dma.hbm_to_vmem [thread:$0]  %s32, 49152, %s34, [#allocation8], 768, 768, 48
    $region9: #{tpu_custom_call.1} parent=1 // pred_fallthru
      _
    // Predicated region
    $region10: #{tpu_custom_call.1} parent=1 // pred_check
      _
    $region11: #{tpu_custom_call.1} parent=1 // pred_check_branch
      %41 = sbr.rel (0) target = $region13
    $region12: #{tpu_custom_call.1} parent=1 // pred_region
      %43 = vsyncadd [#allocation8], 0
      %s45 = sshll.u32 %s2, 4
      %s46 = int_to_ptr.hbm [resolvable:$true] %s45
      %s47 = sshll.u32 [#allocation9], 4
      %s48 = int_to_ptr.vmem [resolvable:$true] %s47
      %50 = dma.hbm_to_vmem [thread:$0]  %s46, 192, %s48, [#allocation8]
    $region13: #{tpu_custom_call.1} parent=1 // pred_fallthru
      _
    // Predicated region
    $region14: #{tpu_custom_call.1} parent=1 // pred_check
      _
    $region15: #{tpu_custom_call.1} parent=1 // pred_check_branch
      %52 = sbr.rel (0) target = $region17
    $region16: #{tpu_custom_call.1} parent=1 // pred_region
      %54 = vsyncadd [#allocation11], 0
      %s55 = sshll.u32 %s3, 4
      %s56 = int_to_ptr.hbm [resolvable:$true] %s55
      %s57 = sshll.u32 [#allocation10], 4
      %s58 = int_to_ptr.vmem [resolvable:$true] %s57
      %63 = dma.hbm_to_vmem [thread:$0]  %s56, 16384, %s58, [#allocation11], 256, 256, 16
    $region17: #{tpu_custom_call.1} parent=1 // pred_fallthru
      _
    // Predicated region
    $region18: #{tpu_custom_call.1} parent=1 // pred_check
      _
    $region19: #{tpu_custom_call.1} parent=1 // pred_check_branch
      %65 = sbr.rel (0) target = $region21
    $region20: #{tpu_custom_call.1} parent=1 // pred_region
      %67 = vsyncadd [#allocation11], 0
      %s69 = sshll.u32 %s4, 4
      %s70 = int_to_ptr.hbm [resolvable:$true] %s69
      %s71 = sshll.u32 [#allocation12], 4
      %s72 = int_to_ptr.vmem [resolvable:$true] %s71
      %74 = dma.hbm_to_vmem [thread:$0]  %s70, 64, %s72, [#allocation11]
    $region21: #{tpu_custom_call.1} parent=1 // pred_fallthru
      _
    // Predicated region
    $region22: #{tpu_custom_call.1} parent=1 // pred_check
      _
    $region23: #{tpu_custom_call.1} parent=1 // pred_check_branch
      %76 = sbr.rel (0) target = $region25
    $region24: #{tpu_custom_call.1} parent=1 // pred_region
      %78 = dma.done [#allocation5], 1024
    $region25: #{tpu_custom_call.1} parent=1 // pred_fallthru
      _
    // Predicated region
    $region26: #{tpu_custom_call.1} parent=1 // pred_check
      _
    $region27: #{tpu_custom_call.1} parent=1 // pred_check_branch
      %80 = sbr.rel (0) target = $region29
    $region28: #{tpu_custom_call.1} parent=1 // pred_region
      %82 = dma.done [#allocation8], 49152
    $region29: #{tpu_custom_call.1} parent=1 // pred_fallthru
      _
    // Predicated region
    $region30: #{tpu_custom_call.1} parent=1 // pred_check
      _
    $region31: #{tpu_custom_call.1} parent=1 // pred_check_branch
      %84 = sbr.rel (0) target = $region33
    $region32: #{tpu_custom_call.1} parent=1 // pred_region
      %86 = dma.done [#allocation8], 192
    $region33: #{tpu_custom_call.1} parent=1 // pred_fallthru
      _
    // Predicated region
    $region34: #{tpu_custom_call.1} parent=1 // pred_check
      _
    $region35: #{tpu_custom_call.1} parent=1 // pred_check_branch
      %88 = sbr.rel (0) target = $region37
    $region36: #{tpu_custom_call.1} parent=1 // pred_region
      %90 = dma.done [#allocation11], 16384
    $region37: #{tpu_custom_call.1} parent=1 // pred_fallthru
      _
    // Predicated region
    $region38: #{tpu_custom_call.1} parent=1 // pred_check
      _
    $region39: #{tpu_custom_call.1} parent=1 // pred_check_branch
      %92 = sbr.rel (0) target = $region41
    $region40: #{tpu_custom_call.1} parent=1 // pred_region
      %94 = dma.done [#allocation11], 64
    $region41: #{tpu_custom_call.1} parent=1 // pred_fallthru
      _
    %v96 = vld [vmem:[#allocation4] sm:$0xff]
    %v97 = vld [vmem:[#allocation4 + $0x8] sm:$0xff]
    %v98 = vld [vmem:[#allocation4 + $0x10] sm:$0xff]
    %v99 = vld [vmem:[#allocation4 + $0x18] sm:$0xff]
    %v100 = vld [vmem:[#allocation4 + $0x20] sm:$0xff]
    %v101 = vld [vmem:[#allocation4 + $0x28] sm:$0xff]
    %v102 = vld [vmem:[#allocation4 + $0x30] sm:$0xff]
    %v103 = vld [vmem:[#allocation4 + $0x38] sm:$0xff]
    %v104 = vld [vmem:[#allocation7] sm:$0xff]
    %v105 = vld [vmem:[#allocation7 + $0x8] sm:$0xff]
    %v106 = vld [vmem:[#allocation7 + $0x10] sm:$0xff]
    %v107 = vld [vmem:[#allocation7 + $0x18] sm:$0xff]
    %v108 = vld [vmem:[#allocation7 + $0x20] sm:$0xff]
    %v109 = vld [vmem:[#allocation7 + $0x28] sm:$0xff]
    %v110 = vld [vmem:[#allocation7 + $0x30] sm:$0xff]
    %v111 = vld [vmem:[#allocation7 + $0x38] sm:$0xff]
    %v112 = vld [vmem:[#allocation7 + $0x40] sm:$0xff]
    %v113 = vld [vmem:[#allocation7 + $0x48] sm:$0xff]
    %v114 = vld [vmem:[#allocation7 + $0x50] sm:$0xff]
    %v115 = vld [vmem:[#allocation7 + $0x58] sm:$0xff]
    %v116 = vld [vmem:[#allocation7 + $0x60] sm:$0xff]
    %v117 = vld [vmem:[#allocation7 + $0x68] sm:$0xff]
    %v118 = vld [vmem:[#allocation7 + $0x70] sm:$0xff]
    %v119 = vld [vmem:[#allocation7 + $0x78] sm:$0xff]
    %v120 = vld [vmem:[#allocation7 + $0x80] sm:$0xff]
    %v121 = vld [vmem:[#allocation7 + $0x88] sm:$0xff]
    %v122 = vld [vmem:[#allocation7 + $0x90] sm:$0xff]
    %v123 = vld [vmem:[#allocation7 + $0x98] sm:$0xff]
    %v124 = vld [vmem:[#allocation7 + $0xa0] sm:$0xff]
    %v125 = vld [vmem:[#allocation7 + $0xa8] sm:$0xff]
    %v126 = vld [vmem:[#allocation7 + $0xb0] sm:$0xff]
    %v127 = vld [vmem:[#allocation7 + $0xb8] sm:$0xff]
    %v128 = vld [vmem:[#allocation7 + $0xc0] sm:$0xff]
    %v129 = vld [vmem:[#allocation7 + $0xc8] sm:$0xff]
    %v130 = vld [vmem:[#allocation7 + $0xd0] sm:$0xff]
    %v131 = vld [vmem:[#allocation7 + $0xd8] sm:$0xff]
    %v132 = vld [vmem:[#allocation7 + $0xe0] sm:$0xff]
    %v133 = vld [vmem:[#allocation7 + $0xe8] sm:$0xff]
    %v134 = vld [vmem:[#allocation7 + $0xf0] sm:$0xff]
    %v135 = vld [vmem:[#allocation7 + $0xf8] sm:$0xff]
    %v136 = vld [vmem:[#allocation7 + $0x100] sm:$0xff]
    %v137 = vld [vmem:[#allocation7 + $0x108] sm:$0xff]
    %v138 = vld [vmem:[#allocation7 + $0x110] sm:$0xff]
    %v139 = vld [vmem:[#allocation7 + $0x118] sm:$0xff]
    %v140 = vld [vmem:[#allocation7 + $0x120] sm:$0xff]
    %v141 = vld [vmem:[#allocation7 + $0x128] sm:$0xff]
    %v142 = vld [vmem:[#allocation7 + $0x130] sm:$0xff]
    %v143 = vld [vmem:[#allocation7 + $0x138] sm:$0xff]
    %v144 = vld [vmem:[#allocation7 + $0x140] sm:$0xff]
    %v145 = vld [vmem:[#allocation7 + $0x148] sm:$0xff]
    %v146 = vld [vmem:[#allocation7 + $0x150] sm:$0xff]
    %v147 = vld [vmem:[#allocation7 + $0x158] sm:$0xff]
    %v148 = vld [vmem:[#allocation7 + $0x160] sm:$0xff]
    %v149 = vld [vmem:[#allocation7 + $0x168] sm:$0xff]
    %v150 = vld [vmem:[#allocation7 + $0x170] sm:$0xff]
    %v151 = vld [vmem:[#allocation7 + $0x178] sm:$0xff]
    %v152 = vld [vmem:[#allocation7 + $0x180] sm:$0xff]
    %v153 = vld [vmem:[#allocation7 + $0x188] sm:$0xff]
    %v154 = vld [vmem:[#allocation7 + $0x190] sm:$0xff]
    %v155 = vld [vmem:[#allocation7 + $0x198] sm:$0xff]
    %v156 = vld [vmem:[#allocation7 + $0x1a0] sm:$0xff]
    %v157 = vld [vmem:[#allocation7 + $0x1a8] sm:$0xff]
    %v158 = vld [vmem:[#allocation7 + $0x1b0] sm:$0xff]
    %v159 = vld [vmem:[#allocation7 + $0x1b8] sm:$0xff]
    %v160 = vld [vmem:[#allocation7 + $0x1c0] sm:$0xff]
    %v161 = vld [vmem:[#allocation7 + $0x1c8] sm:$0xff]
    %v162 = vld [vmem:[#allocation7 + $0x1d0] sm:$0xff]
    %v163 = vld [vmem:[#allocation7 + $0x1d8] sm:$0xff]
    %v164 = vld [vmem:[#allocation7 + $0x1e0] sm:$0xff]
    %v165 = vld [vmem:[#allocation7 + $0x1e8] sm:$0xff]
    %v166 = vld [vmem:[#allocation7 + $0x1f0] sm:$0xff]
    %v167 = vld [vmem:[#allocation7 + $0x1f8] sm:$0xff]
    %v168 = vld [vmem:[#allocation7 + $0x200] sm:$0xff]
    %v169 = vld [vmem:[#allocation7 + $0x208] sm:$0xff]
    %v170 = vld [vmem:[#allocation7 + $0x210] sm:$0xff]
    %v171 = vld [vmem:[#allocation7 + $0x218] sm:$0xff]
    %v172 = vld [vmem:[#allocation7 + $0x220] sm:$0xff]
    %v173 = vld [vmem:[#allocation7 + $0x228] sm:$0xff]
    %v174 = vld [vmem:[#allocation7 + $0x230] sm:$0xff]
    %v175 = vld [vmem:[#allocation7 + $0x238] sm:$0xff]
    %v176 = vld [vmem:[#allocation7 + $0x240] sm:$0xff]
    %v177 = vld [vmem:[#allocation7 + $0x248] sm:$0xff]
    %v178 = vld [vmem:[#allocation7 + $0x250] sm:$0xff]
    %v179 = vld [vmem:[#allocation7 + $0x258] sm:$0xff]
    %v180 = vld [vmem:[#allocation7 + $0x260] sm:$0xff]
    %v181 = vld [vmem:[#allocation7 + $0x268] sm:$0xff]
    %v182 = vld [vmem:[#allocation7 + $0x270] sm:$0xff]
    %v183 = vld [vmem:[#allocation7 + $0x278] sm:$0xff]
    %v184 = vld [vmem:[#allocation7 + $0x280] sm:$0xff]
    %v185 = vld [vmem:[#allocation7 + $0x288] sm:$0xff]
    %v186 = vld [vmem:[#allocation7 + $0x290] sm:$0xff]
    %v187 = vld [vmem:[#allocation7 + $0x298] sm:$0xff]
    %v188 = vld [vmem:[#allocation7 + $0x2a0] sm:$0xff]
    %v189 = vld [vmem:[#allocation7 + $0x2a8] sm:$0xff]
    %v190 = vld [vmem:[#allocation7 + $0x2b0] sm:$0xff]
    %v191 = vld [vmem:[#allocation7 + $0x2b8] sm:$0xff]
    %v192 = vld [vmem:[#allocation7 + $0x2c0] sm:$0xff]
    %v193 = vld [vmem:[#allocation7 + $0x2c8] sm:$0xff]
    %v194 = vld [vmem:[#allocation7 + $0x2d0] sm:$0xff]
    %v195 = vld [vmem:[#allocation7 + $0x2d8] sm:$0xff]
    %v196 = vld [vmem:[#allocation7 + $0x2e0] sm:$0xff]
    %v197 = vld [vmem:[#allocation7 + $0x2e8] sm:$0xff]
    %v198 = vld [vmem:[#allocation7 + $0x2f0] sm:$0xff]
    %v199 = vld [vmem:[#allocation7 + $0x2f8] sm:$0xff]
    %v200 = vld [vmem:[#allocation7 + $0x300] sm:$0xff]
    %v201 = vld [vmem:[#allocation7 + $0x308] sm:$0xff]
    %v202 = vld [vmem:[#allocation7 + $0x310] sm:$0xff]
    %v203 = vld [vmem:[#allocation7 + $0x318] sm:$0xff]
    %v204 = vld [vmem:[#allocation7 + $0x320] sm:$0xff]
    %v205 = vld [vmem:[#allocation7 + $0x328] sm:$0xff]
    %v206 = vld [vmem:[#allocation7 + $0x330] sm:$0xff]
    %v207 = vld [vmem:[#allocation7 + $0x338] sm:$0xff]
    %v208 = vld [vmem:[#allocation7 + $0x340] sm:$0xff]
    %v209 = vld [vmem:[#allocation7 + $0x348] sm:$0xff]
    %v210 = vld [vmem:[#allocation7 + $0x350] sm:$0xff]
    %v211 = vld [vmem:[#allocation7 + $0x358] sm:$0xff]
    %v212 = vld [vmem:[#allocation7 + $0x360] sm:$0xff]
    %v213 = vld [vmem:[#allocation7 + $0x368] sm:$0xff]
    %v214 = vld [vmem:[#allocation7 + $0x370] sm:$0xff]
    %v215 = vld [vmem:[#allocation7 + $0x378] sm:$0xff]
    %v216 = vld [vmem:[#allocation7 + $0x380] sm:$0xff]
    %v217 = vld [vmem:[#allocation7 + $0x388] sm:$0xff]
    %v218 = vld [vmem:[#allocation7 + $0x390] sm:$0xff]
    %v219 = vld [vmem:[#allocation7 + $0x398] sm:$0xff]
    %v220 = vld [vmem:[#allocation7 + $0x3a0] sm:$0xff]
    %v221 = vld [vmem:[#allocation7 + $0x3a8] sm:$0xff]
    %v222 = vld [vmem:[#allocation7 + $0x3b0] sm:$0xff]
    %v223 = vld [vmem:[#allocation7 + $0x3b8] sm:$0xff]
    %v224 = vld [vmem:[#allocation7 + $0x3c0] sm:$0xff]
    %v225 = vld [vmem:[#allocation7 + $0x3c8] sm:$0xff]
    %v226 = vld [vmem:[#allocation7 + $0x3d0] sm:$0xff]
    %v227 = vld [vmem:[#allocation7 + $0x3d8] sm:$0xff]
    %v228 = vld [vmem:[#allocation7 + $0x3e0] sm:$0xff]
    %v229 = vld [vmem:[#allocation7 + $0x3e8] sm:$0xff]
    %v230 = vld [vmem:[#allocation7 + $0x3f0] sm:$0xff]
    %v231 = vld [vmem:[#allocation7 + $0x3f8] sm:$0xff]
    %v232 = vld [vmem:[#allocation7 + $0x400] sm:$0xff]
    %v233 = vld [vmem:[#allocation7 + $0x408] sm:$0xff]
    %v234 = vld [vmem:[#allocation7 + $0x410] sm:$0xff]
    %v235 = vld [vmem:[#allocation7 + $0x418] sm:$0xff]
    %v236 = vld [vmem:[#allocation7 + $0x420] sm:$0xff]
    %v237 = vld [vmem:[#allocation7 + $0x428] sm:$0xff]
    %v238 = vld [vmem:[#allocation7 + $0x430] sm:$0xff]
    %v239 = vld [vmem:[#allocation7 + $0x438] sm:$0xff]
    %v240 = vld [vmem:[#allocation7 + $0x440] sm:$0xff]
    %v241 = vld [vmem:[#allocation7 + $0x448] sm:$0xff]
    %v242 = vld [vmem:[#allocation7 + $0x450] sm:$0xff]
    %v243 = vld [vmem:[#allocation7 + $0x458] sm:$0xff]
    %v244 = vld [vmem:[#allocation7 + $0x460] sm:$0xff]
    %v245 = vld [vmem:[#allocation7 + $0x468] sm:$0xff]
    %v246 = vld [vmem:[#allocation7 + $0x470] sm:$0xff]
    %v247 = vld [vmem:[#allocation7 + $0x478] sm:$0xff]
    %v248 = vld [vmem:[#allocation7 + $0x480] sm:$0xff]
    %v249 = vld [vmem:[#allocation7 + $0x488] sm:$0xff]
    %v250 = vld [vmem:[#allocation7 + $0x490] sm:$0xff]
    %v251 = vld [vmem:[#allocation7 + $0x498] sm:$0xff]
    %v252 = vld [vmem:[#allocation7 + $0x4a0] sm:$0xff]
    %v253 = vld [vmem:[#allocation7 + $0x4a8] sm:$0xff]
    %v254 = vld [vmem:[#allocation7 + $0x4b0] sm:$0xff]
    %v255 = vld [vmem:[#allocation7 + $0x4b8] sm:$0xff]
    %v256 = vld [vmem:[#allocation7 + $0x4c0] sm:$0xff]
    %v257 = vld [vmem:[#allocation7 + $0x4c8] sm:$0xff]
    %v258 = vld [vmem:[#allocation7 + $0x4d0] sm:$0xff]
    %v259 = vld [vmem:[#allocation7 + $0x4d8] sm:$0xff]
    %v260 = vld [vmem:[#allocation7 + $0x4e0] sm:$0xff]
    %v261 = vld [vmem:[#allocation7 + $0x4e8] sm:$0xff]
    %v262 = vld [vmem:[#allocation7 + $0x4f0] sm:$0xff]
    %v263 = vld [vmem:[#allocation7 + $0x4f8] sm:$0xff]
    %v264 = vld [vmem:[#allocation7 + $0x500] sm:$0xff]
    %v265 = vld [vmem:[#allocation7 + $0x508] sm:$0xff]
    %v266 = vld [vmem:[#allocation7 + $0x510] sm:$0xff]
    %v267 = vld [vmem:[#allocation7 + $0x518] sm:$0xff]
    %v268 = vld [vmem:[#allocation7 + $0x520] sm:$0xff]
    %v269 = vld [vmem:[#allocation7 + $0x528] sm:$0xff]
    %v270 = vld [vmem:[#allocation7 + $0x530] sm:$0xff]
    %v271 = vld [vmem:[#allocation7 + $0x538] sm:$0xff]
    %v272 = vld [vmem:[#allocation7 + $0x540] sm:$0xff]
    %v273 = vld [vmem:[#allocation7 + $0x548] sm:$0xff]
    %v274 = vld [vmem:[#allocation7 + $0x550] sm:$0xff]
    %v275 = vld [vmem:[#allocation7 + $0x558] sm:$0xff]
    %v276 = vld [vmem:[#allocation7 + $0x560] sm:$0xff]
    %v277 = vld [vmem:[#allocation7 + $0x568] sm:$0xff]
    %v278 = vld [vmem:[#allocation7 + $0x570] sm:$0xff]
    %v279 = vld [vmem:[#allocation7 + $0x578] sm:$0xff]
    %v280 = vld [vmem:[#allocation7 + $0x580] sm:$0xff]
    %v281 = vld [vmem:[#allocation7 + $0x588] sm:$0xff]
    %v282 = vld [vmem:[#allocation7 + $0x590] sm:$0xff]
    %v283 = vld [vmem:[#allocation7 + $0x598] sm:$0xff]
    %v284 = vld [vmem:[#allocation7 + $0x5a0] sm:$0xff]
    %v285 = vld [vmem:[#allocation7 + $0x5a8] sm:$0xff]
    %v286 = vld [vmem:[#allocation7 + $0x5b0] sm:$0xff]
    %v287 = vld [vmem:[#allocation7 + $0x5b8] sm:$0xff]
    %v288 = vld [vmem:[#allocation7 + $0x5c0] sm:$0xff]
    %v289 = vld [vmem:[#allocation7 + $0x5c8] sm:$0xff]
    %v290 = vld [vmem:[#allocation7 + $0x5d0] sm:$0xff]
    %v291 = vld [vmem:[#allocation7 + $0x5d8] sm:$0xff]
    %v292 = vld [vmem:[#allocation7 + $0x5e0] sm:$0xff]
    %v293 = vld [vmem:[#allocation7 + $0x5e8] sm:$0xff]
    %v294 = vld [vmem:[#allocation7 + $0x5f0] sm:$0xff]
    %v295 = vld [vmem:[#allocation7 + $0x5f8] sm:$0xff]
    %v296 = vld [vmem:[#allocation7 + $0x600] sm:$0xff]
    %v297 = vld [vmem:[#allocation7 + $0x608] sm:$0xff]
    %v298 = vld [vmem:[#allocation7 + $0x610] sm:$0xff]
    %v299 = vld [vmem:[#allocation7 + $0x618] sm:$0xff]
    %v300 = vld [vmem:[#allocation7 + $0x620] sm:$0xff]
    %v301 = vld [vmem:[#allocation7 + $0x628] sm:$0xff]
    %v302 = vld [vmem:[#allocation7 + $0x630] sm:$0xff]
    %v303 = vld [vmem:[#allocation7 + $0x638] sm:$0xff]
    %v304 = vld [vmem:[#allocation7 + $0x640] sm:$0xff]
    %v305 = vld [vmem:[#allocation7 + $0x648] sm:$0xff]
    %v306 = vld [vmem:[#allocation7 + $0x650] sm:$0xff]
    %v307 = vld [vmem:[#allocation7 + $0x658] sm:$0xff]
    %v308 = vld [vmem:[#allocation7 + $0x660] sm:$0xff]
    %v309 = vld [vmem:[#allocation7 + $0x668] sm:$0xff]
    %v310 = vld [vmem:[#allocation7 + $0x670] sm:$0xff]
    %v311 = vld [vmem:[#allocation7 + $0x678] sm:$0xff]
    %v312 = vld [vmem:[#allocation7 + $0x680] sm:$0xff]
    %v313 = vld [vmem:[#allocation7 + $0x688] sm:$0xff]
    %v314 = vld [vmem:[#allocation7 + $0x690] sm:$0xff]
    %v315 = vld [vmem:[#allocation7 + $0x698] sm:$0xff]
    %v316 = vld [vmem:[#allocation7 + $0x6a0] sm:$0xff]
    %v317 = vld [vmem:[#allocation7 + $0x6a8] sm:$0xff]
    %v318 = vld [vmem:[#allocation7 + $0x6b0] sm:$0xff]
    %v319 = vld [vmem:[#allocation7 + $0x6b8] sm:$0xff]
    %v320 = vld [vmem:[#allocation7 + $0x6c0] sm:$0xff]
    %v321 = vld [vmem:[#allocation7 + $0x6c8] sm:$0xff]
    %v322 = vld [vmem:[#allocation7 + $0x6d0] sm:$0xff]
    %v323 = vld [vmem:[#allocation7 + $0x6d8] sm:$0xff]
    %v324 = vld [vmem:[#allocation7 + $0x6e0] sm:$0xff]
    %v325 = vld [vmem:[#allocation7 + $0x6e8] sm:$0xff]
    %v326 = vld [vmem:[#allocation7 + $0x6f0] sm:$0xff]
    %v327 = vld [vmem:[#allocation7 + $0x6f8] sm:$0xff]
    %v328 = vld [vmem:[#allocation7 + $0x700] sm:$0xff]
    %v329 = vld [vmem:[#allocation7 + $0x708] sm:$0xff]
    %v330 = vld [vmem:[#allocation7 + $0x710] sm:$0xff]
    %v331 = vld [vmem:[#allocation7 + $0x718] sm:$0xff]
    %v332 = vld [vmem:[#allocation7 + $0x720] sm:$0xff]
    %v333 = vld [vmem:[#allocation7 + $0x728] sm:$0xff]
    %v334 = vld [vmem:[#allocation7 + $0x730] sm:$0xff]
    %v335 = vld [vmem:[#allocation7 + $0x738] sm:$0xff]
    %v336 = vld [vmem:[#allocation7 + $0x740] sm:$0xff]
    %v337 = vld [vmem:[#allocation7 + $0x748] sm:$0xff]
    %v338 = vld [vmem:[#allocation7 + $0x750] sm:$0xff]
    %v339 = vld [vmem:[#allocation7 + $0x758] sm:$0xff]
    %v340 = vld [vmem:[#allocation7 + $0x760] sm:$0xff]
    %v341 = vld [vmem:[#allocation7 + $0x768] sm:$0xff]
    %v342 = vld [vmem:[#allocation7 + $0x770] sm:$0xff]
    %v343 = vld [vmem:[#allocation7 + $0x778] sm:$0xff]
    %v344 = vld [vmem:[#allocation7 + $0x780] sm:$0xff]
    %v345 = vld [vmem:[#allocation7 + $0x788] sm:$0xff]
    %v346 = vld [vmem:[#allocation7 + $0x790] sm:$0xff]
    %v347 = vld [vmem:[#allocation7 + $0x798] sm:$0xff]
    %v348 = vld [vmem:[#allocation7 + $0x7a0] sm:$0xff]
    %v349 = vld [vmem:[#allocation7 + $0x7a8] sm:$0xff]
    %v350 = vld [vmem:[#allocation7 + $0x7b0] sm:$0xff]
    %v351 = vld [vmem:[#allocation7 + $0x7b8] sm:$0xff]
    %v352 = vld [vmem:[#allocation7 + $0x7c0] sm:$0xff]
    %v353 = vld [vmem:[#allocation7 + $0x7c8] sm:$0xff]
    %v354 = vld [vmem:[#allocation7 + $0x7d0] sm:$0xff]
    %v355 = vld [vmem:[#allocation7 + $0x7d8] sm:$0xff]
    %v356 = vld [vmem:[#allocation7 + $0x7e0] sm:$0xff]
    %v357 = vld [vmem:[#allocation7 + $0x7e8] sm:$0xff]
    %v358 = vld [vmem:[#allocation7 + $0x7f0] sm:$0xff]
    %v359 = vld [vmem:[#allocation7 + $0x7f8] sm:$0xff]
    %v360 = vld [vmem:[#allocation7 + $0x800] sm:$0xff]
    %v361 = vld [vmem:[#allocation7 + $0x808] sm:$0xff]
    %v362 = vld [vmem:[#allocation7 + $0x810] sm:$0xff]
    %v363 = vld [vmem:[#allocation7 + $0x818] sm:$0xff]
    %v364 = vld [vmem:[#allocation7 + $0x820] sm:$0xff]
    %v365 = vld [vmem:[#allocation7 + $0x828] sm:$0xff]
    %v366 = vld [vmem:[#allocation7 + $0x830] sm:$0xff]
    %v367 = vld [vmem:[#allocation7 + $0x838] sm:$0xff]
    %v368 = vld [vmem:[#allocation7 + $0x840] sm:$0xff]
    %v369 = vld [vmem:[#allocation7 + $0x848] sm:$0xff]
    %v370 = vld [vmem:[#allocation7 + $0x850] sm:$0xff]
    %v371 = vld [vmem:[#allocation7 + $0x858] sm:$0xff]
    %v372 = vld [vmem:[#allocation7 + $0x860] sm:$0xff]
    %v373 = vld [vmem:[#allocation7 + $0x868] sm:$0xff]
    %v374 = vld [vmem:[#allocation7 + $0x870] sm:$0xff]
    %v375 = vld [vmem:[#allocation7 + $0x878] sm:$0xff]
    %v376 = vld [vmem:[#allocation7 + $0x880] sm:$0xff]
    %v377 = vld [vmem:[#allocation7 + $0x888] sm:$0xff]
    %v378 = vld [vmem:[#allocation7 + $0x890] sm:$0xff]
    %v379 = vld [vmem:[#allocation7 + $0x898] sm:$0xff]
    %v380 = vld [vmem:[#allocation7 + $0x8a0] sm:$0xff]
    %v381 = vld [vmem:[#allocation7 + $0x8a8] sm:$0xff]
    %v382 = vld [vmem:[#allocation7 + $0x8b0] sm:$0xff]
    %v383 = vld [vmem:[#allocation7 + $0x8b8] sm:$0xff]
    %v384 = vld [vmem:[#allocation7 + $0x8c0] sm:$0xff]
    %v385 = vld [vmem:[#allocation7 + $0x8c8] sm:$0xff]
    %v386 = vld [vmem:[#allocation7 + $0x8d0] sm:$0xff]
    %v387 = vld [vmem:[#allocation7 + $0x8d8] sm:$0xff]
    %v388 = vld [vmem:[#allocation7 + $0x8e0] sm:$0xff]
    %v389 = vld [vmem:[#allocation7 + $0x8e8] sm:$0xff]
    %v390 = vld [vmem:[#allocation7 + $0x8f0] sm:$0xff]
    %v391 = vld [vmem:[#allocation7 + $0x8f8] sm:$0xff]
    %v392 = vld [vmem:[#allocation7 + $0x900] sm:$0xff]
    %v393 = vld [vmem:[#allocation7 + $0x908] sm:$0xff]
    %v394 = vld [vmem:[#allocation7 + $0x910] sm:$0xff]
    %v395 = vld [vmem:[#allocation7 + $0x918] sm:$0xff]
    %v396 = vld [vmem:[#allocation7 + $0x920] sm:$0xff]
    %v397 = vld [vmem:[#allocation7 + $0x928] sm:$0xff]
    %v398 = vld [vmem:[#allocation7 + $0x930] sm:$0xff]
    %v399 = vld [vmem:[#allocation7 + $0x938] sm:$0xff]
    %v400 = vld [vmem:[#allocation7 + $0x940] sm:$0xff]
    %v401 = vld [vmem:[#allocation7 + $0x948] sm:$0xff]
    %v402 = vld [vmem:[#allocation7 + $0x950] sm:$0xff]
    %v403 = vld [vmem:[#allocation7 + $0x958] sm:$0xff]
    %v404 = vld [vmem:[#allocation7 + $0x960] sm:$0xff]
    %v405 = vld [vmem:[#allocation7 + $0x968] sm:$0xff]
    %v406 = vld [vmem:[#allocation7 + $0x970] sm:$0xff]
    %v407 = vld [vmem:[#allocation7 + $0x978] sm:$0xff]
    %v408 = vld [vmem:[#allocation7 + $0x980] sm:$0xff]
    %v409 = vld [vmem:[#allocation7 + $0x988] sm:$0xff]
    %v410 = vld [vmem:[#allocation7 + $0x990] sm:$0xff]
    %v411 = vld [vmem:[#allocation7 + $0x998] sm:$0xff]
    %v412 = vld [vmem:[#allocation7 + $0x9a0] sm:$0xff]
    %v413 = vld [vmem:[#allocation7 + $0x9a8] sm:$0xff]
    %v414 = vld [vmem:[#allocation7 + $0x9b0] sm:$0xff]
    %v415 = vld [vmem:[#allocation7 + $0x9b8] sm:$0xff]
    %v416 = vld [vmem:[#allocation7 + $0x9c0] sm:$0xff]
    %v417 = vld [vmem:[#allocation7 + $0x9c8] sm:$0xff]
    %v418 = vld [vmem:[#allocation7 + $0x9d0] sm:$0xff]
    %v419 = vld [vmem:[#allocation7 + $0x9d8] sm:$0xff]
    %v420 = vld [vmem:[#allocation7 + $0x9e0] sm:$0xff]
    %v421 = vld [vmem:[#allocation7 + $0x9e8] sm:$0xff]
    %v422 = vld [vmem:[#allocation7 + $0x9f0] sm:$0xff]
    %v423 = vld [vmem:[#allocation7 + $0x9f8] sm:$0xff]
    %v424 = vld [vmem:[#allocation7 + $0xa00] sm:$0xff]
    %v425 = vld [vmem:[#allocation7 + $0xa08] sm:$0xff]
    %v426 = vld [vmem:[#allocation7 + $0xa10] sm:$0xff]
    %v427 = vld [vmem:[#allocation7 + $0xa18] sm:$0xff]
    %v428 = vld [vmem:[#allocation7 + $0xa20] sm:$0xff]
    %v429 = vld [vmem:[#allocation7 + $0xa28] sm:$0xff]
    %v430 = vld [vmem:[#allocation7 + $0xa30] sm:$0xff]
    %v431 = vld [vmem:[#allocation7 + $0xa38] sm:$0xff]
    %v432 = vld [vmem:[#allocation7 + $0xa40] sm:$0xff]
    %v433 = vld [vmem:[#allocation7 + $0xa48] sm:$0xff]
    %v434 = vld [vmem:[#allocation7 + $0xa50] sm:$0xff]
    %v435 = vld [vmem:[#allocation7 + $0xa58] sm:$0xff]
    %v436 = vld [vmem:[#allocation7 + $0xa60] sm:$0xff]
    %v437 = vld [vmem:[#allocation7 + $0xa68] sm:$0xff]
    %v438 = vld [vmem:[#allocation7 + $0xa70] sm:$0xff]
    %v439 = vld [vmem:[#allocation7 + $0xa78] sm:$0xff]
    %v440 = vld [vmem:[#allocation7 + $0xa80] sm:$0xff]
    %v441 = vld [vmem:[#allocation7 + $0xa88] sm:$0xff]
    %v442 = vld [vmem:[#allocation7 + $0xa90] sm:$0xff]
    %v443 = vld [vmem:[#allocation7 + $0xa98] sm:$0xff]
    %v444 = vld [vmem:[#allocation7 + $0xaa0] sm:$0xff]
    %v445 = vld [vmem:[#allocation7 + $0xaa8] sm:$0xff]
    %v446 = vld [vmem:[#allocation7 + $0xab0] sm:$0xff]
    %v447 = vld [vmem:[#allocation7 + $0xab8] sm:$0xff]
    %v448 = vld [vmem:[#allocation7 + $0xac0] sm:$0xff]
    %v449 = vld [vmem:[#allocation7 + $0xac8] sm:$0xff]
    %v450 = vld [vmem:[#allocation7 + $0xad0] sm:$0xff]
    %v451 = vld [vmem:[#allocation7 + $0xad8] sm:$0xff]
    %v452 = vld [vmem:[#allocation7 + $0xae0] sm:$0xff]
    %v453 = vld [vmem:[#allocation7 + $0xae8] sm:$0xff]
    %v454 = vld [vmem:[#allocation7 + $0xaf0] sm:$0xff]
    %v455 = vld [vmem:[#allocation7 + $0xaf8] sm:$0xff]
    %v456 = vld [vmem:[#allocation7 + $0xb00] sm:$0xff]
    %v457 = vld [vmem:[#allocation7 + $0xb08] sm:$0xff]
    %v458 = vld [vmem:[#allocation7 + $0xb10] sm:$0xff]
    %v459 = vld [vmem:[#allocation7 + $0xb18] sm:$0xff]
    %v460 = vld [vmem:[#allocation7 + $0xb20] sm:$0xff]
    %v461 = vld [vmem:[#allocation7 + $0xb28] sm:$0xff]
    %v462 = vld [vmem:[#allocation7 + $0xb30] sm:$0xff]
    %v463 = vld [vmem:[#allocation7 + $0xb38] sm:$0xff]
    %v464 = vld [vmem:[#allocation7 + $0xb40] sm:$0xff]
    %v465 = vld [vmem:[#allocation7 + $0xb48] sm:$0xff]
    %v466 = vld [vmem:[#allocation7 + $0xb50] sm:$0xff]
    %v467 = vld [vmem:[#allocation7 + $0xb58] sm:$0xff]
    %v468 = vld [vmem:[#allocation7 + $0xb60] sm:$0xff]
    %v469 = vld [vmem:[#allocation7 + $0xb68] sm:$0xff]
    %v470 = vld [vmem:[#allocation7 + $0xb70] sm:$0xff]
    %v471 = vld [vmem:[#allocation7 + $0xb78] sm:$0xff]
    %v472 = vld [vmem:[#allocation7 + $0xb80] sm:$0xff]
    %v473 = vld [vmem:[#allocation7 + $0xb88] sm:$0xff]
    %v474 = vld [vmem:[#allocation7 + $0xb90] sm:$0xff]
    %v475 = vld [vmem:[#allocation7 + $0xb98] sm:$0xff]
    %v476 = vld [vmem:[#allocation7 + $0xba0] sm:$0xff]
    %v477 = vld [vmem:[#allocation7 + $0xba8] sm:$0xff]
    %v478 = vld [vmem:[#allocation7 + $0xbb0] sm:$0xff]
    %v479 = vld [vmem:[#allocation7 + $0xbb8] sm:$0xff]
    %v480 = vld [vmem:[#allocation7 + $0xbc0] sm:$0xff]
    %v481 = vld [vmem:[#allocation7 + $0xbc8] sm:$0xff]
    %v482 = vld [vmem:[#allocation7 + $0xbd0] sm:$0xff]
    %v483 = vld [vmem:[#allocation7 + $0xbd8] sm:$0xff]
    %v484 = vld [vmem:[#allocation7 + $0xbe0] sm:$0xff]
    %v485 = vld [vmem:[#allocation7 + $0xbe8] sm:$0xff]
    %v486 = vld [vmem:[#allocation7 + $0xbf0] sm:$0xff]
    %v487 = vld [vmem:[#allocation7 + $0xbf8] sm:$0xff]
    %v488 = vld [vmem:[#allocation9] sm:$0xff]
    %v489 = vld [vmem:[#allocation9 + $0x8] sm:$0xf]
    %v492 = vperm.slane %v488, 0
    %v493 = vperm.slane %v488, 1
    %v494 = vperm.slane %v488, 2
    %v495 = vperm.slane %v488, 3
    %v496 = vperm.slane %v488, 4
    %v497 = vperm.slane %v488, 5
    %v498 = vperm.slane %v488, 6
    %v499 = vperm.slane %v488, 7
    %v500 = vperm.slane %v489, 0
    %v501 = vperm.slane %v489, 1
    %v502 = vperm.slane %v489, 2
    %v503 = vperm.slane %v489, 3
    %v524 = vunpack.c.l.b16 %v96
    %v525 = vunpack.c.h.b16 %v96
    %v526 = vunpack.c.l.b16 %v97
    %v527 = vunpack.c.h.b16 %v97
    %v528 = vunpack.c.l.b16 %v98
    %v529 = vunpack.c.h.b16 %v98
    %v530 = vunpack.c.l.b16 %v99
    %v531 = vunpack.c.h.b16 %v99
    %v532 = vunpack.c.l.b16 %v100
    %v533 = vunpack.c.h.b16 %v100
    %v534 = vunpack.c.l.b16 %v101
    %v535 = vunpack.c.h.b16 %v101
    %v536 = vunpack.c.l.b16 %v102
    %v537 = vunpack.c.h.b16 %v102
    %v538 = vunpack.c.l.b16 %v103
    %v539 = vunpack.c.h.b16 %v103
    %v540 = vpack.c.b16 %v528, %v524
    %v541 = vpack.c.b16 %v529, %v525
    %v542 = vpack.c.b16 %v530, %v526
    %v543 = vpack.c.b16 %v531, %v527
    %v544 = vpack.c.b16 %v536, %v532
    %v545 = vpack.c.b16 %v537, %v533
    %v546 = vpack.c.b16 %v538, %v534
    %v547 = vpack.c.b16 %v539, %v535
    %v940 = vunpack.c.l.b16 %v104
    %v941 = vunpack.c.h.b16 %v104
    %v942 = vunpack.c.l.b16 %v105
    %v943 = vunpack.c.h.b16 %v105
    %v944 = vunpack.c.l.b16 %v106
    %v945 = vunpack.c.h.b16 %v106
    %v946 = vunpack.c.l.b16 %v107
    %v947 = vunpack.c.h.b16 %v107
    %v948 = vunpack.c.l.b16 %v108
    %v949 = vunpack.c.h.b16 %v108
    %v950 = vunpack.c.l.b16 %v109
    %v951 = vunpack.c.h.b16 %v109
    %v952 = vunpack.c.l.b16 %v110
    %v953 = vunpack.c.h.b16 %v110
    %v954 = vunpack.c.l.b16 %v111
    %v955 = vunpack.c.h.b16 %v111
    %v956 = vunpack.c.l.b16 %v112
    %v957 = vunpack.c.h.b16 %v112
    %v958 = vunpack.c.l.b16 %v113
    %v959 = vunpack.c.h.b16 %v113
    %v960 = vunpack.c.l.b16 %v114
    %v961 = vunpack.c.h.b16 %v114
    %v962 = vunpack.c.l.b16 %v115
    %v963 = vunpack.c.h.b16 %v115
    %v964 = vunpack.c.l.b16 %v116
    %v965 = vunpack.c.h.b16 %v116
    %v966 = vunpack.c.l.b16 %v117
    %v967 = vunpack.c.h.b16 %v117
    %v968 = vunpack.c.l.b16 %v118
    %v969 = vunpack.c.h.b16 %v118
    %v970 = vunpack.c.l.b16 %v119
    %v971 = vunpack.c.h.b16 %v119
    %v972 = vunpack.c.l.b16 %v120
    %v973 = vunpack.c.h.b16 %v120
    %v974 = vunpack.c.l.b16 %v121
    %v975 = vunpack.c.h.b16 %v121
    %v976 = vunpack.c.l.b16 %v122
    %v977 = vunpack.c.h.b16 %v122
    %v978 = vunpack.c.l.b16 %v123
    %v979 = vunpack.c.h.b16 %v123
    %v980 = vunpack.c.l.b16 %v124
    %v981 = vunpack.c.h.b16 %v124
    %v982 = vunpack.c.l.b16 %v125
    %v983 = vunpack.c.h.b16 %v125
    %v984 = vunpack.c.l.b16 %v126
    %v985 = vunpack.c.h.b16 %v126
    %v986 = vunpack.c.l.b16 %v127
    %v987 = vunpack.c.h.b16 %v127
    %v988 = vunpack.c.l.b16 %v128
    %v989 = vunpack.c.h.b16 %v128
    %v990 = vunpack.c.l.b16 %v129
    %v991 = vunpack.c.h.b16 %v129
    %v992 = vunpack.c.l.b16 %v130
    %v993 = vunpack.c.h.b16 %v130
    %v994 = vunpack.c.l.b16 %v131
    %v995 = vunpack.c.h.b16 %v131
    %v996 = vunpack.c.l.b16 %v132
    %v997 = vunpack.c.h.b16 %v132
    %v998 = vunpack.c.l.b16 %v133
    %v999 = vunpack.c.h.b16 %v133
    %v1000 = vunpack.c.l.b16 %v134
    %v1001 = vunpack.c.h.b16 %v134
    %v1002 = vunpack.c.l.b16 %v135
    %v1003 = vunpack.c.h.b16 %v135
    %v1004 = vunpack.c.l.b16 %v136
    %v1005 = vunpack.c.h.b16 %v136
    %v1006 = vunpack.c.l.b16 %v137
    %v1007 = vunpack.c.h.b16 %v137
    %v1008 = vunpack.c.l.b16 %v138
    %v1009 = vunpack.c.h.b16 %v138
    %v1010 = vunpack.c.l.b16 %v139
    %v1011 = vunpack.c.h.b16 %v139
    %v1012 = vunpack.c.l.b16 %v140
    %v1013 = vunpack.c.h.b16 %v140
    %v1014 = vunpack.c.l.b16 %v141
    %v1015 = vunpack.c.h.b16 %v141
    %v1016 = vunpack.c.l.b16 %v142
    %v1017 = vunpack.c.h.b16 %v142
    %v1018 = vunpack.c.l.b16 %v143
    %v1019 = vunpack.c.h.b16 %v143
    %v1020 = vunpack.c.l.b16 %v144
    %v1021 = vunpack.c.h.b16 %v144
    %v1022 = vunpack.c.l.b16 %v145
    %v1023 = vunpack.c.h.b16 %v145
    %v1024 = vunpack.c.l.b16 %v146
    %v1025 = vunpack.c.h.b16 %v146
    %v1026 = vunpack.c.l.b16 %v147
    %v1027 = vunpack.c.h.b16 %v147
    %v1028 = vunpack.c.l.b16 %v148
    %v1029 = vunpack.c.h.b16 %v148
    %v1030 = vunpack.c.l.b16 %v149
    %v1031 = vunpack.c.h.b16 %v149
    %v1032 = vunpack.c.l.b16 %v150
    %v1033 = vunpack.c.h.b16 %v150
    %v1034 = vunpack.c.l.b16 %v151
    %v1035 = vunpack.c.h.b16 %v151
    %v1036 = vunpack.c.l.b16 %v152
    %v1037 = vunpack.c.h.b16 %v152
    %v1038 = vunpack.c.l.b16 %v153
    %v1039 = vunpack.c.h.b16 %v153
    %v1040 = vunpack.c.l.b16 %v154
    %v1041 = vunpack.c.h.b16 %v154
    %v1042 = vunpack.c.l.b16 %v155
    %v1043 = vunpack.c.h.b16 %v155
    %v1044 = vunpack.c.l.b16 %v156
    %v1045 = vunpack.c.h.b16 %v156
    %v1046 = vunpack.c.l.b16 %v157
    %v1047 = vunpack.c.h.b16 %v157
    %v1048 = vunpack.c.l.b16 %v158
    %v1049 = vunpack.c.h.b16 %v158
    %v1050 = vunpack.c.l.b16 %v159
    %v1051 = vunpack.c.h.b16 %v159
    %v1052 = vunpack.c.l.b16 %v160
    %v1053 = vunpack.c.h.b16 %v160
    %v1054 = vunpack.c.l.b16 %v161
    %v1055 = vunpack.c.h.b16 %v161
    %v1056 = vunpack.c.l.b16 %v162
    %v1057 = vunpack.c.h.b16 %v162
    %v1058 = vunpack.c.l.b16 %v163
    %v1059 = vunpack.c.h.b16 %v163
    %v1060 = vunpack.c.l.b16 %v164
    %v1061 = vunpack.c.h.b16 %v164
    %v1062 = vunpack.c.l.b16 %v165
    %v1063 = vunpack.c.h.b16 %v165
    %v1064 = vunpack.c.l.b16 %v166
    %v1065 = vunpack.c.h.b16 %v166
    %v1066 = vunpack.c.l.b16 %v167
    %v1067 = vunpack.c.h.b16 %v167
    %v1068 = vunpack.c.l.b16 %v168
    %v1069 = vunpack.c.h.b16 %v168
    %v1070 = vunpack.c.l.b16 %v169
    %v1071 = vunpack.c.h.b16 %v169
    %v1072 = vunpack.c.l.b16 %v170
    %v1073 = vunpack.c.h.b16 %v170
    %v1074 = vunpack.c.l.b16 %v171
    %v1075 = vunpack.c.h.b16 %v171
    %v1076 = vunpack.c.l.b16 %v172
    %v1077 = vunpack.c.h.b16 %v172
    %v1078 = vunpack.c.l.b16 %v173
    %v1079 = vunpack.c.h.b16 %v173
    %v1080 = vunpack.c.l.b16 %v174
    %v1081 = vunpack.c.h.b16 %v174
    %v1082 = vunpack.c.l.b16 %v175
    %v1083 = vunpack.c.h.b16 %v175
    %v1084 = vunpack.c.l.b16 %v176
    %v1085 = vunpack.c.h.b16 %v176
    %v1086 = vunpack.c.l.b16 %v177
    %v1087 = vunpack.c.h.b16 %v177
    %v1088 = vunpack.c.l.b16 %v178
    %v1089 = vunpack.c.h.b16 %v178
    %v1090 = vunpack.c.l.b16 %v179
    %v1091 = vunpack.c.h.b16 %v179
    %v1092 = vunpack.c.l.b16 %v180
    %v1093 = vunpack.c.h.b16 %v180
    %v1094 = vunpack.c.l.b16 %v181
    %v1095 = vunpack.c.h.b16 %v181
    %v1096 = vunpack.c.l.b16 %v182
    %v1097 = vunpack.c.h.b16 %v182
    %v1098 = vunpack.c.l.b16 %v183
    %v1099 = vunpack.c.h.b16 %v183
    %v1100 = vunpack.c.l.b16 %v184
    %v1101 = vunpack.c.h.b16 %v184
    %v1102 = vunpack.c.l.b16 %v185
    %v1103 = vunpack.c.h.b16 %v185
    %v1104 = vunpack.c.l.b16 %v186
    %v1105 = vunpack.c.h.b16 %v186
    %v1106 = vunpack.c.l.b16 %v187
    %v1107 = vunpack.c.h.b16 %v187
    %v1108 = vunpack.c.l.b16 %v188
    %v1109 = vunpack.c.h.b16 %v188
    %v1110 = vunpack.c.l.b16 %v189
    %v1111 = vunpack.c.h.b16 %v189
    %v1112 = vunpack.c.l.b16 %v190
    %v1113 = vunpack.c.h.b16 %v190
    %v1114 = vunpack.c.l.b16 %v191
    %v1115 = vunpack.c.h.b16 %v191
    %v1116 = vunpack.c.l.b16 %v192
    %v1117 = vunpack.c.h.b16 %v192
    %v1118 = vunpack.c.l.b16 %v193
    %v1119 = vunpack.c.h.b16 %v193
    %v1120 = vunpack.c.l.b16 %v194
    %v1121 = vunpack.c.h.b16 %v194
    %v1122 = vunpack.c.l.b16 %v195
    %v1123 = vunpack.c.h.b16 %v195
    %v1124 = vunpack.c.l.b16 %v196
    %v1125 = vunpack.c.h.b16 %v196
    %v1126 = vunpack.c.l.b16 %v197
    %v1127 = vunpack.c.h.b16 %v197
    %v1128 = vunpack.c.l.b16 %v198
    %v1129 = vunpack.c.h.b16 %v198
    %v1130 = vunpack.c.l.b16 %v199
    %v1131 = vunpack.c.h.b16 %v199
    %v1132 = vunpack.c.l.b16 %v200
    %v1133 = vunpack.c.h.b16 %v200
    %v1134 = vunpack.c.l.b16 %v201
    %v1135 = vunpack.c.h.b16 %v201
    %v1136 = vunpack.c.l.b16 %v202
    %v1137 = vunpack.c.h.b16 %v202
    %v1138 = vunpack.c.l.b16 %v203
    %v1139 = vunpack.c.h.b16 %v203
    %v1140 = vunpack.c.l.b16 %v204
    %v1141 = vunpack.c.h.b16 %v204
    %v1142 = vunpack.c.l.b16 %v205
    %v1143 = vunpack.c.h.b16 %v205
    %v1144 = vunpack.c.l.b16 %v206
    %v1145 = vunpack.c.h.b16 %v206
    %v1146 = vunpack.c.l.b16 %v207
    %v1147 = vunpack.c.h.b16 %v207
    %v1148 = vunpack.c.l.b16 %v208
    %v1149 = vunpack.c.h.b16 %v208
    %v1150 = vunpack.c.l.b16 %v209
    %v1151 = vunpack.c.h.b16 %v209
    %v1152 = vunpack.c.l.b16 %v210
    %v1153 = vunpack.c.h.b16 %v210
    %v1154 = vunpack.c.l.b16 %v211
    %v1155 = vunpack.c.h.b16 %v211
    %v1156 = vunpack.c.l.b16 %v212
    %v1157 = vunpack.c.h.b16 %v212
    %v1158 = vunpack.c.l.b16 %v213
    %v1159 = vunpack.c.h.b16 %v213
    %v1160 = vunpack.c.l.b16 %v214
    %v1161 = vunpack.c.h.b16 %v214
    %v1162 = vunpack.c.l.b16 %v215
    %v1163 = vunpack.c.h.b16 %v215
    %v1164 = vunpack.c.l.b16 %v216
    %v1165 = vunpack.c.h.b16 %v216
    %v1166 = vunpack.c.l.b16 %v217
    %v1167 = vunpack.c.h.b16 %v217
    %v1168 = vunpack.c.l.b16 %v218
    %v1169 = vunpack.c.h.b16 %v218
    %v1170 = vunpack.c.l.b16 %v219
    %v1171 = vunpack.c.h.b16 %v219
    %v1172 = vunpack.c.l.b16 %v220
    %v1173 = vunpack.c.h.b16 %v220
    %v1174 = vunpack.c.l.b16 %v221
    %v1175 = vunpack.c.h.b16 %v221
    %v1176 = vunpack.c.l.b16 %v222
    %v1177 = vunpack.c.h.b16 %v222
    %v1178 = vunpack.c.l.b16 %v223
    %v1179 = vunpack.c.h.b16 %v223
    %v1180 = vunpack.c.l.b16 %v224
    %v1181 = vunpack.c.h.b16 %v224
    %v1182 = vunpack.c.l.b16 %v225
    %v1183 = vunpack.c.h.b16 %v225
    %v1184 = vunpack.c.l.b16 %v226
    %v1185 = vunpack.c.h.b16 %v226
    %v1186 = vunpack.c.l.b16 %v227
    %v1187 = vunpack.c.h.b16 %v227
    %v1188 = vunpack.c.l.b16 %v228
    %v1189 = vunpack.c.h.b16 %v228
    %v1190 = vunpack.c.l.b16 %v229
    %v1191 = vunpack.c.h.b16 %v229
    %v1192 = vunpack.c.l.b16 %v230
    %v1193 = vunpack.c.h.b16 %v230
    %v1194 = vunpack.c.l.b16 %v231
    %v1195 = vunpack.c.h.b16 %v231
    %v1196 = vunpack.c.l.b16 %v232
    %v1197 = vunpack.c.h.b16 %v232
    %v1198 = vunpack.c.l.b16 %v233
    %v1199 = vunpack.c.h.b16 %v233
    %v1200 = vunpack.c.l.b16 %v234
    %v1201 = vunpack.c.h.b16 %v234
    %v1202 = vunpack.c.l.b16 %v235
    %v1203 = vunpack.c.h.b16 %v235
    %v1204 = vunpack.c.l.b16 %v236
    %v1205 = vunpack.c.h.b16 %v236
    %v1206 = vunpack.c.l.b16 %v237
    %v1207 = vunpack.c.h.b16 %v237
    %v1208 = vunpack.c.l.b16 %v238
    %v1209 = vunpack.c.h.b16 %v238
    %v1210 = vunpack.c.l.b16 %v239
    %v1211 = vunpack.c.h.b16 %v239
    %v1212 = vunpack.c.l.b16 %v240
    %v1213 = vunpack.c.h.b16 %v240
    %v1214 = vunpack.c.l.b16 %v241
    %v1215 = vunpack.c.h.b16 %v241
    %v1216 = vunpack.c.l.b16 %v242
    %v1217 = vunpack.c.h.b16 %v242
    %v1218 = vunpack.c.l.b16 %v243
    %v1219 = vunpack.c.h.b16 %v243
    %v1220 = vunpack.c.l.b16 %v244
    %v1221 = vunpack.c.h.b16 %v244
    %v1222 = vunpack.c.l.b16 %v245
    %v1223 = vunpack.c.h.b16 %v245
    %v1224 = vunpack.c.l.b16 %v246
    %v1225 = vunpack.c.h.b16 %v246
    %v1226 = vunpack.c.l.b16 %v247
    %v1227 = vunpack.c.h.b16 %v247
    %v1228 = vunpack.c.l.b16 %v248
    %v1229 = vunpack.c.h.b16 %v248
    %v1230 = vunpack.c.l.b16 %v249
    %v1231 = vunpack.c.h.b16 %v249
    %v1232 = vunpack.c.l.b16 %v250
    %v1233 = vunpack.c.h.b16 %v250
    %v1234 = vunpack.c.l.b16 %v251
    %v1235 = vunpack.c.h.b16 %v251
    %v1236 = vunpack.c.l.b16 %v252
    %v1237 = vunpack.c.h.b16 %v252
    %v1238 = vunpack.c.l.b16 %v253
    %v1239 = vunpack.c.h.b16 %v253
    %v1240 = vunpack.c.l.b16 %v254
    %v1241 = vunpack.c.h.b16 %v254
    %v1242 = vunpack.c.l.b16 %v255
    %v1243 = vunpack.c.h.b16 %v255
    %v1244 = vunpack.c.l.b16 %v256
    %v1245 = vunpack.c.h.b16 %v256
    %v1246 = vunpack.c.l.b16 %v257
    %v1247 = vunpack.c.h.b16 %v257
    %v1248 = vunpack.c.l.b16 %v258
    %v1249 = vunpack.c.h.b16 %v258
    %v1250 = vunpack.c.l.b16 %v259
    %v1251 = vunpack.c.h.b16 %v259
    %v1252 = vunpack.c.l.b16 %v260
    %v1253 = vunpack.c.h.b16 %v260
    %v1254 = vunpack.c.l.b16 %v261
    %v1255 = vunpack.c.h.b16 %v261
    %v1256 = vunpack.c.l.b16 %v262
    %v1257 = vunpack.c.h.b16 %v262
    %v1258 = vunpack.c.l.b16 %v263
    %v1259 = vunpack.c.h.b16 %v263
    %v1260 = vunpack.c.l.b16 %v264
    %v1261 = vunpack.c.h.b16 %v264
    %v1262 = vunpack.c.l.b16 %v265
    %v1263 = vunpack.c.h.b16 %v265
    %v1264 = vunpack.c.l.b16 %v266
    %v1265 = vunpack.c.h.b16 %v266
    %v1266 = vunpack.c.l.b16 %v267
    %v1267 = vunpack.c.h.b16 %v267
    %v1268 = vunpack.c.l.b16 %v268
    %v1269 = vunpack.c.h.b16 %v268
    %v1270 = vunpack.c.l.b16 %v269
    %v1271 = vunpack.c.h.b16 %v269
    %v1272 = vunpack.c.l.b16 %v270
    %v1273 = vunpack.c.h.b16 %v270
    %v1274 = vunpack.c.l.b16 %v271
    %v1275 = vunpack.c.h.b16 %v271
    %v1276 = vunpack.c.l.b16 %v272
    %v1277 = vunpack.c.h.b16 %v272
    %v1278 = vunpack.c.l.b16 %v273
    %v1279 = vunpack.c.h.b16 %v273
    %v1280 = vunpack.c.l.b16 %v274
    %v1281 = vunpack.c.h.b16 %v274
    %v1282 = vunpack.c.l.b16 %v275
    %v1283 = vunpack.c.h.b16 %v275
    %v1284 = vunpack.c.l.b16 %v276
    %v1285 = vunpack.c.h.b16 %v276
    %v1286 = vunpack.c.l.b16 %v277
    %v1287 = vunpack.c.h.b16 %v277
    %v1288 = vunpack.c.l.b16 %v278
    %v1289 = vunpack.c.h.b16 %v278
    %v1290 = vunpack.c.l.b16 %v279
    %v1291 = vunpack.c.h.b16 %v279
    %v1292 = vunpack.c.l.b16 %v280
    %v1293 = vunpack.c.h.b16 %v280
    %v1294 = vunpack.c.l.b16 %v281
    %v1295 = vunpack.c.h.b16 %v281
    %v1296 = vunpack.c.l.b16 %v282
    %v1297 = vunpack.c.h.b16 %v282
    %v1298 = vunpack.c.l.b16 %v283
    %v1299 = vunpack.c.h.b16 %v283
    %v1300 = vunpack.c.l.b16 %v284
    %v1301 = vunpack.c.h.b16 %v284
    %v1302 = vunpack.c.l.b16 %v285
    %v1303 = vunpack.c.h.b16 %v285
    %v1304 = vunpack.c.l.b16 %v286
    %v1305 = vunpack.c.h.b16 %v286
    %v1306 = vunpack.c.l.b16 %v287
    %v1307 = vunpack.c.h.b16 %v287
    %v1308 = vunpack.c.l.b16 %v288
    %v1309 = vunpack.c.h.b16 %v288
    %v1310 = vunpack.c.l.b16 %v289
    %v1311 = vunpack.c.h.b16 %v289
    %v1312 = vunpack.c.l.b16 %v290
    %v1313 = vunpack.c.h.b16 %v290
    %v1314 = vunpack.c.l.b16 %v291
    %v1315 = vunpack.c.h.b16 %v291
    %v1316 = vunpack.c.l.b16 %v292
    %v1317 = vunpack.c.h.b16 %v292
    %v1318 = vunpack.c.l.b16 %v293
    %v1319 = vunpack.c.h.b16 %v293
    %v1320 = vunpack.c.l.b16 %v294
    %v1321 = vunpack.c.h.b16 %v294
    %v1322 = vunpack.c.l.b16 %v295
    %v1323 = vunpack.c.h.b16 %v295
    %v1324 = vunpack.c.l.b16 %v296
    %v1325 = vunpack.c.h.b16 %v296
    %v1326 = vunpack.c.l.b16 %v297
    %v1327 = vunpack.c.h.b16 %v297
    %v1328 = vunpack.c.l.b16 %v298
    %v1329 = vunpack.c.h.b16 %v298
    %v1330 = vunpack.c.l.b16 %v299
    %v1331 = vunpack.c.h.b16 %v299
    %v1332 = vunpack.c.l.b16 %v300
    %v1333 = vunpack.c.h.b16 %v300
    %v1334 = vunpack.c.l.b16 %v301
    %v1335 = vunpack.c.h.b16 %v301
    %v1336 = vunpack.c.l.b16 %v302
    %v1337 = vunpack.c.h.b16 %v302
    %v1338 = vunpack.c.l.b16 %v303
    %v1339 = vunpack.c.h.b16 %v303
    %v1340 = vunpack.c.l.b16 %v304
    %v1341 = vunpack.c.h.b16 %v304
    %v1342 = vunpack.c.l.b16 %v305
    %v1343 = vunpack.c.h.b16 %v305
    %v1344 = vunpack.c.l.b16 %v306
    %v1345 = vunpack.c.h.b16 %v306
    %v1346 = vunpack.c.l.b16 %v307
    %v1347 = vunpack.c.h.b16 %v307
    %v1348 = vunpack.c.l.b16 %v308
    %v1349 = vunpack.c.h.b16 %v308
    %v1350 = vunpack.c.l.b16 %v309
    %v1351 = vunpack.c.h.b16 %v309
    %v1352 = vunpack.c.l.b16 %v310
    %v1353 = vunpack.c.h.b16 %v310
    %v1354 = vunpack.c.l.b16 %v311
    %v1355 = vunpack.c.h.b16 %v311
    %v1356 = vunpack.c.l.b16 %v312
    %v1357 = vunpack.c.h.b16 %v312
    %v1358 = vunpack.c.l.b16 %v313
    %v1359 = vunpack.c.h.b16 %v313
    %v1360 = vunpack.c.l.b16 %v314
    %v1361 = vunpack.c.h.b16 %v314
    %v1362 = vunpack.c.l.b16 %v315
    %v1363 = vunpack.c.h.b16 %v315
    %v1364 = vunpack.c.l.b16 %v316
    %v1365 = vunpack.c.h.b16 %v316
    %v1366 = vunpack.c.l.b16 %v317
    %v1367 = vunpack.c.h.b16 %v317
    %v1368 = vunpack.c.l.b16 %v318
    %v1369 = vunpack.c.h.b16 %v318
    %v1370 = vunpack.c.l.b16 %v319
    %v1371 = vunpack.c.h.b16 %v319
    %v1372 = vunpack.c.l.b16 %v320
    %v1373 = vunpack.c.h.b16 %v320
    %v1374 = vunpack.c.l.b16 %v321
    %v1375 = vunpack.c.h.b16 %v321
    %v1376 = vunpack.c.l.b16 %v322
    %v1377 = vunpack.c.h.b16 %v322
    %v1378 = vunpack.c.l.b16 %v323
    %v1379 = vunpack.c.h.b16 %v323
    %v1380 = vunpack.c.l.b16 %v324
    %v1381 = vunpack.c.h.b16 %v324
    %v1382 = vunpack.c.l.b16 %v325
    %v1383 = vunpack.c.h.b16 %v325
    %v1384 = vunpack.c.l.b16 %v326
    %v1385 = vunpack.c.h.b16 %v326
    %v1386 = vunpack.c.l.b16 %v327
    %v1387 = vunpack.c.h.b16 %v327
    %v1388 = vunpack.c.l.b16 %v328
    %v1389 = vunpack.c.h.b16 %v328
    %v1390 = vunpack.c.l.b16 %v329
    %v1391 = vunpack.c.h.b16 %v329
    %v1392 = vunpack.c.l.b16 %v330
    %v1393 = vunpack.c.h.b16 %v330
    %v1394 = vunpack.c.l.b16 %v331
    %v1395 = vunpack.c.h.b16 %v331
    %v1396 = vunpack.c.l.b16 %v332
    %v1397 = vunpack.c.h.b16 %v332
    %v1398 = vunpack.c.l.b16 %v333
    %v1399 = vunpack.c.h.b16 %v333
    %v1400 = vunpack.c.l.b16 %v334
    %v1401 = vunpack.c.h.b16 %v334
    %v1402 = vunpack.c.l.b16 %v335
    %v1403 = vunpack.c.h.b16 %v335
    %v1404 = vunpack.c.l.b16 %v336
    %v1405 = vunpack.c.h.b16 %v336
    %v1406 = vunpack.c.l.b16 %v337
    %v1407 = vunpack.c.h.b16 %v337
    %v1408 = vunpack.c.l.b16 %v338
    %v1409 = vunpack.c.h.b16 %v338
    %v1410 = vunpack.c.l.b16 %v339
    %v1411 = vunpack.c.h.b16 %v339
    %v1412 = vunpack.c.l.b16 %v340
    %v1413 = vunpack.c.h.b16 %v340
    %v1414 = vunpack.c.l.b16 %v341
    %v1415 = vunpack.c.h.b16 %v341
    %v1416 = vunpack.c.l.b16 %v342
    %v1417 = vunpack.c.h.b16 %v342
    %v1418 = vunpack.c.l.b16 %v343
    %v1419 = vunpack.c.h.b16 %v343
    %v1420 = vunpack.c.l.b16 %v344
    %v1421 = vunpack.c.h.b16 %v344
    %v1422 = vunpack.c.l.b16 %v345
    %v1423 = vunpack.c.h.b16 %v345
    %v1424 = vunpack.c.l.b16 %v346
    %v1425 = vunpack.c.h.b16 %v346
    %v1426 = vunpack.c.l.b16 %v347
    %v1427 = vunpack.c.h.b16 %v347
    %v1428 = vunpack.c.l.b16 %v348
    %v1429 = vunpack.c.h.b16 %v348
    %v1430 = vunpack.c.l.b16 %v349
    %v1431 = vunpack.c.h.b16 %v349
    %v1432 = vunpack.c.l.b16 %v350
    %v1433 = vunpack.c.h.b16 %v350
    %v1434 = vunpack.c.l.b16 %v351
    %v1435 = vunpack.c.h.b16 %v351
    %v1436 = vunpack.c.l.b16 %v352
    %v1437 = vunpack.c.h.b16 %v352
    %v1438 = vunpack.c.l.b16 %v353
    %v1439 = vunpack.c.h.b16 %v353
    %v1440 = vunpack.c.l.b16 %v354
    %v1441 = vunpack.c.h.b16 %v354
    %v1442 = vunpack.c.l.b16 %v355
    %v1443 = vunpack.c.h.b16 %v355
    %v1444 = vunpack.c.l.b16 %v356
    %v1445 = vunpack.c.h.b16 %v356
    %v1446 = vunpack.c.l.b16 %v357
    %v1447 = vunpack.c.h.b16 %v357
    %v1448 = vunpack.c.l.b16 %v358
    %v1449 = vunpack.c.h.b16 %v358
    %v1450 = vunpack.c.l.b16 %v359
    %v1451 = vunpack.c.h.b16 %v359
    %v1452 = vunpack.c.l.b16 %v360
    %v1453 = vunpack.c.h.b16 %v360
    %v1454 = vunpack.c.l.b16 %v361
    %v1455 = vunpack.c.h.b16 %v361
    %v1456 = vunpack.c.l.b16 %v362
    %v1457 = vunpack.c.h.b16 %v362
    %v1458 = vunpack.c.l.b16 %v363
    %v1459 = vunpack.c.h.b16 %v363
    %v1460 = vunpack.c.l.b16 %v364
    %v1461 = vunpack.c.h.b16 %v364
    %v1462 = vunpack.c.l.b16 %v365
    %v1463 = vunpack.c.h.b16 %v365
    %v1464 = vunpack.c.l.b16 %v366
    %v1465 = vunpack.c.h.b16 %v366
    %v1466 = vunpack.c.l.b16 %v367
    %v1467 = vunpack.c.h.b16 %v367
    %v1468 = vunpack.c.l.b16 %v368
    %v1469 = vunpack.c.h.b16 %v368
    %v1470 = vunpack.c.l.b16 %v369
    %v1471 = vunpack.c.h.b16 %v369
    %v1472 = vunpack.c.l.b16 %v370
    %v1473 = vunpack.c.h.b16 %v370
    %v1474 = vunpack.c.l.b16 %v371
    %v1475 = vunpack.c.h.b16 %v371
    %v1476 = vunpack.c.l.b16 %v372
    %v1477 = vunpack.c.h.b16 %v372
    %v1478 = vunpack.c.l.b16 %v373
    %v1479 = vunpack.c.h.b16 %v373
    %v1480 = vunpack.c.l.b16 %v374
    %v1481 = vunpack.c.h.b16 %v374
    %v1482 = vunpack.c.l.b16 %v375
    %v1483 = vunpack.c.h.b16 %v375
    %v1484 = vunpack.c.l.b16 %v376
    %v1485 = vunpack.c.h.b16 %v376
    %v1486 = vunpack.c.l.b16 %v377
    %v1487 = vunpack.c.h.b16 %v377
    %v1488 = vunpack.c.l.b16 %v378
    %v1489 = vunpack.c.h.b16 %v378
    %v1490 = vunpack.c.l.b16 %v379
    %v1491 = vunpack.c.h.b16 %v379
    %v1492 = vunpack.c.l.b16 %v380
    %v1493 = vunpack.c.h.b16 %v380
    %v1494 = vunpack.c.l.b16 %v381
    %v1495 = vunpack.c.h.b16 %v381
    %v1496 = vunpack.c.l.b16 %v382
    %v1497 = vunpack.c.h.b16 %v382
    %v1498 = vunpack.c.l.b16 %v383
    %v1499 = vunpack.c.h.b16 %v383
    %v1500 = vunpack.c.l.b16 %v384
    %v1501 = vunpack.c.h.b16 %v384
    %v1502 = vunpack.c.l.b16 %v385
    %v1503 = vunpack.c.h.b16 %v385
    %v1504 = vunpack.c.l.b16 %v386
    %v1505 = vunpack.c.h.b16 %v386
    %v1506 = vunpack.c.l.b16 %v387
    %v1507 = vunpack.c.h.b16 %v387
    %v1508 = vunpack.c.l.b16 %v388
    %v1509 = vunpack.c.h.b16 %v388
    %v1510 = vunpack.c.l.b16 %v389
    %v1511 = vunpack.c.h.b16 %v389
    %v1512 = vunpack.c.l.b16 %v390
    %v1513 = vunpack.c.h.b16 %v390
    %v1514 = vunpack.c.l.b16 %v391
    %v1515 = vunpack.c.h.b16 %v391
    %v1516 = vunpack.c.l.b16 %v392
    %v1517 = vunpack.c.h.b16 %v392
    %v1518 = vunpack.c.l.b16 %v393
    %v1519 = vunpack.c.h.b16 %v393
    %v1520 = vunpack.c.l.b16 %v394
    %v1521 = vunpack.c.h.b16 %v394
    %v1522 = vunpack.c.l.b16 %v395
    %v1523 = vunpack.c.h.b16 %v395
    %v1524 = vunpack.c.l.b16 %v396
    %v1525 = vunpack.c.h.b16 %v396
    %v1526 = vunpack.c.l.b16 %v397
    %v1527 = vunpack.c.h.b16 %v397
    %v1528 = vunpack.c.l.b16 %v398
    %v1529 = vunpack.c.h.b16 %v398
    %v1530 = vunpack.c.l.b16 %v399
    %v1531 = vunpack.c.h.b16 %v399
    %v1532 = vunpack.c.l.b16 %v400
    %v1533 = vunpack.c.h.b16 %v400
    %v1534 = vunpack.c.l.b16 %v401
    %v1535 = vunpack.c.h.b16 %v401
    %v1536 = vunpack.c.l.b16 %v402
    %v1537 = vunpack.c.h.b16 %v402
    %v1538 = vunpack.c.l.b16 %v403
    %v1539 = vunpack.c.h.b16 %v403
    %v1540 = vunpack.c.l.b16 %v404
    %v1541 = vunpack.c.h.b16 %v404
    %v1542 = vunpack.c.l.b16 %v405
    %v1543 = vunpack.c.h.b16 %v405
    %v1544 = vunpack.c.l.b16 %v406
    %v1545 = vunpack.c.h.b16 %v406
    %v1546 = vunpack.c.l.b16 %v407
    %v1547 = vunpack.c.h.b16 %v407
    %v1548 = vunpack.c.l.b16 %v408
    %v1549 = vunpack.c.h.b16 %v408
    %v1550 = vunpack.c.l.b16 %v409
    %v1551 = vunpack.c.h.b16 %v409
    %v1552 = vunpack.c.l.b16 %v410
    %v1553 = vunpack.c.h.b16 %v410
    %v1554 = vunpack.c.l.b16 %v411
    %v1555 = vunpack.c.h.b16 %v411
    %v1556 = vunpack.c.l.b16 %v412
    %v1557 = vunpack.c.h.b16 %v412
    %v1558 = vunpack.c.l.b16 %v413
    %v1559 = vunpack.c.h.b16 %v413
    %v1560 = vunpack.c.l.b16 %v414
    %v1561 = vunpack.c.h.b16 %v414
    %v1562 = vunpack.c.l.b16 %v415
    %v1563 = vunpack.c.h.b16 %v415
    %v1564 = vunpack.c.l.b16 %v416
    %v1565 = vunpack.c.h.b16 %v416
    %v1566 = vunpack.c.l.b16 %v417
    %v1567 = vunpack.c.h.b16 %v417
    %v1568 = vunpack.c.l.b16 %v418
    %v1569 = vunpack.c.h.b16 %v418
    %v1570 = vunpack.c.l.b16 %v419
    %v1571 = vunpack.c.h.b16 %v419
    %v1572 = vunpack.c.l.b16 %v420
    %v1573 = vunpack.c.h.b16 %v420
    %v1574 = vunpack.c.l.b16 %v421
    %v1575 = vunpack.c.h.b16 %v421
    %v1576 = vunpack.c.l.b16 %v422
    %v1577 = vunpack.c.h.b16 %v422
    %v1578 = vunpack.c.l.b16 %v423
    %v1579 = vunpack.c.h.b16 %v423
    %v1580 = vunpack.c.l.b16 %v424
    %v1581 = vunpack.c.h.b16 %v424
    %v1582 = vunpack.c.l.b16 %v425
    %v1583 = vunpack.c.h.b16 %v425
    %v1584 = vunpack.c.l.b16 %v426
    %v1585 = vunpack.c.h.b16 %v426
    %v1586 = vunpack.c.l.b16 %v427
    %v1587 = vunpack.c.h.b16 %v427
    %v1588 = vunpack.c.l.b16 %v428
    %v1589 = vunpack.c.h.b16 %v428
    %v1590 = vunpack.c.l.b16 %v429
    %v1591 = vunpack.c.h.b16 %v429
    %v1592 = vunpack.c.l.b16 %v430
    %v1593 = vunpack.c.h.b16 %v430
    %v1594 = vunpack.c.l.b16 %v431
    %v1595 = vunpack.c.h.b16 %v431
    %v1596 = vunpack.c.l.b16 %v432
    %v1597 = vunpack.c.h.b16 %v432
    %v1598 = vunpack.c.l.b16 %v433
    %v1599 = vunpack.c.h.b16 %v433
    %v1600 = vunpack.c.l.b16 %v434
    %v1601 = vunpack.c.h.b16 %v434
    %v1602 = vunpack.c.l.b16 %v435
    %v1603 = vunpack.c.h.b16 %v435
    %v1604 = vunpack.c.l.b16 %v436
    %v1605 = vunpack.c.h.b16 %v436
    %v1606 = vunpack.c.l.b16 %v437
    %v1607 = vunpack.c.h.b16 %v437
    %v1608 = vunpack.c.l.b16 %v438
    %v1609 = vunpack.c.h.b16 %v438
    %v1610 = vunpack.c.l.b16 %v439
    %v1611 = vunpack.c.h.b16 %v439
    %v1612 = vunpack.c.l.b16 %v440
    %v1613 = vunpack.c.h.b16 %v440
    %v1614 = vunpack.c.l.b16 %v441
    %v1615 = vunpack.c.h.b16 %v441
    %v1616 = vunpack.c.l.b16 %v442
    %v1617 = vunpack.c.h.b16 %v442
    %v1618 = vunpack.c.l.b16 %v443
    %v1619 = vunpack.c.h.b16 %v443
    %v1620 = vunpack.c.l.b16 %v444
    %v1621 = vunpack.c.h.b16 %v444
    %v1622 = vunpack.c.l.b16 %v445
    %v1623 = vunpack.c.h.b16 %v445
    %v1624 = vunpack.c.l.b16 %v446
    %v1625 = vunpack.c.h.b16 %v446
    %v1626 = vunpack.c.l.b16 %v447
    %v1627 = vunpack.c.h.b16 %v447
    %v1628 = vunpack.c.l.b16 %v448
    %v1629 = vunpack.c.h.b16 %v448
    %v1630 = vunpack.c.l.b16 %v449
    %v1631 = vunpack.c.h.b16 %v449
    %v1632 = vunpack.c.l.b16 %v450
    %v1633 = vunpack.c.h.b16 %v450
    %v1634 = vunpack.c.l.b16 %v451
    %v1635 = vunpack.c.h.b16 %v451
    %v1636 = vunpack.c.l.b16 %v452
    %v1637 = vunpack.c.h.b16 %v452
    %v1638 = vunpack.c.l.b16 %v453
    %v1639 = vunpack.c.h.b16 %v453
    %v1640 = vunpack.c.l.b16 %v454
    %v1641 = vunpack.c.h.b16 %v454
    %v1642 = vunpack.c.l.b16 %v455
    %v1643 = vunpack.c.h.b16 %v455
    %v1644 = vunpack.c.l.b16 %v456
    %v1645 = vunpack.c.h.b16 %v456
    %v1646 = vunpack.c.l.b16 %v457
    %v1647 = vunpack.c.h.b16 %v457
    %v1648 = vunpack.c.l.b16 %v458
    %v1649 = vunpack.c.h.b16 %v458
    %v1650 = vunpack.c.l.b16 %v459
    %v1651 = vunpack.c.h.b16 %v459
    %v1652 = vunpack.c.l.b16 %v460
    %v1653 = vunpack.c.h.b16 %v460
    %v1654 = vunpack.c.l.b16 %v461
    %v1655 = vunpack.c.h.b16 %v461
    %v1656 = vunpack.c.l.b16 %v462
    %v1657 = vunpack.c.h.b16 %v462
    %v1658 = vunpack.c.l.b16 %v463
    %v1659 = vunpack.c.h.b16 %v463
    %v1660 = vunpack.c.l.b16 %v464
    %v1661 = vunpack.c.h.b16 %v464
    %v1662 = vunpack.c.l.b16 %v465
    %v1663 = vunpack.c.h.b16 %v465
    %v1664 = vunpack.c.l.b16 %v466
    %v1665 = vunpack.c.h.b16 %v466
    %v1666 = vunpack.c.l.b16 %v467
    %v1667 = vunpack.c.h.b16 %v467
    %v1668 = vunpack.c.l.b16 %v468
    %v1669 = vunpack.c.h.b16 %v468
    %v1670 = vunpack.c.l.b16 %v469
    %v1671 = vunpack.c.h.b16 %v469
    %v1672 = vunpack.c.l.b16 %v470
    %v1673 = vunpack.c.h.b16 %v470
    %v1674 = vunpack.c.l.b16 %v471
    %v1675 = vunpack.c.h.b16 %v471
    %v1676 = vunpack.c.l.b16 %v472
    %v1677 = vunpack.c.h.b16 %v472
    %v1678 = vunpack.c.l.b16 %v473
    %v1679 = vunpack.c.h.b16 %v473
    %v1680 = vunpack.c.l.b16 %v474
    %v1681 = vunpack.c.h.b16 %v474
    %v1682 = vunpack.c.l.b16 %v475
    %v1683 = vunpack.c.h.b16 %v475
    %v1684 = vunpack.c.l.b16 %v476
    %v1685 = vunpack.c.h.b16 %v476
    %v1686 = vunpack.c.l.b16 %v477
    %v1687 = vunpack.c.h.b16 %v477
    %v1688 = vunpack.c.l.b16 %v478
    %v1689 = vunpack.c.h.b16 %v478
    %v1690 = vunpack.c.l.b16 %v479
    %v1691 = vunpack.c.h.b16 %v479
    %v1692 = vunpack.c.l.b16 %v480
    %v1693 = vunpack.c.h.b16 %v480
    %v1694 = vunpack.c.l.b16 %v481
    %v1695 = vunpack.c.h.b16 %v481
    %v1696 = vunpack.c.l.b16 %v482
    %v1697 = vunpack.c.h.b16 %v482
    %v1698 = vunpack.c.l.b16 %v483
    %v1699 = vunpack.c.h.b16 %v483
    %v1700 = vunpack.c.l.b16 %v484
    %v1701 = vunpack.c.h.b16 %v484
    %v1702 = vunpack.c.l.b16 %v485
    %v1703 = vunpack.c.h.b16 %v485
    %v1704 = vunpack.c.l.b16 %v486
    %v1705 = vunpack.c.h.b16 %v486
    %v1706 = vunpack.c.l.b16 %v487
    %v1707 = vunpack.c.h.b16 %v487
    %v1708 = vpack.c.b16 %v952, %v940
    %v1709 = vpack.c.b16 %v953, %v941
    %v1710 = vpack.c.b16 %v954, %v942
    %v1711 = vpack.c.b16 %v955, %v943
    %v1712 = vpack.c.b16 %v956, %v944
    %v1713 = vpack.c.b16 %v957, %v945
    %v1714 = vpack.c.b16 %v958, %v946
    %v1715 = vpack.c.b16 %v959, %v947
    %v1716 = vpack.c.b16 %v960, %v948
    %v1717 = vpack.c.b16 %v961, %v949
    %v1718 = vpack.c.b16 %v962, %v950
    %v1719 = vpack.c.b16 %v963, %v951
    %v1720 = vpack.c.b16 %v976, %v964
    %v1721 = vpack.c.b16 %v977, %v965
    %v1722 = vpack.c.b16 %v978, %v966
    %v1723 = vpack.c.b16 %v979, %v967
    %v1724 = vpack.c.b16 %v980, %v968
    %v1725 = vpack.c.b16 %v981, %v969
    %v1726 = vpack.c.b16 %v982, %v970
    %v1727 = vpack.c.b16 %v983, %v971
    %v1728 = vpack.c.b16 %v984, %v972
    %v1729 = vpack.c.b16 %v985, %v973
    %v1730 = vpack.c.b16 %v986, %v974
    %v1731 = vpack.c.b16 %v987, %v975
    %v1732 = vpack.c.b16 %v1000, %v988
    %v1733 = vpack.c.b16 %v1001, %v989
    %v1734 = vpack.c.b16 %v1002, %v990
    %v1735 = vpack.c.b16 %v1003, %v991
    %v1736 = vpack.c.b16 %v1004, %v992
    %v1737 = vpack.c.b16 %v1005, %v993
    %v1738 = vpack.c.b16 %v1006, %v994
    %v1739 = vpack.c.b16 %v1007, %v995
    %v1740 = vpack.c.b16 %v1008, %v996
    %v1741 = vpack.c.b16 %v1009, %v997
    %v1742 = vpack.c.b16 %v1010, %v998
    %v1743 = vpack.c.b16 %v1011, %v999
    %v1744 = vpack.c.b16 %v1024, %v1012
    %v1745 = vpack.c.b16 %v1025, %v1013
    %v1746 = vpack.c.b16 %v1026, %v1014
    %v1747 = vpack.c.b16 %v1027, %v1015
    %v1748 = vpack.c.b16 %v1028, %v1016
    %v1749 = vpack.c.b16 %v1029, %v1017
    %v1750 = vpack.c.b16 %v1030, %v1018
    %v1751 = vpack.c.b16 %v1031, %v1019
    %v1752 = vpack.c.b16 %v1032, %v1020
    %v1753 = vpack.c.b16 %v1033, %v1021
    %v1754 = vpack.c.b16 %v1034, %v1022
    %v1755 = vpack.c.b16 %v1035, %v1023
    %v1756 = vpack.c.b16 %v1048, %v1036
    %v1757 = vpack.c.b16 %v1049, %v1037
    %v1758 = vpack.c.b16 %v1050, %v1038
    %v1759 = vpack.c.b16 %v1051, %v1039
    %v1760 = vpack.c.b16 %v1052, %v1040
    %v1761 = vpack.c.b16 %v1053, %v1041
    %v1762 = vpack.c.b16 %v1054, %v1042
    %v1763 = vpack.c.b16 %v1055, %v1043
    %v1764 = vpack.c.b16 %v1056, %v1044
    %v1765 = vpack.c.b16 %v1057, %v1045
    %v1766 = vpack.c.b16 %v1058, %v1046
    %v1767 = vpack.c.b16 %v1059, %v1047
    %v1768 = vpack.c.b16 %v1072, %v1060
    %v1769 = vpack.c.b16 %v1073, %v1061
    %v1770 = vpack.c.b16 %v1074, %v1062
    %v1771 = vpack.c.b16 %v1075, %v1063
    %v1772 = vpack.c.b16 %v1076, %v1064
    %v1773 = vpack.c.b16 %v1077, %v1065
    %v1774 = vpack.c.b16 %v1078, %v1066
    %v1775 = vpack.c.b16 %v1079, %v1067
    %v1776 = vpack.c.b16 %v1080, %v1068
    %v1777 = vpack.c.b16 %v1081, %v1069
    %v1778 = vpack.c.b16 %v1082, %v1070
    %v1779 = vpack.c.b16 %v1083, %v1071
    %v1780 = vpack.c.b16 %v1096, %v1084
    %v1781 = vpack.c.b16 %v1097, %v1085
    %v1782 = vpack.c.b16 %v1098, %v1086
    %v1783 = vpack.c.b16 %v1099, %v1087
    %v1784 = vpack.c.b16 %v1100, %v1088
    %v1785 = vpack.c.b16 %v1101, %v1089
    %v1786 = vpack.c.b16 %v1102, %v1090
    %v1787 = vpack.c.b16 %v1103, %v1091
    %v1788 = vpack.c.b16 %v1104, %v1092
    %v1789 = vpack.c.b16 %v1105, %v1093
    %v1790 = vpack.c.b16 %v1106, %v1094
    %v1791 = vpack.c.b16 %v1107, %v1095
    %v1792 = vpack.c.b16 %v1120, %v1108
    %v1793 = vpack.c.b16 %v1121, %v1109
    %v1794 = vpack.c.b16 %v1122, %v1110
    %v1795 = vpack.c.b16 %v1123, %v1111
    %v1796 = vpack.c.b16 %v1124, %v1112
    %v1797 = vpack.c.b16 %v1125, %v1113
    %v1798 = vpack.c.b16 %v1126, %v1114
    %v1799 = vpack.c.b16 %v1127, %v1115
    %v1800 = vpack.c.b16 %v1128, %v1116
    %v1801 = vpack.c.b16 %v1129, %v1117
    %v1802 = vpack.c.b16 %v1130, %v1118
    %v1803 = vpack.c.b16 %v1131, %v1119
    %v1804 = vpack.c.b16 %v1144, %v1132
    %v1805 = vpack.c.b16 %v1145, %v1133
    %v1806 = vpack.c.b16 %v1146, %v1134
    %v1807 = vpack.c.b16 %v1147, %v1135
    %v1808 = vpack.c.b16 %v1148, %v1136
    %v1809 = vpack.c.b16 %v1149, %v1137
    %v1810 = vpack.c.b16 %v1150, %v1138
    %v1811 = vpack.c.b16 %v1151, %v1139
    %v1812 = vpack.c.b16 %v1152, %v1140
    %v1813 = vpack.c.b16 %v1153, %v1141
    %v1814 = vpack.c.b16 %v1154, %v1142
    %v1815 = vpack.c.b16 %v1155, %v1143
    %v1816 = vpack.c.b16 %v1168, %v1156
    %v1817 = vpack.c.b16 %v1169, %v1157
    %v1818 = vpack.c.b16 %v1170, %v1158
    %v1819 = vpack.c.b16 %v1171, %v1159
    %v1820 = vpack.c.b16 %v1172, %v1160
    %v1821 = vpack.c.b16 %v1173, %v1161
    %v1822 = vpack.c.b16 %v1174, %v1162
    %v1823 = vpack.c.b16 %v1175, %v1163
    %v1824 = vpack.c.b16 %v1176, %v1164
    %v1825 = vpack.c.b16 %v1177, %v1165
    %v1826 = vpack.c.b16 %v1178, %v1166
    %v1827 = vpack.c.b16 %v1179, %v1167
    %v1828 = vpack.c.b16 %v1192, %v1180
    %v1829 = vpack.c.b16 %v1193, %v1181
    %v1830 = vpack.c.b16 %v1194, %v1182
    %v1831 = vpack.c.b16 %v1195, %v1183
    %v1832 = vpack.c.b16 %v1196, %v1184
    %v1833 = vpack.c.b16 %v1197, %v1185
    %v1834 = vpack.c.b16 %v1198, %v1186
    %v1835 = vpack.c.b16 %v1199, %v1187
    %v1836 = vpack.c.b16 %v1200, %v1188
    %v1837 = vpack.c.b16 %v1201, %v1189
    %v1838 = vpack.c.b16 %v1202, %v1190
    %v1839 = vpack.c.b16 %v1203, %v1191
    %v1840 = vpack.c.b16 %v1216, %v1204
    %v1841 = vpack.c.b16 %v1217, %v1205
    %v1842 = vpack.c.b16 %v1218, %v1206
    %v1843 = vpack.c.b16 %v1219, %v1207
    %v1844 = vpack.c.b16 %v1220, %v1208
    %v1845 = vpack.c.b16 %v1221, %v1209
    %v1846 = vpack.c.b16 %v1222, %v1210
    %v1847 = vpack.c.b16 %v1223, %v1211
    %v1848 = vpack.c.b16 %v1224, %v1212
    %v1849 = vpack.c.b16 %v1225, %v1213
    %v1850 = vpack.c.b16 %v1226, %v1214
    %v1851 = vpack.c.b16 %v1227, %v1215
    %v1852 = vpack.c.b16 %v1240, %v1228
    %v1853 = vpack.c.b16 %v1241, %v1229
    %v1854 = vpack.c.b16 %v1242, %v1230
    %v1855 = vpack.c.b16 %v1243, %v1231
    %v1856 = vpack.c.b16 %v1244, %v1232
    %v1857 = vpack.c.b16 %v1245, %v1233
    %v1858 = vpack.c.b16 %v1246, %v1234
    %v1859 = vpack.c.b16 %v1247, %v1235
    %v1860 = vpack.c.b16 %v1248, %v1236
    %v1861 = vpack.c.b16 %v1249, %v1237
    %v1862 = vpack.c.b16 %v1250, %v1238
    %v1863 = vpack.c.b16 %v1251, %v1239
    %v1864 = vpack.c.b16 %v1264, %v1252
    %v1865 = vpack.c.b16 %v1265, %v1253
    %v1866 = vpack.c.b16 %v1266, %v1254
    %v1867 = vpack.c.b16 %v1267, %v1255
    %v1868 = vpack.c.b16 %v1268, %v1256
    %v1869 = vpack.c.b16 %v1269, %v1257
    %v1870 = vpack.c.b16 %v1270, %v1258
    %v1871 = vpack.c.b16 %v1271, %v1259
    %v1872 = vpack.c.b16 %v1272, %v1260
    %v1873 = vpack.c.b16 %v1273, %v1261
    %v1874 = vpack.c.b16 %v1274, %v1262
    %v1875 = vpack.c.b16 %v1275, %v1263
    %v1876 = vpack.c.b16 %v1288, %v1276
    %v1877 = vpack.c.b16 %v1289, %v1277
    %v1878 = vpack.c.b16 %v1290, %v1278
    %v1879 = vpack.c.b16 %v1291, %v1279
    %v1880 = vpack.c.b16 %v1292, %v1280
    %v1881 = vpack.c.b16 %v1293, %v1281
    %v1882 = vpack.c.b16 %v1294, %v1282
    %v1883 = vpack.c.b16 %v1295, %v1283
    %v1884 = vpack.c.b16 %v1296, %v1284
    %v1885 = vpack.c.b16 %v1297, %v1285
    %v1886 = vpack.c.b16 %v1298, %v1286
    %v1887 = vpack.c.b16 %v1299, %v1287
    %v1888 = vpack.c.b16 %v1312, %v1300
    %v1889 = vpack.c.b16 %v1313, %v1301
    %v1890 = vpack.c.b16 %v1314, %v1302
    %v1891 = vpack.c.b16 %v1315, %v1303
    %v1892 = vpack.c.b16 %v1316, %v1304
    %v1893 = vpack.c.b16 %v1317, %v1305
    %v1894 = vpack.c.b16 %v1318, %v1306
    %v1895 = vpack.c.b16 %v1319, %v1307
    %v1896 = vpack.c.b16 %v1320, %v1308
    %v1897 = vpack.c.b16 %v1321, %v1309
    %v1898 = vpack.c.b16 %v1322, %v1310
    %v1899 = vpack.c.b16 %v1323, %v1311
    %v1900 = vpack.c.b16 %v1336, %v1324
    %v1901 = vpack.c.b16 %v1337, %v1325
    %v1902 = vpack.c.b16 %v1338, %v1326
    %v1903 = vpack.c.b16 %v1339, %v1327
    %v1904 = vpack.c.b16 %v1340, %v1328
    %v1905 = vpack.c.b16 %v1341, %v1329
    %v1906 = vpack.c.b16 %v1342, %v1330
    %v1907 = vpack.c.b16 %v1343, %v1331
    %v1908 = vpack.c.b16 %v1344, %v1332
    %v1909 = vpack.c.b16 %v1345, %v1333
    %v1910 = vpack.c.b16 %v1346, %v1334
    %v1911 = vpack.c.b16 %v1347, %v1335
    %v1912 = vpack.c.b16 %v1360, %v1348
    %v1913 = vpack.c.b16 %v1361, %v1349
    %v1914 = vpack.c.b16 %v1362, %v1350
    %v1915 = vpack.c.b16 %v1363, %v1351
    %v1916 = vpack.c.b16 %v1364, %v1352
    %v1917 = vpack.c.b16 %v1365, %v1353
    %v1918 = vpack.c.b16 %v1366, %v1354
    %v1919 = vpack.c.b16 %v1367, %v1355
    %v1920 = vpack.c.b16 %v1368, %v1356
    %v1921 = vpack.c.b16 %v1369, %v1357
    %v1922 = vpack.c.b16 %v1370, %v1358
    %v1923 = vpack.c.b16 %v1371, %v1359
    %v1924 = vpack.c.b16 %v1384, %v1372
    %v1925 = vpack.c.b16 %v1385, %v1373
    %v1926 = vpack.c.b16 %v1386, %v1374
    %v1927 = vpack.c.b16 %v1387, %v1375
    %v1928 = vpack.c.b16 %v1388, %v1376
    %v1929 = vpack.c.b16 %v1389, %v1377
    %v1930 = vpack.c.b16 %v1390, %v1378
    %v1931 = vpack.c.b16 %v1391, %v1379
    %v1932 = vpack.c.b16 %v1392, %v1380
    %v1933 = vpack.c.b16 %v1393, %v1381
    %v1934 = vpack.c.b16 %v1394, %v1382
    %v1935 = vpack.c.b16 %v1395, %v1383
    %v1936 = vpack.c.b16 %v1408, %v1396
    %v1937 = vpack.c.b16 %v1409, %v1397
    %v1938 = vpack.c.b16 %v1410, %v1398
    %v1939 = vpack.c.b16 %v1411, %v1399
    %v1940 = vpack.c.b16 %v1412, %v1400
    %v1941 = vpack.c.b16 %v1413, %v1401
    %v1942 = vpack.c.b16 %v1414, %v1402
    %v1943 = vpack.c.b16 %v1415, %v1403
    %v1944 = vpack.c.b16 %v1416, %v1404
    %v1945 = vpack.c.b16 %v1417, %v1405
    %v1946 = vpack.c.b16 %v1418, %v1406
    %v1947 = vpack.c.b16 %v1419, %v1407
    %v1948 = vpack.c.b16 %v1432, %v1420
    %v1949 = vpack.c.b16 %v1433, %v1421
    %v1950 = vpack.c.b16 %v1434, %v1422
    %v1951 = vpack.c.b16 %v1435, %v1423
    %v1952 = vpack.c.b16 %v1436, %v1424
    %v1953 = vpack.c.b16 %v1437, %v1425
    %v1954 = vpack.c.b16 %v1438, %v1426
    %v1955 = vpack.c.b16 %v1439, %v1427
    %v1956 = vpack.c.b16 %v1440, %v1428
    %v1957 = vpack.c.b16 %v1441, %v1429
    %v1958 = vpack.c.b16 %v1442, %v1430
    %v1959 = vpack.c.b16 %v1443, %v1431
    %v1960 = vpack.c.b16 %v1456, %v1444
    %v1961 = vpack.c.b16 %v1457, %v1445
    %v1962 = vpack.c.b16 %v1458, %v1446
    %v1963 = vpack.c.b16 %v1459, %v1447
    %v1964 = vpack.c.b16 %v1460, %v1448
    %v1965 = vpack.c.b16 %v1461, %v1449
    %v1966 = vpack.c.b16 %v1462, %v1450
    %v1967 = vpack.c.b16 %v1463, %v1451
    %v1968 = vpack.c.b16 %v1464, %v1452
    %v1969 = vpack.c.b16 %v1465, %v1453
    %v1970 = vpack.c.b16 %v1466, %v1454
    %v1971 = vpack.c.b16 %v1467, %v1455
    %v1972 = vpack.c.b16 %v1480, %v1468
    %v1973 = vpack.c.b16 %v1481, %v1469
    %v1974 = vpack.c.b16 %v1482, %v1470
    %v1975 = vpack.c.b16 %v1483, %v1471
    %v1976 = vpack.c.b16 %v1484, %v1472
    %v1977 = vpack.c.b16 %v1485, %v1473
    %v1978 = vpack.c.b16 %v1486, %v1474
    %v1979 = vpack.c.b16 %v1487, %v1475
    %v1980 = vpack.c.b16 %v1488, %v1476
    %v1981 = vpack.c.b16 %v1489, %v1477
    %v1982 = vpack.c.b16 %v1490, %v1478
    %v1983 = vpack.c.b16 %v1491, %v1479
    %v1984 = vpack.c.b16 %v1504, %v1492
    %v1985 = vpack.c.b16 %v1505, %v1493
    %v1986 = vpack.c.b16 %v1506, %v1494
    %v1987 = vpack.c.b16 %v1507, %v1495
    %v1988 = vpack.c.b16 %v1508, %v1496
    %v1989 = vpack.c.b16 %v1509, %v1497
    %v1990 = vpack.c.b16 %v1510, %v1498
    %v1991 = vpack.c.b16 %v1511, %v1499
    %v1992 = vpack.c.b16 %v1512, %v1500
    %v1993 = vpack.c.b16 %v1513, %v1501
    %v1994 = vpack.c.b16 %v1514, %v1502
    %v1995 = vpack.c.b16 %v1515, %v1503
    %v1996 = vpack.c.b16 %v1528, %v1516
    %v1997 = vpack.c.b16 %v1529, %v1517
    %v1998 = vpack.c.b16 %v1530, %v1518
    %v1999 = vpack.c.b16 %v1531, %v1519
    %v2000 = vpack.c.b16 %v1532, %v1520
    %v2001 = vpack.c.b16 %v1533, %v1521
    %v2002 = vpack.c.b16 %v1534, %v1522
    %v2003 = vpack.c.b16 %v1535, %v1523
    %v2004 = vpack.c.b16 %v1536, %v1524
    %v2005 = vpack.c.b16 %v1537, %v1525
    %v2006 = vpack.c.b16 %v1538, %v1526
    %v2007 = vpack.c.b16 %v1539, %v1527
    %v2008 = vpack.c.b16 %v1552, %v1540
    %v2009 = vpack.c.b16 %v1553, %v1541
    %v2010 = vpack.c.b16 %v1554, %v1542
    %v2011 = vpack.c.b16 %v1555, %v1543
    %v2012 = vpack.c.b16 %v1556, %v1544
    %v2013 = vpack.c.b16 %v1557, %v1545
    %v2014 = vpack.c.b16 %v1558, %v1546
    %v2015 = vpack.c.b16 %v1559, %v1547
    %v2016 = vpack.c.b16 %v1560, %v1548
    %v2017 = vpack.c.b16 %v1561, %v1549
    %v2018 = vpack.c.b16 %v1562, %v1550
    %v2019 = vpack.c.b16 %v1563, %v1551
    %v2020 = vpack.c.b16 %v1576, %v1564
    %v2021 = vpack.c.b16 %v1577, %v1565
    %v2022 = vpack.c.b16 %v1578, %v1566
    %v2023 = vpack.c.b16 %v1579, %v1567
    %v2024 = vpack.c.b16 %v1580, %v1568
    %v2025 = vpack.c.b16 %v1581, %v1569
    %v2026 = vpack.c.b16 %v1582, %v1570
    %v2027 = vpack.c.b16 %v1583, %v1571
    %v2028 = vpack.c.b16 %v1584, %v1572
    %v2029 = vpack.c.b16 %v1585, %v1573
    %v2030 = vpack.c.b16 %v1586, %v1574
    %v2031 = vpack.c.b16 %v1587, %v1575
    %v2032 = vpack.c.b16 %v1600, %v1588
    %v2033 = vpack.c.b16 %v1601, %v1589
    %v2034 = vpack.c.b16 %v1602, %v1590
    %v2035 = vpack.c.b16 %v1603, %v1591
    %v2036 = vpack.c.b16 %v1604, %v1592
    %v2037 = vpack.c.b16 %v1605, %v1593
    %v2038 = vpack.c.b16 %v1606, %v1594
    %v2039 = vpack.c.b16 %v1607, %v1595
    %v2040 = vpack.c.b16 %v1608, %v1596
    %v2041 = vpack.c.b16 %v1609, %v1597
    %v2042 = vpack.c.b16 %v1610, %v1598
    %v2043 = vpack.c.b16 %v1611, %v1599
    %v2044 = vpack.c.b16 %v1624, %v1612
    %v2045 = vpack.c.b16 %v1625, %v1613
    %v2046 = vpack.c.b16 %v1626, %v1614
    %v2047 = vpack.c.b16 %v1627, %v1615
    %v2048 = vpack.c.b16 %v1628, %v1616
    %v2049 = vpack.c.b16 %v1629, %v1617
    %v2050 = vpack.c.b16 %v1630, %v1618
    %v2051 = vpack.c.b16 %v1631, %v1619
    %v2052 = vpack.c.b16 %v1632, %v1620
    %v2053 = vpack.c.b16 %v1633, %v1621
    %v2054 = vpack.c.b16 %v1634, %v1622
    %v2055 = vpack.c.b16 %v1635, %v1623
    %v2056 = vpack.c.b16 %v1648, %v1636
    %v2057 = vpack.c.b16 %v1649, %v1637
    %v2058 = vpack.c.b16 %v1650, %v1638
    %v2059 = vpack.c.b16 %v1651, %v1639
    %v2060 = vpack.c.b16 %v1652, %v1640
    %v2061 = vpack.c.b16 %v1653, %v1641
    %v2062 = vpack.c.b16 %v1654, %v1642
    %v2063 = vpack.c.b16 %v1655, %v1643
    %v2064 = vpack.c.b16 %v1656, %v1644
    %v2065 = vpack.c.b16 %v1657, %v1645
    %v2066 = vpack.c.b16 %v1658, %v1646
    %v2067 = vpack.c.b16 %v1659, %v1647
    %v2068 = vpack.c.b16 %v1672, %v1660
    %v2069 = vpack.c.b16 %v1673, %v1661
    %v2070 = vpack.c.b16 %v1674, %v1662
    %v2071 = vpack.c.b16 %v1675, %v1663
    %v2072 = vpack.c.b16 %v1676, %v1664
    %v2073 = vpack.c.b16 %v1677, %v1665
    %v2074 = vpack.c.b16 %v1678, %v1666
    %v2075 = vpack.c.b16 %v1679, %v1667
    %v2076 = vpack.c.b16 %v1680, %v1668
    %v2077 = vpack.c.b16 %v1681, %v1669
    %v2078 = vpack.c.b16 %v1682, %v1670
    %v2079 = vpack.c.b16 %v1683, %v1671
    %v2080 = vpack.c.b16 %v1696, %v1684
    %v2081 = vpack.c.b16 %v1697, %v1685
    %v2082 = vpack.c.b16 %v1698, %v1686
    %v2083 = vpack.c.b16 %v1699, %v1687
    %v2084 = vpack.c.b16 %v1700, %v1688
    %v2085 = vpack.c.b16 %v1701, %v1689
    %v2086 = vpack.c.b16 %v1702, %v1690
    %v2087 = vpack.c.b16 %v1703, %v1691
    %v2088 = vpack.c.b16 %v1704, %v1692
    %v2089 = vpack.c.b16 %v1705, %v1693
    %v2090 = vpack.c.b16 %v1706, %v1694
    %v2091 = vpack.c.b16 %v1707, %v1695
    %2476 = vmatpush.bf16.msra.mxu0 %v1792
    %2477 = vmatpush.bf16.msra.mxu0 %v1780
    %2478 = vmatpush.bf16.msra.mxu0 %v1768
    %2479 = vmatpush.bf16.msra.mxu0 %v1756
    %2480 = vmatpush.bf16.msra.mxu0 %v1744
    %2481 = vmatpush.bf16.msra.mxu0 %v1732
    %2482 = vmatpush.bf16.msra.mxu0 %v1720
    %2483 = vmatpush.bf16.msra.mxu0 %v1708
    %2484 = vmatmul.bf16.gmra.mxu0 %v540
    %v2485 = vpop.f32.mrf.mxu0
    %v2486 = vadd.f32 %v492, %v2485
    %v2487 = vpop.f32.mrf.mxu0
    %v2488 = vadd.f32 %v492, %v2487
    %2489 = vmatmul.bf16.gmra.mxu0 %v544
    %v2490 = vpop.f32.mrf.mxu0
    %v2491 = vadd.f32 %v492, %v2490
    %v2492 = vpop.f32.mrf.mxu0
    %v2493 = vadd.f32 %v492, %v2492
    %2494 = vdwg.mxu0
    %2495 = vmatpush.bf16.msra.mxu0 %v1888
    %2496 = vmatpush.bf16.msra.mxu0 %v1876
    %2497 = vmatpush.bf16.msra.mxu0 %v1864
    %2498 = vmatpush.bf16.msra.mxu0 %v1852
    %2499 = vmatpush.bf16.msra.mxu0 %v1840
    %2500 = vmatpush.bf16.msra.mxu0 %v1828
    %2501 = vmatpush.bf16.msra.mxu0 %v1816
    %2502 = vmatpush.bf16.msra.mxu0 %v1804
    %2503 = vmatmul.bf16.gmra.mxu0 %v541
    %v2504 = vpop.f32.mrf.mxu0
    %v2505 = vadd.f32 %v2486, %v2504
    %v2506 = vpop.f32.mrf.mxu0
    %v2507 = vadd.f32 %v2488, %v2506
    %2508 = vmatmul.bf16.gmra.mxu0 %v545
    %v2509 = vpop.f32.mrf.mxu0
    %v2510 = vadd.f32 %v2491, %v2509
    %v2511 = vpop.f32.mrf.mxu0
    %v2512 = vadd.f32 %v2493, %v2511
    %2513 = vdwg.mxu0
    %2514 = vmatpush.bf16.msra.mxu0 %v1984
    %2515 = vmatpush.bf16.msra.mxu0 %v1972
    %2516 = vmatpush.bf16.msra.mxu0 %v1960
    %2517 = vmatpush.bf16.msra.mxu0 %v1948
    %2518 = vmatpush.bf16.msra.mxu0 %v1936
    %2519 = vmatpush.bf16.msra.mxu0 %v1924
    %2520 = vmatpush.bf16.msra.mxu0 %v1912
    %2521 = vmatpush.bf16.msra.mxu0 %v1900
    %2522 = vmatmul.bf16.gmra.mxu0 %v542
    %v2523 = vpop.f32.mrf.mxu0
    %v2524 = vadd.f32 %v2505, %v2523
    %v2525 = vpop.f32.mrf.mxu0
    %v2526 = vadd.f32 %v2507, %v2525
    %2527 = vmatmul.bf16.gmra.mxu0 %v546
    %v2528 = vpop.f32.mrf.mxu0
    %v2529 = vadd.f32 %v2510, %v2528
    %v2530 = vpop.f32.mrf.mxu0
    %v2531 = vadd.f32 %v2512, %v2530
    %2532 = vdwg.mxu0
    %2533 = vmatpush.bf16.msra.mxu0 %v2080
    %2534 = vmatpush.bf16.msra.mxu0 %v2068
    %2535 = vmatpush.bf16.msra.mxu0 %v2056
    %2536 = vmatpush.bf16.msra.mxu0 %v2044
    %2537 = vmatpush.bf16.msra.mxu0 %v2032
    %2538 = vmatpush.bf16.msra.mxu0 %v2020
    %2539 = vmatpush.bf16.msra.mxu0 %v2008
    %2540 = vmatpush.bf16.msra.mxu0 %v1996
    %2541 = vmatmul.bf16.gmra.mxu0 %v543
    %v2542 = vpop.f32.mrf.mxu0
    %v2543 = vadd.f32 %v2524, %v2542
    %v2544 = vpop.f32.mrf.mxu0
    %v2545 = vadd.f32 %v2526, %v2544
    %2546 = vmatmul.bf16.gmra.mxu0 %v547
    %v2547 = vpop.f32.mrf.mxu0
    %v2548 = vadd.f32 %v2529, %v2547
    %v2549 = vpop.f32.mrf.mxu0
    %v2550 = vadd.f32 %v2531, %v2549
    %2551 = vdwg.mxu0
    %2552 = vmatpush.bf16.msra.mxu0 %v1793
    %2553 = vmatpush.bf16.msra.mxu0 %v1781
    %2554 = vmatpush.bf16.msra.mxu0 %v1769
    %2555 = vmatpush.bf16.msra.mxu0 %v1757
    %2556 = vmatpush.bf16.msra.mxu0 %v1745
    %2557 = vmatpush.bf16.msra.mxu0 %v1733
    %2558 = vmatpush.bf16.msra.mxu0 %v1721
    %2559 = vmatpush.bf16.msra.mxu0 %v1709
    %2560 = vmatmul.bf16.gmra.mxu0 %v540
    %v2561 = vpop.f32.mrf.mxu0
    %v2562 = vadd.f32 %v493, %v2561
    %v2563 = vpop.f32.mrf.mxu0
    %v2564 = vadd.f32 %v493, %v2563
    %2565 = vmatmul.bf16.gmra.mxu0 %v544
    %v2566 = vpop.f32.mrf.mxu0
    %v2567 = vadd.f32 %v493, %v2566
    %v2568 = vpop.f32.mrf.mxu0
    %v2569 = vadd.f32 %v493, %v2568
    %2570 = vdwg.mxu0
    %2571 = vmatpush.bf16.msra.mxu0 %v1889
    %2572 = vmatpush.bf16.msra.mxu0 %v1877
    %2573 = vmatpush.bf16.msra.mxu0 %v1865
    %2574 = vmatpush.bf16.msra.mxu0 %v1853
    %2575 = vmatpush.bf16.msra.mxu0 %v1841
    %2576 = vmatpush.bf16.msra.mxu0 %v1829
    %2577 = vmatpush.bf16.msra.mxu0 %v1817
    %2578 = vmatpush.bf16.msra.mxu0 %v1805
    %2579 = vmatmul.bf16.gmra.mxu0 %v541
    %v2580 = vpop.f32.mrf.mxu0
    %v2581 = vadd.f32 %v2562, %v2580
    %v2582 = vpop.f32.mrf.mxu0
    %v2583 = vadd.f32 %v2564, %v2582
    %2584 = vmatmul.bf16.gmra.mxu0 %v545
    %v2585 = vpop.f32.mrf.mxu0
    %v2586 = vadd.f32 %v2567, %v2585
    %v2587 = vpop.f32.mrf.mxu0
    %v2588 = vadd.f32 %v2569, %v2587
    %2589 = vdwg.mxu0
    %2590 = vmatpush.bf16.msra.mxu0 %v1985
    %2591 = vmatpush.bf16.msra.mxu0 %v1973
    %2592 = vmatpush.bf16.msra.mxu0 %v1961
    %2593 = vmatpush.bf16.msra.mxu0 %v1949
    %2594 = vmatpush.bf16.msra.mxu0 %v1937
    %2595 = vmatpush.bf16.msra.mxu0 %v1925
    %2596 = vmatpush.bf16.msra.mxu0 %v1913
    %2597 = vmatpush.bf16.msra.mxu0 %v1901
    %2598 = vmatmul.bf16.gmra.mxu0 %v542
    %v2599 = vpop.f32.mrf.mxu0
    %v2600 = vadd.f32 %v2581, %v2599
    %v2601 = vpop.f32.mrf.mxu0
    %v2602 = vadd.f32 %v2583, %v2601
    %2603 = vmatmul.bf16.gmra.mxu0 %v546
    %v2604 = vpop.f32.mrf.mxu0
    %v2605 = vadd.f32 %v2586, %v2604
    %v2606 = vpop.f32.mrf.mxu0
    %v2607 = vadd.f32 %v2588, %v2606
    %2608 = vdwg.mxu0
    %2609 = vmatpush.bf16.msra.mxu0 %v2081
    %2610 = vmatpush.bf16.msra.mxu0 %v2069
    %2611 = vmatpush.bf16.msra.mxu0 %v2057
    %2612 = vmatpush.bf16.msra.mxu0 %v2045
    %2613 = vmatpush.bf16.msra.mxu0 %v2033
    %2614 = vmatpush.bf16.msra.mxu0 %v2021
    %2615 = vmatpush.bf16.msra.mxu0 %v2009
    %2616 = vmatpush.bf16.msra.mxu0 %v1997
    %2617 = vmatmul.bf16.gmra.mxu0 %v543
    %v2618 = vpop.f32.mrf.mxu0
    %v2619 = vadd.f32 %v2600, %v2618
    %v2620 = vpop.f32.mrf.mxu0
    %v2621 = vadd.f32 %v2602, %v2620
    %2622 = vmatmul.bf16.gmra.mxu0 %v547
    %v2623 = vpop.f32.mrf.mxu0
    %v2624 = vadd.f32 %v2605, %v2623
    %v2625 = vpop.f32.mrf.mxu0
    %v2626 = vadd.f32 %v2607, %v2625
    %2627 = vdwg.mxu0
    %2628 = vmatpush.bf16.msra.mxu0 %v1794
    %2629 = vmatpush.bf16.msra.mxu0 %v1782
    %2630 = vmatpush.bf16.msra.mxu0 %v1770
    %2631 = vmatpush.bf16.msra.mxu0 %v1758
    %2632 = vmatpush.bf16.msra.mxu0 %v1746
    %2633 = vmatpush.bf16.msra.mxu0 %v1734
    %2634 = vmatpush.bf16.msra.mxu0 %v1722
    %2635 = vmatpush.bf16.msra.mxu0 %v1710
    %2636 = vmatmul.bf16.gmra.mxu0 %v540
    %v2637 = vpop.f32.mrf.mxu0
    %v2638 = vadd.f32 %v494, %v2637
    %v2639 = vpop.f32.mrf.mxu0
    %v2640 = vadd.f32 %v494, %v2639
    %2641 = vmatmul.bf16.gmra.mxu0 %v544
    %v2642 = vpop.f32.mrf.mxu0
    %v2643 = vadd.f32 %v494, %v2642
    %v2644 = vpop.f32.mrf.mxu0
    %v2645 = vadd.f32 %v494, %v2644
    %2646 = vdwg.mxu0
    %2647 = vmatpush.bf16.msra.mxu0 %v1890
    %2648 = vmatpush.bf16.msra.mxu0 %v1878
    %2649 = vmatpush.bf16.msra.mxu0 %v1866
    %2650 = vmatpush.bf16.msra.mxu0 %v1854
    %2651 = vmatpush.bf16.msra.mxu0 %v1842
    %2652 = vmatpush.bf16.msra.mxu0 %v1830
    %2653 = vmatpush.bf16.msra.mxu0 %v1818
    %2654 = vmatpush.bf16.msra.mxu0 %v1806
    %2655 = vmatmul.bf16.gmra.mxu0 %v541
    %v2656 = vpop.f32.mrf.mxu0
    %v2657 = vadd.f32 %v2638, %v2656
    %v2658 = vpop.f32.mrf.mxu0
    %v2659 = vadd.f32 %v2640, %v2658
    %2660 = vmatmul.bf16.gmra.mxu0 %v545
    %v2661 = vpop.f32.mrf.mxu0
    %v2662 = vadd.f32 %v2643, %v2661
    %v2663 = vpop.f32.mrf.mxu0
    %v2664 = vadd.f32 %v2645, %v2663
    %2665 = vdwg.mxu0
    %2666 = vmatpush.bf16.msra.mxu0 %v1986
    %2667 = vmatpush.bf16.msra.mxu0 %v1974
    %2668 = vmatpush.bf16.msra.mxu0 %v1962
    %2669 = vmatpush.bf16.msra.mxu0 %v1950
    %2670 = vmatpush.bf16.msra.mxu0 %v1938
    %2671 = vmatpush.bf16.msra.mxu0 %v1926
    %2672 = vmatpush.bf16.msra.mxu0 %v1914
    %2673 = vmatpush.bf16.msra.mxu0 %v1902
    %2674 = vmatmul.bf16.gmra.mxu0 %v542
    %v2675 = vpop.f32.mrf.mxu0
    %v2676 = vadd.f32 %v2657, %v2675
    %v2677 = vpop.f32.mrf.mxu0
    %v2678 = vadd.f32 %v2659, %v2677
    %2679 = vmatmul.bf16.gmra.mxu0 %v546
    %v2680 = vpop.f32.mrf.mxu0
    %v2681 = vadd.f32 %v2662, %v2680
    %v2682 = vpop.f32.mrf.mxu0
    %v2683 = vadd.f32 %v2664, %v2682
    %2684 = vdwg.mxu0
    %2685 = vmatpush.bf16.msra.mxu0 %v2082
    %2686 = vmatpush.bf16.msra.mxu0 %v2070
    %2687 = vmatpush.bf16.msra.mxu0 %v2058
    %2688 = vmatpush.bf16.msra.mxu0 %v2046
    %2689 = vmatpush.bf16.msra.mxu0 %v2034
    %2690 = vmatpush.bf16.msra.mxu0 %v2022
    %2691 = vmatpush.bf16.msra.mxu0 %v2010
    %2692 = vmatpush.bf16.msra.mxu0 %v1998
    %2693 = vmatmul.bf16.gmra.mxu0 %v543
    %v2694 = vpop.f32.mrf.mxu0
    %v2695 = vadd.f32 %v2676, %v2694
    %v2696 = vpop.f32.mrf.mxu0
    %v2697 = vadd.f32 %v2678, %v2696
    %2698 = vmatmul.bf16.gmra.mxu0 %v547
    %v2699 = vpop.f32.mrf.mxu0
    %v2700 = vadd.f32 %v2681, %v2699
    %v2701 = vpop.f32.mrf.mxu0
    %v2702 = vadd.f32 %v2683, %v2701
    %2703 = vdwg.mxu0
    %2704 = vmatpush.bf16.msra.mxu0 %v1795
    %2705 = vmatpush.bf16.msra.mxu0 %v1783
    %2706 = vmatpush.bf16.msra.mxu0 %v1771
    %2707 = vmatpush.bf16.msra.mxu0 %v1759
    %2708 = vmatpush.bf16.msra.mxu0 %v1747
    %2709 = vmatpush.bf16.msra.mxu0 %v1735
    %2710 = vmatpush.bf16.msra.mxu0 %v1723
    %2711 = vmatpush.bf16.msra.mxu0 %v1711
    %2712 = vmatmul.bf16.gmra.mxu0 %v540
    %v2713 = vpop.f32.mrf.mxu0
    %v2714 = vadd.f32 %v495, %v2713
    %v2715 = vpop.f32.mrf.mxu0
    %v2716 = vadd.f32 %v495, %v2715
    %2717 = vmatmul.bf16.gmra.mxu0 %v544
    %v2718 = vpop.f32.mrf.mxu0
    %v2719 = vadd.f32 %v495, %v2718
    %v2720 = vpop.f32.mrf.mxu0
    %v2721 = vadd.f32 %v495, %v2720
    %2722 = vdwg.mxu0
    %2723 = vmatpush.bf16.msra.mxu0 %v1891
    %2724 = vmatpush.bf16.msra.mxu0 %v1879
    %2725 = vmatpush.bf16.msra.mxu0 %v1867
    %2726 = vmatpush.bf16.msra.mxu0 %v1855
    %2727 = vmatpush.bf16.msra.mxu0 %v1843
    %2728 = vmatpush.bf16.msra.mxu0 %v1831
    %2729 = vmatpush.bf16.msra.mxu0 %v1819
    %2730 = vmatpush.bf16.msra.mxu0 %v1807
    %2731 = vmatmul.bf16.gmra.mxu0 %v541
    %v2732 = vpop.f32.mrf.mxu0
    %v2733 = vadd.f32 %v2714, %v2732
    %v2734 = vpop.f32.mrf.mxu0
    %v2735 = vadd.f32 %v2716, %v2734
    %2736 = vmatmul.bf16.gmra.mxu0 %v545
    %v2737 = vpop.f32.mrf.mxu0
    %v2738 = vadd.f32 %v2719, %v2737
    %v2739 = vpop.f32.mrf.mxu0
    %v2740 = vadd.f32 %v2721, %v2739
    %2741 = vdwg.mxu0
    %2742 = vmatpush.bf16.msra.mxu0 %v1987
    %2743 = vmatpush.bf16.msra.mxu0 %v1975
    %2744 = vmatpush.bf16.msra.mxu0 %v1963
    %2745 = vmatpush.bf16.msra.mxu0 %v1951
    %2746 = vmatpush.bf16.msra.mxu0 %v1939
    %2747 = vmatpush.bf16.msra.mxu0 %v1927
    %2748 = vmatpush.bf16.msra.mxu0 %v1915
    %2749 = vmatpush.bf16.msra.mxu0 %v1903
    %2750 = vmatmul.bf16.gmra.mxu0 %v542
    %v2751 = vpop.f32.mrf.mxu0
    %v2752 = vadd.f32 %v2733, %v2751
    %v2753 = vpop.f32.mrf.mxu0
    %v2754 = vadd.f32 %v2735, %v2753
    %2755 = vmatmul.bf16.gmra.mxu0 %v546
    %v2756 = vpop.f32.mrf.mxu0
    %v2757 = vadd.f32 %v2738, %v2756
    %v2758 = vpop.f32.mrf.mxu0
    %v2759 = vadd.f32 %v2740, %v2758
    %2760 = vdwg.mxu0
    %2761 = vmatpush.bf16.msra.mxu0 %v2083
    %2762 = vmatpush.bf16.msra.mxu0 %v2071
    %2763 = vmatpush.bf16.msra.mxu0 %v2059
    %2764 = vmatpush.bf16.msra.mxu0 %v2047
    %2765 = vmatpush.bf16.msra.mxu0 %v2035
    %2766 = vmatpush.bf16.msra.mxu0 %v2023
    %2767 = vmatpush.bf16.msra.mxu0 %v2011
    %2768 = vmatpush.bf16.msra.mxu0 %v1999
    %2769 = vmatmul.bf16.gmra.mxu0 %v543
    %v2770 = vpop.f32.mrf.mxu0
    %v2771 = vadd.f32 %v2752, %v2770
    %v2772 = vpop.f32.mrf.mxu0
    %v2773 = vadd.f32 %v2754, %v2772
    %2774 = vmatmul.bf16.gmra.mxu0 %v547
    %v2775 = vpop.f32.mrf.mxu0
    %v2776 = vadd.f32 %v2757, %v2775
    %v2777 = vpop.f32.mrf.mxu0
    %v2778 = vadd.f32 %v2759, %v2777
    %2779 = vdwg.mxu0
    %2780 = vmatpush.bf16.msra.mxu0 %v1796
    %2781 = vmatpush.bf16.msra.mxu0 %v1784
    %2782 = vmatpush.bf16.msra.mxu0 %v1772
    %2783 = vmatpush.bf16.msra.mxu0 %v1760
    %2784 = vmatpush.bf16.msra.mxu0 %v1748
    %2785 = vmatpush.bf16.msra.mxu0 %v1736
    %2786 = vmatpush.bf16.msra.mxu0 %v1724
    %2787 = vmatpush.bf16.msra.mxu0 %v1712
    %2788 = vmatmul.bf16.gmra.mxu0 %v540
    %v2789 = vpop.f32.mrf.mxu0
    %v2790 = vadd.f32 %v496, %v2789
    %v2791 = vpop.f32.mrf.mxu0
    %v2792 = vadd.f32 %v496, %v2791
    %2793 = vmatmul.bf16.gmra.mxu0 %v544
    %v2794 = vpop.f32.mrf.mxu0
    %v2795 = vadd.f32 %v496, %v2794
    %v2796 = vpop.f32.mrf.mxu0
    %v2797 = vadd.f32 %v496, %v2796
    %2798 = vdwg.mxu0
    %2799 = vmatpush.bf16.msra.mxu0 %v1892
    %2800 = vmatpush.bf16.msra.mxu0 %v1880
    %2801 = vmatpush.bf16.msra.mxu0 %v1868
    %2802 = vmatpush.bf16.msra.mxu0 %v1856
    %2803 = vmatpush.bf16.msra.mxu0 %v1844
    %2804 = vmatpush.bf16.msra.mxu0 %v1832
    %2805 = vmatpush.bf16.msra.mxu0 %v1820
    %2806 = vmatpush.bf16.msra.mxu0 %v1808
    %2807 = vmatmul.bf16.gmra.mxu0 %v541
    %v2808 = vpop.f32.mrf.mxu0
    %v2809 = vadd.f32 %v2790, %v2808
    %v2810 = vpop.f32.mrf.mxu0
    %v2811 = vadd.f32 %v2792, %v2810
    %2812 = vmatmul.bf16.gmra.mxu0 %v545
    %v2813 = vpop.f32.mrf.mxu0
    %v2814 = vadd.f32 %v2795, %v2813
    %v2815 = vpop.f32.mrf.mxu0
    %v2816 = vadd.f32 %v2797, %v2815
    %2817 = vdwg.mxu0
    %2818 = vmatpush.bf16.msra.mxu0 %v1988
    %2819 = vmatpush.bf16.msra.mxu0 %v1976
    %2820 = vmatpush.bf16.msra.mxu0 %v1964
    %2821 = vmatpush.bf16.msra.mxu0 %v1952
    %2822 = vmatpush.bf16.msra.mxu0 %v1940
    %2823 = vmatpush.bf16.msra.mxu0 %v1928
    %2824 = vmatpush.bf16.msra.mxu0 %v1916
    %2825 = vmatpush.bf16.msra.mxu0 %v1904
    %2826 = vmatmul.bf16.gmra.mxu0 %v542
    %v2827 = vpop.f32.mrf.mxu0
    %v2828 = vadd.f32 %v2809, %v2827
    %v2829 = vpop.f32.mrf.mxu0
    %v2830 = vadd.f32 %v2811, %v2829
    %2831 = vmatmul.bf16.gmra.mxu0 %v546
    %v2832 = vpop.f32.mrf.mxu0
    %v2833 = vadd.f32 %v2814, %v2832
    %v2834 = vpop.f32.mrf.mxu0
    %v2835 = vadd.f32 %v2816, %v2834
    %2836 = vdwg.mxu0
    %2837 = vmatpush.bf16.msra.mxu0 %v2084
    %2838 = vmatpush.bf16.msra.mxu0 %v2072
    %2839 = vmatpush.bf16.msra.mxu0 %v2060
    %2840 = vmatpush.bf16.msra.mxu0 %v2048
    %2841 = vmatpush.bf16.msra.mxu0 %v2036
    %2842 = vmatpush.bf16.msra.mxu0 %v2024
    %2843 = vmatpush.bf16.msra.mxu0 %v2012
    %2844 = vmatpush.bf16.msra.mxu0 %v2000
    %2845 = vmatmul.bf16.gmra.mxu0 %v543
    %v2846 = vpop.f32.mrf.mxu0
    %v2847 = vadd.f32 %v2828, %v2846
    %v2848 = vpop.f32.mrf.mxu0
    %v2849 = vadd.f32 %v2830, %v2848
    %2850 = vmatmul.bf16.gmra.mxu0 %v547
    %v2851 = vpop.f32.mrf.mxu0
    %v2852 = vadd.f32 %v2833, %v2851
    %v2853 = vpop.f32.mrf.mxu0
    %v2854 = vadd.f32 %v2835, %v2853
    %2855 = vdwg.mxu0
    %2856 = vmatpush.bf16.msra.mxu0 %v1797
    %2857 = vmatpush.bf16.msra.mxu0 %v1785
    %2858 = vmatpush.bf16.msra.mxu0 %v1773
    %2859 = vmatpush.bf16.msra.mxu0 %v1761
    %2860 = vmatpush.bf16.msra.mxu0 %v1749
    %2861 = vmatpush.bf16.msra.mxu0 %v1737
    %2862 = vmatpush.bf16.msra.mxu0 %v1725
    %2863 = vmatpush.bf16.msra.mxu0 %v1713
    %2864 = vmatmul.bf16.gmra.mxu0 %v540
    %v2865 = vpop.f32.mrf.mxu0
    %v2866 = vadd.f32 %v497, %v2865
    %v2867 = vpop.f32.mrf.mxu0
    %v2868 = vadd.f32 %v497, %v2867
    %2869 = vmatmul.bf16.gmra.mxu0 %v544
    %v2870 = vpop.f32.mrf.mxu0
    %v2871 = vadd.f32 %v497, %v2870
    %v2872 = vpop.f32.mrf.mxu0
    %v2873 = vadd.f32 %v497, %v2872
    %2874 = vdwg.mxu0
    %2875 = vmatpush.bf16.msra.mxu0 %v1893
    %2876 = vmatpush.bf16.msra.mxu0 %v1881
    %2877 = vmatpush.bf16.msra.mxu0 %v1869
    %2878 = vmatpush.bf16.msra.mxu0 %v1857
    %2879 = vmatpush.bf16.msra.mxu0 %v1845
    %2880 = vmatpush.bf16.msra.mxu0 %v1833
    %2881 = vmatpush.bf16.msra.mxu0 %v1821
    %2882 = vmatpush.bf16.msra.mxu0 %v1809
    %2883 = vmatmul.bf16.gmra.mxu0 %v541
    %v2884 = vpop.f32.mrf.mxu0
    %v2885 = vadd.f32 %v2866, %v2884
    %v2886 = vpop.f32.mrf.mxu0
    %v2887 = vadd.f32 %v2868, %v2886
    %2888 = vmatmul.bf16.gmra.mxu0 %v545
    %v2889 = vpop.f32.mrf.mxu0
    %v2890 = vadd.f32 %v2871, %v2889
    %v2891 = vpop.f32.mrf.mxu0
    %v2892 = vadd.f32 %v2873, %v2891
    %2893 = vdwg.mxu0
    %2894 = vmatpush.bf16.msra.mxu0 %v1989
    %2895 = vmatpush.bf16.msra.mxu0 %v1977
    %2896 = vmatpush.bf16.msra.mxu0 %v1965
    %2897 = vmatpush.bf16.msra.mxu0 %v1953
    %2898 = vmatpush.bf16.msra.mxu0 %v1941
    %2899 = vmatpush.bf16.msra.mxu0 %v1929
    %2900 = vmatpush.bf16.msra.mxu0 %v1917
    %2901 = vmatpush.bf16.msra.mxu0 %v1905
    %2902 = vmatmul.bf16.gmra.mxu0 %v542
    %v2903 = vpop.f32.mrf.mxu0
    %v2904 = vadd.f32 %v2885, %v2903
    %v2905 = vpop.f32.mrf.mxu0
    %v2906 = vadd.f32 %v2887, %v2905
    %2907 = vmatmul.bf16.gmra.mxu0 %v546
    %v2908 = vpop.f32.mrf.mxu0
    %v2909 = vadd.f32 %v2890, %v2908
    %v2910 = vpop.f32.mrf.mxu0
    %v2911 = vadd.f32 %v2892, %v2910
    %2912 = vdwg.mxu0
    %2913 = vmatpush.bf16.msra.mxu0 %v2085
    %2914 = vmatpush.bf16.msra.mxu0 %v2073
    %2915 = vmatpush.bf16.msra.mxu0 %v2061
    %2916 = vmatpush.bf16.msra.mxu0 %v2049
    %2917 = vmatpush.bf16.msra.mxu0 %v2037
    %2918 = vmatpush.bf16.msra.mxu0 %v2025
    %2919 = vmatpush.bf16.msra.mxu0 %v2013
    %2920 = vmatpush.bf16.msra.mxu0 %v2001
    %2921 = vmatmul.bf16.gmra.mxu0 %v543
    %v2922 = vpop.f32.mrf.mxu0
    %v2923 = vadd.f32 %v2904, %v2922
    %v2924 = vpop.f32.mrf.mxu0
    %v2925 = vadd.f32 %v2906, %v2924
    %2926 = vmatmul.bf16.gmra.mxu0 %v547
    %v2927 = vpop.f32.mrf.mxu0
    %v2928 = vadd.f32 %v2909, %v2927
    %v2929 = vpop.f32.mrf.mxu0
    %v2930 = vadd.f32 %v2911, %v2929
    %2931 = vdwg.mxu0
    %2932 = vmatpush.bf16.msra.mxu0 %v1798
    %2933 = vmatpush.bf16.msra.mxu0 %v1786
    %2934 = vmatpush.bf16.msra.mxu0 %v1774
    %2935 = vmatpush.bf16.msra.mxu0 %v1762
    %2936 = vmatpush.bf16.msra.mxu0 %v1750
    %2937 = vmatpush.bf16.msra.mxu0 %v1738
    %2938 = vmatpush.bf16.msra.mxu0 %v1726
    %2939 = vmatpush.bf16.msra.mxu0 %v1714
    %2940 = vmatmul.bf16.gmra.mxu0 %v540
    %v2941 = vpop.f32.mrf.mxu0
    %v2942 = vadd.f32 %v498, %v2941
    %v2943 = vpop.f32.mrf.mxu0
    %v2944 = vadd.f32 %v498, %v2943
    %2945 = vmatmul.bf16.gmra.mxu0 %v544
    %v2946 = vpop.f32.mrf.mxu0
    %v2947 = vadd.f32 %v498, %v2946
    %v2948 = vpop.f32.mrf.mxu0
    %v2949 = vadd.f32 %v498, %v2948
    %2950 = vdwg.mxu0
    %2951 = vmatpush.bf16.msra.mxu0 %v1894
    %2952 = vmatpush.bf16.msra.mxu0 %v1882
    %2953 = vmatpush.bf16.msra.mxu0 %v1870
    %2954 = vmatpush.bf16.msra.mxu0 %v1858
    %2955 = vmatpush.bf16.msra.mxu0 %v1846
    %2956 = vmatpush.bf16.msra.mxu0 %v1834
    %2957 = vmatpush.bf16.msra.mxu0 %v1822
    %2958 = vmatpush.bf16.msra.mxu0 %v1810
    %2959 = vmatmul.bf16.gmra.mxu0 %v541
    %v2960 = vpop.f32.mrf.mxu0
    %v2961 = vadd.f32 %v2942, %v2960
    %v2962 = vpop.f32.mrf.mxu0
    %v2963 = vadd.f32 %v2944, %v2962
    %2964 = vmatmul.bf16.gmra.mxu0 %v545
    %v2965 = vpop.f32.mrf.mxu0
    %v2966 = vadd.f32 %v2947, %v2965
    %v2967 = vpop.f32.mrf.mxu0
    %v2968 = vadd.f32 %v2949, %v2967
    %2969 = vdwg.mxu0
    %2970 = vmatpush.bf16.msra.mxu0 %v1990
    %2971 = vmatpush.bf16.msra.mxu0 %v1978
    %2972 = vmatpush.bf16.msra.mxu0 %v1966
    %2973 = vmatpush.bf16.msra.mxu0 %v1954
    %2974 = vmatpush.bf16.msra.mxu0 %v1942
    %2975 = vmatpush.bf16.msra.mxu0 %v1930
    %2976 = vmatpush.bf16.msra.mxu0 %v1918
    %2977 = vmatpush.bf16.msra.mxu0 %v1906
    %2978 = vmatmul.bf16.gmra.mxu0 %v542
    %v2979 = vpop.f32.mrf.mxu0
    %v2980 = vadd.f32 %v2961, %v2979
    %v2981 = vpop.f32.mrf.mxu0
    %v2982 = vadd.f32 %v2963, %v2981
    %2983 = vmatmul.bf16.gmra.mxu0 %v546
    %v2984 = vpop.f32.mrf.mxu0
    %v2985 = vadd.f32 %v2966, %v2984
    %v2986 = vpop.f32.mrf.mxu0
    %v2987 = vadd.f32 %v2968, %v2986
    %2988 = vdwg.mxu0
    %2989 = vmatpush.bf16.msra.mxu0 %v2086
    %2990 = vmatpush.bf16.msra.mxu0 %v2074
    %2991 = vmatpush.bf16.msra.mxu0 %v2062
    %2992 = vmatpush.bf16.msra.mxu0 %v2050
    %2993 = vmatpush.bf16.msra.mxu0 %v2038
    %2994 = vmatpush.bf16.msra.mxu0 %v2026
    %2995 = vmatpush.bf16.msra.mxu0 %v2014
    %2996 = vmatpush.bf16.msra.mxu0 %v2002
    %2997 = vmatmul.bf16.gmra.mxu0 %v543
    %v2998 = vpop.f32.mrf.mxu0
    %v2999 = vadd.f32 %v2980, %v2998
    %v3000 = vpop.f32.mrf.mxu0
    %v3001 = vadd.f32 %v2982, %v3000
    %3002 = vmatmul.bf16.gmra.mxu0 %v547
    %v3003 = vpop.f32.mrf.mxu0
    %v3004 = vadd.f32 %v2985, %v3003
    %v3005 = vpop.f32.mrf.mxu0
    %v3006 = vadd.f32 %v2987, %v3005
    %3007 = vdwg.mxu0
    %3008 = vmatpush.bf16.msra.mxu0 %v1799
    %3009 = vmatpush.bf16.msra.mxu0 %v1787
    %3010 = vmatpush.bf16.msra.mxu0 %v1775
    %3011 = vmatpush.bf16.msra.mxu0 %v1763
    %3012 = vmatpush.bf16.msra.mxu0 %v1751
    %3013 = vmatpush.bf16.msra.mxu0 %v1739
    %3014 = vmatpush.bf16.msra.mxu0 %v1727
    %3015 = vmatpush.bf16.msra.mxu0 %v1715
    %3016 = vmatmul.bf16.gmra.mxu0 %v540
    %v3017 = vpop.f32.mrf.mxu0
    %v3018 = vadd.f32 %v499, %v3017
    %v3019 = vpop.f32.mrf.mxu0
    %v3020 = vadd.f32 %v499, %v3019
    %3021 = vmatmul.bf16.gmra.mxu0 %v544
    %v3022 = vpop.f32.mrf.mxu0
    %v3023 = vadd.f32 %v499, %v3022
    %v3024 = vpop.f32.mrf.mxu0
    %v3025 = vadd.f32 %v499, %v3024
    %3026 = vdwg.mxu0
    %3027 = vmatpush.bf16.msra.mxu0 %v1895
    %3028 = vmatpush.bf16.msra.mxu0 %v1883
    %3029 = vmatpush.bf16.msra.mxu0 %v1871
    %3030 = vmatpush.bf16.msra.mxu0 %v1859
    %3031 = vmatpush.bf16.msra.mxu0 %v1847
    %3032 = vmatpush.bf16.msra.mxu0 %v1835
    %3033 = vmatpush.bf16.msra.mxu0 %v1823
    %3034 = vmatpush.bf16.msra.mxu0 %v1811
    %3035 = vmatmul.bf16.gmra.mxu0 %v541
    %v3036 = vpop.f32.mrf.mxu0
    %v3037 = vadd.f32 %v3018, %v3036
    %v3038 = vpop.f32.mrf.mxu0
    %v3039 = vadd.f32 %v3020, %v3038
    %3040 = vmatmul.bf16.gmra.mxu0 %v545
    %v3041 = vpop.f32.mrf.mxu0
    %v3042 = vadd.f32 %v3023, %v3041
    %v3043 = vpop.f32.mrf.mxu0
    %v3044 = vadd.f32 %v3025, %v3043
    %3045 = vdwg.mxu0
    %3046 = vmatpush.bf16.msra.mxu0 %v1991
    %3047 = vmatpush.bf16.msra.mxu0 %v1979
    %3048 = vmatpush.bf16.msra.mxu0 %v1967
    %3049 = vmatpush.bf16.msra.mxu0 %v1955
    %3050 = vmatpush.bf16.msra.mxu0 %v1943
    %3051 = vmatpush.bf16.msra.mxu0 %v1931
    %3052 = vmatpush.bf16.msra.mxu0 %v1919
    %3053 = vmatpush.bf16.msra.mxu0 %v1907
    %3054 = vmatmul.bf16.gmra.mxu0 %v542
    %v3055 = vpop.f32.mrf.mxu0
    %v3056 = vadd.f32 %v3037, %v3055
    %v3057 = vpop.f32.mrf.mxu0
    %v3058 = vadd.f32 %v3039, %v3057
    %3059 = vmatmul.bf16.gmra.mxu0 %v546
    %v3060 = vpop.f32.mrf.mxu0
    %v3061 = vadd.f32 %v3042, %v3060
    %v3062 = vpop.f32.mrf.mxu0
    %v3063 = vadd.f32 %v3044, %v3062
    %3064 = vdwg.mxu0
    %3065 = vmatpush.bf16.msra.mxu0 %v2087
    %3066 = vmatpush.bf16.msra.mxu0 %v2075
    %3067 = vmatpush.bf16.msra.mxu0 %v2063
    %3068 = vmatpush.bf16.msra.mxu0 %v2051
    %3069 = vmatpush.bf16.msra.mxu0 %v2039
    %3070 = vmatpush.bf16.msra.mxu0 %v2027
    %3071 = vmatpush.bf16.msra.mxu0 %v2015
    %3072 = vmatpush.bf16.msra.mxu0 %v2003
    %3073 = vmatmul.bf16.gmra.mxu0 %v543
    %v3074 = vpop.f32.mrf.mxu0
    %v3075 = vadd.f32 %v3056, %v3074
    %v3076 = vpop.f32.mrf.mxu0
    %v3077 = vadd.f32 %v3058, %v3076
    %3078 = vmatmul.bf16.gmra.mxu0 %v547
    %v3079 = vpop.f32.mrf.mxu0
    %v3080 = vadd.f32 %v3061, %v3079
    %v3081 = vpop.f32.mrf.mxu0
    %v3082 = vadd.f32 %v3063, %v3081
    %3083 = vdwg.mxu0
    %3084 = vmatpush.bf16.msra.mxu0 %v1800
    %3085 = vmatpush.bf16.msra.mxu0 %v1788
    %3086 = vmatpush.bf16.msra.mxu0 %v1776
    %3087 = vmatpush.bf16.msra.mxu0 %v1764
    %3088 = vmatpush.bf16.msra.mxu0 %v1752
    %3089 = vmatpush.bf16.msra.mxu0 %v1740
    %3090 = vmatpush.bf16.msra.mxu0 %v1728
    %3091 = vmatpush.bf16.msra.mxu0 %v1716
    %3092 = vmatmul.bf16.gmra.mxu0 %v540
    %v3093 = vpop.f32.mrf.mxu0
    %v3094 = vadd.f32 %v500, %v3093
    %v3095 = vpop.f32.mrf.mxu0
    %v3096 = vadd.f32 %v500, %v3095
    %3097 = vmatmul.bf16.gmra.mxu0 %v544
    %v3098 = vpop.f32.mrf.mxu0
    %v3099 = vadd.f32 %v500, %v3098
    %v3100 = vpop.f32.mrf.mxu0
    %v3101 = vadd.f32 %v500, %v3100
    %3102 = vdwg.mxu0
    %3103 = vmatpush.bf16.msra.mxu0 %v1896
    %3104 = vmatpush.bf16.msra.mxu0 %v1884
    %3105 = vmatpush.bf16.msra.mxu0 %v1872
    %3106 = vmatpush.bf16.msra.mxu0 %v1860
    %3107 = vmatpush.bf16.msra.mxu0 %v1848
    %3108 = vmatpush.bf16.msra.mxu0 %v1836
    %3109 = vmatpush.bf16.msra.mxu0 %v1824
    %3110 = vmatpush.bf16.msra.mxu0 %v1812
    %3111 = vmatmul.bf16.gmra.mxu0 %v541
    %v3112 = vpop.f32.mrf.mxu0
    %v3113 = vadd.f32 %v3094, %v3112
    %v3114 = vpop.f32.mrf.mxu0
    %v3115 = vadd.f32 %v3096, %v3114
    %3116 = vmatmul.bf16.gmra.mxu0 %v545
    %v3117 = vpop.f32.mrf.mxu0
    %v3118 = vadd.f32 %v3099, %v3117
    %v3119 = vpop.f32.mrf.mxu0
    %v3120 = vadd.f32 %v3101, %v3119
    %3121 = vdwg.mxu0
    %3122 = vmatpush.bf16.msra.mxu0 %v1992
    %3123 = vmatpush.bf16.msra.mxu0 %v1980
    %3124 = vmatpush.bf16.msra.mxu0 %v1968
    %3125 = vmatpush.bf16.msra.mxu0 %v1956
    %3126 = vmatpush.bf16.msra.mxu0 %v1944
    %3127 = vmatpush.bf16.msra.mxu0 %v1932
    %3128 = vmatpush.bf16.msra.mxu0 %v1920
    %3129 = vmatpush.bf16.msra.mxu0 %v1908
    %3130 = vmatmul.bf16.gmra.mxu0 %v542
    %v3131 = vpop.f32.mrf.mxu0
    %v3132 = vadd.f32 %v3113, %v3131
    %v3133 = vpop.f32.mrf.mxu0
    %v3134 = vadd.f32 %v3115, %v3133
    %3135 = vmatmul.bf16.gmra.mxu0 %v546
    %v3136 = vpop.f32.mrf.mxu0
    %v3137 = vadd.f32 %v3118, %v3136
    %v3138 = vpop.f32.mrf.mxu0
    %v3139 = vadd.f32 %v3120, %v3138
    %3140 = vdwg.mxu0
    %3141 = vmatpush.bf16.msra.mxu0 %v2088
    %3142 = vmatpush.bf16.msra.mxu0 %v2076
    %3143 = vmatpush.bf16.msra.mxu0 %v2064
    %3144 = vmatpush.bf16.msra.mxu0 %v2052
    %3145 = vmatpush.bf16.msra.mxu0 %v2040
    %3146 = vmatpush.bf16.msra.mxu0 %v2028
    %3147 = vmatpush.bf16.msra.mxu0 %v2016
    %3148 = vmatpush.bf16.msra.mxu0 %v2004
    %3149 = vmatmul.bf16.gmra.mxu0 %v543
    %v3150 = vpop.f32.mrf.mxu0
    %v3151 = vadd.f32 %v3132, %v3150
    %v3152 = vpop.f32.mrf.mxu0
    %v3153 = vadd.f32 %v3134, %v3152
    %3154 = vmatmul.bf16.gmra.mxu0 %v547
    %v3155 = vpop.f32.mrf.mxu0
    %v3156 = vadd.f32 %v3137, %v3155
    %v3157 = vpop.f32.mrf.mxu0
    %v3158 = vadd.f32 %v3139, %v3157
    %3159 = vdwg.mxu0
    %3160 = vmatpush.bf16.msra.mxu0 %v1801
    %3161 = vmatpush.bf16.msra.mxu0 %v1789
    %3162 = vmatpush.bf16.msra.mxu0 %v1777
    %3163 = vmatpush.bf16.msra.mxu0 %v1765
    %3164 = vmatpush.bf16.msra.mxu0 %v1753
    %3165 = vmatpush.bf16.msra.mxu0 %v1741
    %3166 = vmatpush.bf16.msra.mxu0 %v1729
    %3167 = vmatpush.bf16.msra.mxu0 %v1717
    %3168 = vmatmul.bf16.gmra.mxu0 %v540
    %v3169 = vpop.f32.mrf.mxu0
    %v3170 = vadd.f32 %v501, %v3169
    %v3171 = vpop.f32.mrf.mxu0
    %v3172 = vadd.f32 %v501, %v3171
    %3173 = vmatmul.bf16.gmra.mxu0 %v544
    %v3174 = vpop.f32.mrf.mxu0
    %v3175 = vadd.f32 %v501, %v3174
    %v3176 = vpop.f32.mrf.mxu0
    %v3177 = vadd.f32 %v501, %v3176
    %3178 = vdwg.mxu0
    %3179 = vmatpush.bf16.msra.mxu0 %v1897
    %3180 = vmatpush.bf16.msra.mxu0 %v1885
    %3181 = vmatpush.bf16.msra.mxu0 %v1873
    %3182 = vmatpush.bf16.msra.mxu0 %v1861
    %3183 = vmatpush.bf16.msra.mxu0 %v1849
    %3184 = vmatpush.bf16.msra.mxu0 %v1837
    %3185 = vmatpush.bf16.msra.mxu0 %v1825
    %3186 = vmatpush.bf16.msra.mxu0 %v1813
    %3187 = vmatmul.bf16.gmra.mxu0 %v541
    %v3188 = vpop.f32.mrf.mxu0
    %v3189 = vadd.f32 %v3170, %v3188
    %v3190 = vpop.f32.mrf.mxu0
    %v3191 = vadd.f32 %v3172, %v3190
    %3192 = vmatmul.bf16.gmra.mxu0 %v545
    %v3193 = vpop.f32.mrf.mxu0
    %v3194 = vadd.f32 %v3175, %v3193
    %v3195 = vpop.f32.mrf.mxu0
    %v3196 = vadd.f32 %v3177, %v3195
    %3197 = vdwg.mxu0
    %3198 = vmatpush.bf16.msra.mxu0 %v1993
    %3199 = vmatpush.bf16.msra.mxu0 %v1981
    %3200 = vmatpush.bf16.msra.mxu0 %v1969
    %3201 = vmatpush.bf16.msra.mxu0 %v1957
    %3202 = vmatpush.bf16.msra.mxu0 %v1945
    %3203 = vmatpush.bf16.msra.mxu0 %v1933
    %3204 = vmatpush.bf16.msra.mxu0 %v1921
    %3205 = vmatpush.bf16.msra.mxu0 %v1909
    %3206 = vmatmul.bf16.gmra.mxu0 %v542
    %v3207 = vpop.f32.mrf.mxu0
    %v3208 = vadd.f32 %v3189, %v3207
    %v3209 = vpop.f32.mrf.mxu0
    %v3210 = vadd.f32 %v3191, %v3209
    %3211 = vmatmul.bf16.gmra.mxu0 %v546
    %v3212 = vpop.f32.mrf.mxu0
    %v3213 = vadd.f32 %v3194, %v3212
    %v3214 = vpop.f32.mrf.mxu0
    %v3215 = vadd.f32 %v3196, %v3214
    %3216 = vdwg.mxu0
    %3217 = vmatpush.bf16.msra.mxu0 %v2089
    %3218 = vmatpush.bf16.msra.mxu0 %v2077
    %3219 = vmatpush.bf16.msra.mxu0 %v2065
    %3220 = vmatpush.bf16.msra.mxu0 %v2053
    %3221 = vmatpush.bf16.msra.mxu0 %v2041
    %3222 = vmatpush.bf16.msra.mxu0 %v2029
    %3223 = vmatpush.bf16.msra.mxu0 %v2017
    %3224 = vmatpush.bf16.msra.mxu0 %v2005
    %3225 = vmatmul.bf16.gmra.mxu0 %v543
    %v3226 = vpop.f32.mrf.mxu0
    %v3227 = vadd.f32 %v3208, %v3226
    %v3228 = vpop.f32.mrf.mxu0
    %v3229 = vadd.f32 %v3210, %v3228
    %3230 = vmatmul.bf16.gmra.mxu0 %v547
    %v3231 = vpop.f32.mrf.mxu0
    %v3232 = vadd.f32 %v3213, %v3231
    %v3233 = vpop.f32.mrf.mxu0
    %v3234 = vadd.f32 %v3215, %v3233
    %3235 = vdwg.mxu0
    %3236 = vmatpush.bf16.msra.mxu0 %v1802
    %3237 = vmatpush.bf16.msra.mxu0 %v1790
    %3238 = vmatpush.bf16.msra.mxu0 %v1778
    %3239 = vmatpush.bf16.msra.mxu0 %v1766
    %3240 = vmatpush.bf16.msra.mxu0 %v1754
    %3241 = vmatpush.bf16.msra.mxu0 %v1742
    %3242 = vmatpush.bf16.msra.mxu0 %v1730
    %3243 = vmatpush.bf16.msra.mxu0 %v1718
    %3244 = vmatmul.bf16.gmra.mxu0 %v540
    %v3245 = vpop.f32.mrf.mxu0
    %v3246 = vadd.f32 %v502, %v3245
    %v3247 = vpop.f32.mrf.mxu0
    %v3248 = vadd.f32 %v502, %v3247
    %3249 = vmatmul.bf16.gmra.mxu0 %v544
    %v3250 = vpop.f32.mrf.mxu0
    %v3251 = vadd.f32 %v502, %v3250
    %v3252 = vpop.f32.mrf.mxu0
    %v3253 = vadd.f32 %v502, %v3252
    %3254 = vdwg.mxu0
    %3255 = vmatpush.bf16.msra.mxu0 %v1898
    %3256 = vmatpush.bf16.msra.mxu0 %v1886
    %3257 = vmatpush.bf16.msra.mxu0 %v1874
    %3258 = vmatpush.bf16.msra.mxu0 %v1862
    %3259 = vmatpush.bf16.msra.mxu0 %v1850
    %3260 = vmatpush.bf16.msra.mxu0 %v1838
    %3261 = vmatpush.bf16.msra.mxu0 %v1826
    %3262 = vmatpush.bf16.msra.mxu0 %v1814
    %3263 = vmatmul.bf16.gmra.mxu0 %v541
    %v3264 = vpop.f32.mrf.mxu0
    %v3265 = vadd.f32 %v3246, %v3264
    %v3266 = vpop.f32.mrf.mxu0
    %v3267 = vadd.f32 %v3248, %v3266
    %3268 = vmatmul.bf16.gmra.mxu0 %v545
    %v3269 = vpop.f32.mrf.mxu0
    %v3270 = vadd.f32 %v3251, %v3269
    %v3271 = vpop.f32.mrf.mxu0
    %v3272 = vadd.f32 %v3253, %v3271
    %3273 = vdwg.mxu0
    %3274 = vmatpush.bf16.msra.mxu0 %v1994
    %3275 = vmatpush.bf16.msra.mxu0 %v1982
    %3276 = vmatpush.bf16.msra.mxu0 %v1970
    %3277 = vmatpush.bf16.msra.mxu0 %v1958
    %3278 = vmatpush.bf16.msra.mxu0 %v1946
    %3279 = vmatpush.bf16.msra.mxu0 %v1934
    %3280 = vmatpush.bf16.msra.mxu0 %v1922
    %3281 = vmatpush.bf16.msra.mxu0 %v1910
    %3282 = vmatmul.bf16.gmra.mxu0 %v542
    %v3283 = vpop.f32.mrf.mxu0
    %v3284 = vadd.f32 %v3265, %v3283
    %v3285 = vpop.f32.mrf.mxu0
    %v3286 = vadd.f32 %v3267, %v3285
    %3287 = vmatmul.bf16.gmra.mxu0 %v546
    %v3288 = vpop.f32.mrf.mxu0
    %v3289 = vadd.f32 %v3270, %v3288
    %v3290 = vpop.f32.mrf.mxu0
    %v3291 = vadd.f32 %v3272, %v3290
    %3292 = vdwg.mxu0
    %3293 = vmatpush.bf16.msra.mxu0 %v2090
    %3294 = vmatpush.bf16.msra.mxu0 %v2078
    %3295 = vmatpush.bf16.msra.mxu0 %v2066
    %3296 = vmatpush.bf16.msra.mxu0 %v2054
    %3297 = vmatpush.bf16.msra.mxu0 %v2042
    %3298 = vmatpush.bf16.msra.mxu0 %v2030
    %3299 = vmatpush.bf16.msra.mxu0 %v2018
    %3300 = vmatpush.bf16.msra.mxu0 %v2006
    %3301 = vmatmul.bf16.gmra.mxu0 %v543
    %v3302 = vpop.f32.mrf.mxu0
    %v3303 = vadd.f32 %v3284, %v3302
    %v3304 = vpop.f32.mrf.mxu0
    %v3305 = vadd.f32 %v3286, %v3304
    %3306 = vmatmul.bf16.gmra.mxu0 %v547
    %v3307 = vpop.f32.mrf.mxu0
    %v3308 = vadd.f32 %v3289, %v3307
    %v3309 = vpop.f32.mrf.mxu0
    %v3310 = vadd.f32 %v3291, %v3309
    %3311 = vdwg.mxu0
    %3312 = vmatpush.bf16.msra.mxu0 %v1803
    %3313 = vmatpush.bf16.msra.mxu0 %v1791
    %3314 = vmatpush.bf16.msra.mxu0 %v1779
    %3315 = vmatpush.bf16.msra.mxu0 %v1767
    %3316 = vmatpush.bf16.msra.mxu0 %v1755
    %3317 = vmatpush.bf16.msra.mxu0 %v1743
    %3318 = vmatpush.bf16.msra.mxu0 %v1731
    %3319 = vmatpush.bf16.msra.mxu0 %v1719
    %3320 = vmatmul.bf16.gmra.mxu0 %v540
    %v3321 = vpop.f32.mrf.mxu0
    %v3322 = vadd.f32 %v503, %v3321
    %v3323 = vpop.f32.mrf.mxu0
    %v3324 = vadd.f32 %v503, %v3323
    %3325 = vmatmul.bf16.gmra.mxu0 %v544
    %v3326 = vpop.f32.mrf.mxu0
    %v3327 = vadd.f32 %v503, %v3326
    %v3328 = vpop.f32.mrf.mxu0
    %v3329 = vadd.f32 %v503, %v3328
    %3330 = vdwg.mxu0
    %3331 = vmatpush.bf16.msra.mxu0 %v1899
    %3332 = vmatpush.bf16.msra.mxu0 %v1887
    %3333 = vmatpush.bf16.msra.mxu0 %v1875
    %3334 = vmatpush.bf16.msra.mxu0 %v1863
    %3335 = vmatpush.bf16.msra.mxu0 %v1851
    %3336 = vmatpush.bf16.msra.mxu0 %v1839
    %3337 = vmatpush.bf16.msra.mxu0 %v1827
    %3338 = vmatpush.bf16.msra.mxu0 %v1815
    %3339 = vmatmul.bf16.gmra.mxu0 %v541
    %v3340 = vpop.f32.mrf.mxu0
    %v3341 = vadd.f32 %v3322, %v3340
    %v3342 = vpop.f32.mrf.mxu0
    %v3343 = vadd.f32 %v3324, %v3342
    %3344 = vmatmul.bf16.gmra.mxu0 %v545
    %v3345 = vpop.f32.mrf.mxu0
    %v3346 = vadd.f32 %v3327, %v3345
    %v3347 = vpop.f32.mrf.mxu0
    %v3348 = vadd.f32 %v3329, %v3347
    %3349 = vdwg.mxu0
    %3350 = vmatpush.bf16.msra.mxu0 %v1995
    %3351 = vmatpush.bf16.msra.mxu0 %v1983
    %3352 = vmatpush.bf16.msra.mxu0 %v1971
    %3353 = vmatpush.bf16.msra.mxu0 %v1959
    %3354 = vmatpush.bf16.msra.mxu0 %v1947
    %3355 = vmatpush.bf16.msra.mxu0 %v1935
    %3356 = vmatpush.bf16.msra.mxu0 %v1923
    %3357 = vmatpush.bf16.msra.mxu0 %v1911
    %3358 = vmatmul.bf16.gmra.mxu0 %v542
    %v3359 = vpop.f32.mrf.mxu0
    %v3360 = vadd.f32 %v3341, %v3359
    %v3361 = vpop.f32.mrf.mxu0
    %v3362 = vadd.f32 %v3343, %v3361
    %3363 = vmatmul.bf16.gmra.mxu0 %v546
    %v3364 = vpop.f32.mrf.mxu0
    %v3365 = vadd.f32 %v3346, %v3364
    %v3366 = vpop.f32.mrf.mxu0
    %v3367 = vadd.f32 %v3348, %v3366
    %3368 = vdwg.mxu0
    %3369 = vmatpush.bf16.msra.mxu0 %v2091
    %3370 = vmatpush.bf16.msra.mxu0 %v2079
    %3371 = vmatpush.bf16.msra.mxu0 %v2067
    %3372 = vmatpush.bf16.msra.mxu0 %v2055
    %3373 = vmatpush.bf16.msra.mxu0 %v2043
    %3374 = vmatpush.bf16.msra.mxu0 %v2031
    %3375 = vmatpush.bf16.msra.mxu0 %v2019
    %3376 = vmatpush.bf16.msra.mxu0 %v2007
    %3377 = vmatmul.bf16.gmra.mxu0 %v543
    %v3378 = vpop.f32.mrf.mxu0
    %v3379 = vadd.f32 %v3360, %v3378
    %v3380 = vpop.f32.mrf.mxu0
    %v3381 = vadd.f32 %v3362, %v3380
    %3382 = vmatmul.bf16.gmra.mxu0 %v547
    %v3383 = vpop.f32.mrf.mxu0
    %v3384 = vadd.f32 %v3365, %v3383
    %v3385 = vpop.f32.mrf.mxu0
    %v3386 = vadd.f32 %v3367, %v3385
    %3387 = vdwg.mxu0
    %v3388 = vpack.c.bf16 %v2619, %v2543
    %v3389 = vpack.c.bf16 %v2771, %v2695
    %v3390 = vpack.c.bf16 %v2923, %v2847
    %v3391 = vpack.c.bf16 %v3075, %v2999
    %v3392 = vpack.c.bf16 %v3227, %v3151
    %v3393 = vpack.c.bf16 %v3379, %v3303
    %v3394 = vpack.c.bf16 %v2621, %v2545
    %v3395 = vpack.c.bf16 %v2773, %v2697
    %v3396 = vpack.c.bf16 %v2925, %v2849
    %v3397 = vpack.c.bf16 %v3077, %v3001
    %v3398 = vpack.c.bf16 %v3229, %v3153
    %v3399 = vpack.c.bf16 %v3381, %v3305
    %v3400 = vpack.c.bf16 %v2624, %v2548
    %v3401 = vpack.c.bf16 %v2776, %v2700
    %v3402 = vpack.c.bf16 %v2928, %v2852
    %v3403 = vpack.c.bf16 %v3080, %v3004
    %v3404 = vpack.c.bf16 %v3232, %v3156
    %v3405 = vpack.c.bf16 %v3384, %v3308
    %v3406 = vpack.c.bf16 %v2626, %v2550
    %v3407 = vpack.c.bf16 %v2778, %v2702
    %v3408 = vpack.c.bf16 %v2930, %v2854
    %v3409 = vpack.c.bf16 %v3082, %v3006
    %v3410 = vpack.c.bf16 %v3234, %v3158
    %v3411 = vpack.c.bf16 %v3386, %v3310
    %3412 = vst [vmem:[#allocation2] sm:$0xff] %v3388
    %3413 = vst [vmem:[#allocation2 + $0x8] sm:$0xff] %v3389
    %3414 = vst [vmem:[#allocation2 + $0x10] sm:$0xff] %v3390
    %3415 = vst [vmem:[#allocation2 + $0x18] sm:$0xff] %v3391
    %3416 = vst [vmem:[#allocation2 + $0x20] sm:$0xff] %v3392
    %3417 = vst [vmem:[#allocation2 + $0x28] sm:$0xff] %v3393
    %3418 = vst [vmem:[#allocation2 + $0x30] sm:$0xff] %v3394
    %3419 = vst [vmem:[#allocation2 + $0x38] sm:$0xff] %v3395
    %3420 = vst [vmem:[#allocation2 + $0x40] sm:$0xff] %v3396
    %3421 = vst [vmem:[#allocation2 + $0x48] sm:$0xff] %v3397
    %3422 = vst [vmem:[#allocation2 + $0x50] sm:$0xff] %v3398
    %3423 = vst [vmem:[#allocation2 + $0x58] sm:$0xff] %v3399
    %3424 = vst [vmem:[#allocation2 + $0x60] sm:$0xff] %v3400
    %3425 = vst [vmem:[#allocation2 + $0x68] sm:$0xff] %v3401
    %3426 = vst [vmem:[#allocation2 + $0x70] sm:$0xff] %v3402
    %3427 = vst [vmem:[#allocation2 + $0x78] sm:$0xff] %v3403
    %3428 = vst [vmem:[#allocation2 + $0x80] sm:$0xff] %v3404
    %3429 = vst [vmem:[#allocation2 + $0x88] sm:$0xff] %v3405
    %3430 = vst [vmem:[#allocation2 + $0x90] sm:$0xff] %v3406
    %3431 = vst [vmem:[#allocation2 + $0x98] sm:$0xff] %v3407
    %3432 = vst [vmem:[#allocation2 + $0xa0] sm:$0xff] %v3408
    %3433 = vst [vmem:[#allocation2 + $0xa8] sm:$0xff] %v3409
    %3434 = vst [vmem:[#allocation2 + $0xb0] sm:$0xff] %v3410
    %3435 = vst [vmem:[#allocation2 + $0xb8] sm:$0xff] %v3411
    %v3436 = vld [vmem:[#allocation2] sm:$0xf]
    %v3437 = vld [vmem:[#allocation2 + $0x30] sm:$0xf]
    %v3438 = vld [vmem:[#allocation2 + $0x60] sm:$0xf]
    %v3439 = vld [vmem:[#allocation2 + $0x90] sm:$0xf]
    %v3440 = vld [vmem:[#allocation2 + $0x10] sm:$0xf]
    %v3441 = vld [vmem:[#allocation2 + $0x40] sm:$0xf]
    %v3442 = vld [vmem:[#allocation2 + $0x70] sm:$0xf]
    %v3443 = vld [vmem:[#allocation2 + $0xa0] sm:$0xf]
    %v3444 = vld [vmem:[#allocation2 + $0x20] sm:$0xf]
    %v3445 = vld [vmem:[#allocation2 + $0x50] sm:$0xf]
    %v3446 = vld [vmem:[#allocation2 + $0x80] sm:$0xf]
    %v3447 = vld [vmem:[#allocation2 + $0xb0] sm:$0xf]
    %v3450 = vunpack.c.l.b16 %v3436
    %v3451 = vunpack.c.l.b16 %v3437
    %v3452 = vpack.c.b16 %v3451, %v3450
    %v3455 = vunpack.c.l.b16 %v3440
    %v3456 = vunpack.c.l.b16 %v3441
    %v3457 = vpack.c.b16 %v3456, %v3455
    %vm3458 = vcmask 523264
    %v3460 = vsel %vm3458, %v3452, 0
    %v3463 = vsel %vm3458, %v3457, 0
    %3465 = vmatpush.bf16.xpose.msra.mxu0 0
    %3466 = vmatpush.bf16.xpose.msra.mxu0 0
    %3467 = vmatpush.bf16.xpose.msra.mxu0 0
    %3468 = vmatpush.bf16.xpose.msra.mxu0 0
    %3469 = vmatpush.bf16.xpose.msra.mxu0 0
    %3470 = vmatpush.bf16.xpose.msra.mxu0 0
    %3471 = vmatpush.bf16.xpose.msra.mxu0 0
    %3472 = vmatpush.bf16.xpose.msra.mxu0 %v3463
    %3473 = vmatmul.bf16.gmra.mxu0 %v3460
    %v3474 = vpop.f32.mrf.mxu0
    %v3475 = vadd.f32 0.0, %v3474
    %v3476 = vpop.f32.mrf.mxu0
    %v3477 = vadd.f32 0.0, %v3476
    %3478 = vdwg.mxu0
    %v3481 = vunpack.c.l.b16 %v3438
    %v3482 = vunpack.c.l.b16 %v3439
    %v3483 = vpack.c.b16 %v3482, %v3481
    %v3486 = vunpack.c.l.b16 %v3442
    %v3487 = vunpack.c.l.b16 %v3443
    %v3488 = vpack.c.b16 %v3487, %v3486
    %v3490 = vsel %vm3458, %v3483, 0
    %v3493 = vsel %vm3458, %v3488, 0
    %3495 = vmatpush.bf16.xpose.msra.mxu0 0
    %3496 = vmatpush.bf16.xpose.msra.mxu0 0
    %3497 = vmatpush.bf16.xpose.msra.mxu0 0
    %3498 = vmatpush.bf16.xpose.msra.mxu0 0
    %3499 = vmatpush.bf16.xpose.msra.mxu0 0
    %3500 = vmatpush.bf16.xpose.msra.mxu0 0
    %3501 = vmatpush.bf16.xpose.msra.mxu0 0
    %3502 = vmatpush.bf16.xpose.msra.mxu0 %v3493
    %3503 = vmatmul.bf16.gmra.mxu0 %v3490
    %v3504 = vpop.f32.mrf.mxu0
    %v3505 = vadd.f32 0.0, %v3504
    %v3506 = vpop.f32.mrf.mxu0
    %v3507 = vadd.f32 0.0, %v3506
    %3508 = vdwg.mxu0
    %vm3509 = vcmask 130048
    %v3510 = vsel %vm3509, %v3475, -inf
    %3511 = vmax.xlane.f32.xlu0 %v3510
    %v3512 = vpop.xlane.xlu0 %3511
    %v3513 = vsel %vm3509, %v3477, -inf
    %3514 = vmax.xlane.f32.xlu0 %v3513
    %v3515 = vpop.xlane.xlu0 %3514
    %v3516 = vsel %vm3509, %v3505, -inf
    %3517 = vmax.xlane.f32.xlu0 %v3516
    %v3518 = vpop.xlane.xlu0 %3517
    %v3519 = vsel %vm3509, %v3507, -inf
    %3520 = vmax.xlane.f32.xlu0 %v3519
    %v3521 = vpop.xlane.xlu0 %3520
    %v3522 = vsub.f32 %v3475, %v3512
    %v3523 = vsub.f32 %v3477, %v3515
    %v3524 = vsub.f32 %v3505, %v3518
    %v3525 = vsub.f32 %v3507, %v3521
    %v3526 = vmul.f32 %v3522, 1.442695
    %v3527 = vpow.pop %v3526
    %v3528 = vmul.f32 %v3523, 1.442695
    %v3529 = vpow.pop %v3528
    %v3530 = vmul.f32 %v3524, 1.442695
    %v3531 = vpow.pop %v3530
    %v3532 = vmul.f32 %v3525, 1.442695
    %v3533 = vpow.pop %v3532
    %v3534 = vsel %vm3509, %v3527, 0.0
    %3535 = vadd.xlane.f32.xlu0 %v3534
    %v3536 = vpop.xlane.xlu0 %3535
    %v3537 = vsel %vm3509, %v3529, 0.0
    %3538 = vadd.xlane.f32.xlu0 %v3537
    %v3539 = vpop.xlane.xlu0 %3538
    %v3540 = vsel %vm3509, %v3531, 0.0
    %3541 = vadd.xlane.f32.xlu0 %v3540
    %v3542 = vpop.xlane.xlu0 %3541
    %v3543 = vsel %vm3509, %v3533, 0.0
    %3544 = vadd.xlane.f32.xlu0 %v3543
    %v3545 = vpop.xlane.xlu0 %3544
    %v3546 = vrcp.pop %v3536
    %v3547 = vrcp.pop %v3539
    %v3548 = vrcp.pop %v3542
    %v3549 = vrcp.pop %v3545
    %v3550 = vmul.f32 %v3527, %v3546
    %v3551 = vmul.f32 %v3529, %v3547
    %v3552 = vmul.f32 %v3531, %v3548
    %v3553 = vmul.f32 %v3533, %v3549
    %v3554 = vpack.c.bf16 %v3550, %v3550
    %v3555 = vpack.c.bf16 %v3551, %v3551
    %v3556 = vpack.c.bf16 %v3552, %v3552
    %v3557 = vpack.c.bf16 %v3553, %v3553
    %v3560 = vunpack.c.l.b16 %v3554
    %v3561 = vunpack.c.l.b16 %v3555
    %v3562 = vpack.c.b16 %v3561, %v3560
    %v3565 = vunpack.c.l.b16 %v3444
    %v3566 = vunpack.c.l.b16 %v3445
    %v3567 = vpack.c.b16 %v3566, %v3565
    %v3570 = vsel %vm3509, %v3562, 0
    %3572 = vmatpush.bf16.msra.mxu0 0
    %3573 = vmatpush.bf16.msra.mxu0 0
    %3574 = vmatpush.bf16.msra.mxu0 0
    %3575 = vmatpush.bf16.msra.mxu0 0
    %3576 = vmatpush.bf16.msra.mxu0 0
    %3577 = vmatpush.bf16.msra.mxu0 0
    %3578 = vmatpush.bf16.msra.mxu0 0
    %3579 = vmatpush.bf16.msra.mxu0 %v3567
    %3580 = vmatmul.bf16.gmra.mxu0 %v3570
    %v3581 = vpop.f32.mrf.mxu0
    %v3582 = vadd.f32 0.0, %v3581
    %v3583 = vpop.f32.mrf.mxu0
    %v3584 = vadd.f32 0.0, %v3583
    %3585 = vdwg.mxu0
    %v3588 = vunpack.c.l.b16 %v3556
    %v3589 = vunpack.c.l.b16 %v3557
    %v3590 = vpack.c.b16 %v3589, %v3588
    %v3593 = vunpack.c.l.b16 %v3446
    %v3594 = vunpack.c.l.b16 %v3447
    %v3595 = vpack.c.b16 %v3594, %v3593
    %v3598 = vsel %vm3509, %v3590, 0
    %3600 = vmatpush.bf16.msra.mxu0 0
    %3601 = vmatpush.bf16.msra.mxu0 0
    %3602 = vmatpush.bf16.msra.mxu0 0
    %3603 = vmatpush.bf16.msra.mxu0 0
    %3604 = vmatpush.bf16.msra.mxu0 0
    %3605 = vmatpush.bf16.msra.mxu0 0
    %3606 = vmatpush.bf16.msra.mxu0 0
    %3607 = vmatpush.bf16.msra.mxu0 %v3595
    %3608 = vmatmul.bf16.gmra.mxu0 %v3598
    %v3609 = vpop.f32.mrf.mxu0
    %v3610 = vadd.f32 0.0, %v3609
    %v3611 = vpop.f32.mrf.mxu0
    %v3612 = vadd.f32 0.0, %v3611
    %3613 = vdwg.mxu0
    %v3614 = vpack.c.bf16 %v3582, %v3582
    %v3615 = vpack.c.bf16 %v3584, %v3584
    %v3616 = vpack.c.bf16 %v3610, %v3610
    %v3617 = vpack.c.bf16 %v3612, %v3612
    %vm3618 = vcmask 519168
    %3619 = vst.msk [vmem:[#allocation3] sm:$0xf] %vm3618, %v3614
    %3620 = vst.msk [vmem:[#allocation3 + $0x10] sm:$0xf] %vm3618, %v3615
    %3621 = vst.msk [vmem:[#allocation3 + $0x20] sm:$0xf] %vm3618, %v3616
    %3622 = vst.msk [vmem:[#allocation3 + $0x30] sm:$0xf] %vm3618, %v3617
    %v3623 = vld [vmem:[#allocation2] sm:$0xf]
    %v3624 = vld [vmem:[#allocation2 + $0x30] sm:$0xf]
    %v3625 = vld [vmem:[#allocation2 + $0x60] sm:$0xf]
    %v3626 = vld [vmem:[#allocation2 + $0x90] sm:$0xf]
    %v3627 = vld [vmem:[#allocation2 + $0x10] sm:$0xf]
    %v3628 = vld [vmem:[#allocation2 + $0x40] sm:$0xf]
    %v3629 = vld [vmem:[#allocation2 + $0x70] sm:$0xf]
    %v3630 = vld [vmem:[#allocation2 + $0xa0] sm:$0xf]
    %v3631 = vld [vmem:[#allocation2 + $0x20] sm:$0xf]
    %v3632 = vld [vmem:[#allocation2 + $0x50] sm:$0xf]
    %v3633 = vld [vmem:[#allocation2 + $0x80] sm:$0xf]
    %v3634 = vld [vmem:[#allocation2 + $0xb0] sm:$0xf]
    %v3637 = vunpack.c.l.b16 %v3623
    %v3638 = vunpack.c.l.b16 %v3624
    %v3639 = vpack.c.b16 %v3638, %v3637
    %3640 = vrot.lane.b32.xlu0 %v3639, 64
    %v3641 = vpop.permute.xlu0 %3640
    %v3644 = vunpack.c.l.b16 %v3627
    %v3645 = vunpack.c.l.b16 %v3628
    %v3646 = vpack.c.b16 %v3645, %v3644
    %3647 = vrot.lane.b32.xlu0 %v3646, 64
    %v3648 = vpop.permute.xlu0 %3647
    %v3650 = vsel %vm3458, %v3641, 0
    %v3653 = vsel %vm3458, %v3648, 0
    %3655 = vmatpush.bf16.xpose.msra.mxu0 0
    %3656 = vmatpush.bf16.xpose.msra.mxu0 0
    %3657 = vmatpush.bf16.xpose.msra.mxu0 0
    %3658 = vmatpush.bf16.xpose.msra.mxu0 0
    %3659 = vmatpush.bf16.xpose.msra.mxu0 0
    %3660 = vmatpush.bf16.xpose.msra.mxu0 0
    %3661 = vmatpush.bf16.xpose.msra.mxu0 0
    %3662 = vmatpush.bf16.xpose.msra.mxu0 %v3653
    %3663 = vmatmul.bf16.gmra.mxu0 %v3650
    %v3664 = vpop.f32.mrf.mxu0
    %v3665 = vadd.f32 0.0, %v3664
    %v3666 = vpop.f32.mrf.mxu0
    %v3667 = vadd.f32 0.0, %v3666
    %3668 = vdwg.mxu0
    %v3671 = vunpack.c.l.b16 %v3625
    %v3672 = vunpack.c.l.b16 %v3626
    %v3673 = vpack.c.b16 %v3672, %v3671
    %3674 = vrot.lane.b32.xlu0 %v3673, 64
    %v3675 = vpop.permute.xlu0 %3674
    %v3678 = vunpack.c.l.b16 %v3629
    %v3679 = vunpack.c.l.b16 %v3630
    %v3680 = vpack.c.b16 %v3679, %v3678
    %3681 = vrot.lane.b32.xlu0 %v3680, 64
    %v3682 = vpop.permute.xlu0 %3681
    %v3684 = vsel %vm3458, %v3675, 0
    %v3687 = vsel %vm3458, %v3682, 0
    %3689 = vmatpush.bf16.xpose.msra.mxu0 0
    %3690 = vmatpush.bf16.xpose.msra.mxu0 0
    %3691 = vmatpush.bf16.xpose.msra.mxu0 0
    %3692 = vmatpush.bf16.xpose.msra.mxu0 0
    %3693 = vmatpush.bf16.xpose.msra.mxu0 0
    %3694 = vmatpush.bf16.xpose.msra.mxu0 0
    %3695 = vmatpush.bf16.xpose.msra.mxu0 0
    %3696 = vmatpush.bf16.xpose.msra.mxu0 %v3687
    %3697 = vmatmul.bf16.gmra.mxu0 %v3684
    %v3698 = vpop.f32.mrf.mxu0
    %v3699 = vadd.f32 0.0, %v3698
    %v3700 = vpop.f32.mrf.mxu0
    %v3701 = vadd.f32 0.0, %v3700
    %3702 = vdwg.mxu0
    %v3703 = vsel %vm3509, %v3665, -inf
    %3704 = vmax.xlane.f32.xlu0 %v3703
    %v3705 = vpop.xlane.xlu0 %3704
    %v3706 = vsel %vm3509, %v3667, -inf
    %3707 = vmax.xlane.f32.xlu0 %v3706
    %v3708 = vpop.xlane.xlu0 %3707
    %v3709 = vsel %vm3509, %v3699, -inf
    %3710 = vmax.xlane.f32.xlu0 %v3709
    %v3711 = vpop.xlane.xlu0 %3710
    %v3712 = vsel %vm3509, %v3701, -inf
    %3713 = vmax.xlane.f32.xlu0 %v3712
    %v3714 = vpop.xlane.xlu0 %3713
    %v3715 = vsub.f32 %v3665, %v3705
    %v3716 = vsub.f32 %v3667, %v3708
    %v3717 = vsub.f32 %v3699, %v3711
    %v3718 = vsub.f32 %v3701, %v3714
    %v3719 = vmul.f32 %v3715, 1.442695
    %v3720 = vpow.pop %v3719
    %v3721 = vmul.f32 %v3716, 1.442695
    %v3722 = vpow.pop %v3721
    %v3723 = vmul.f32 %v3717, 1.442695
    %v3724 = vpow.pop %v3723
    %v3725 = vmul.f32 %v3718, 1.442695
    %v3726 = vpow.pop %v3725
    %v3727 = vsel %vm3509, %v3720, 0.0
    %3728 = vadd.xlane.f32.xlu0 %v3727
    %v3729 = vpop.xlane.xlu0 %3728
    %v3730 = vsel %vm3509, %v3722, 0.0
    %3731 = vadd.xlane.f32.xlu0 %v3730
    %v3732 = vpop.xlane.xlu0 %3731
    %v3733 = vsel %vm3509, %v3724, 0.0
    %3734 = vadd.xlane.f32.xlu0 %v3733
    %v3735 = vpop.xlane.xlu0 %3734
    %v3736 = vsel %vm3509, %v3726, 0.0
    %3737 = vadd.xlane.f32.xlu0 %v3736
    %v3738 = vpop.xlane.xlu0 %3737
    %v3739 = vrcp.pop %v3729
    %v3740 = vrcp.pop %v3732
    %v3741 = vrcp.pop %v3735
    %v3742 = vrcp.pop %v3738
    %v3743 = vmul.f32 %v3720, %v3739
    %v3744 = vmul.f32 %v3722, %v3740
    %v3745 = vmul.f32 %v3724, %v3741
    %v3746 = vmul.f32 %v3726, %v3742
    %v3747 = vpack.c.bf16 %v3743, %v3743
    %v3748 = vpack.c.bf16 %v3744, %v3744
    %v3749 = vpack.c.bf16 %v3745, %v3745
    %v3750 = vpack.c.bf16 %v3746, %v3746
    %v3753 = vunpack.c.l.b16 %v3747
    %v3754 = vunpack.c.l.b16 %v3748
    %v3755 = vpack.c.b16 %v3754, %v3753
    %v3758 = vunpack.c.l.b16 %v3631
    %v3759 = vunpack.c.l.b16 %v3632
    %v3760 = vpack.c.b16 %v3759, %v3758
    %3761 = vrot.lane.b32.xlu0 %v3760, 64
    %v3762 = vpop.permute.xlu0 %3761
    %v3765 = vsel %vm3509, %v3755, 0
    %3767 = vmatpush.bf16.msra.mxu0 0
    %3768 = vmatpush.bf16.msra.mxu0 0
    %3769 = vmatpush.bf16.msra.mxu0 0
    %3770 = vmatpush.bf16.msra.mxu0 0
    %3771 = vmatpush.bf16.msra.mxu0 0
    %3772 = vmatpush.bf16.msra.mxu0 0
    %3773 = vmatpush.bf16.msra.mxu0 0
    %3774 = vmatpush.bf16.msra.mxu0 %v3762
    %3775 = vmatmul.bf16.gmra.mxu0 %v3765
    %v3776 = vpop.f32.mrf.mxu0
    %v3777 = vadd.f32 0.0, %v3776
    %v3778 = vpop.f32.mrf.mxu0
    %v3779 = vadd.f32 0.0, %v3778
    %3780 = vdwg.mxu0
    %v3783 = vunpack.c.l.b16 %v3749
    %v3784 = vunpack.c.l.b16 %v3750
    %v3785 = vpack.c.b16 %v3784, %v3783
    %v3788 = vunpack.c.l.b16 %v3633
    %v3789 = vunpack.c.l.b16 %v3634
    %v3790 = vpack.c.b16 %v3789, %v3788
    %3791 = vrot.lane.b32.xlu0 %v3790, 64
    %v3792 = vpop.permute.xlu0 %3791
    %v3795 = vsel %vm3509, %v3785, 0
    %3797 = vmatpush.bf16.msra.mxu0 0
    %3798 = vmatpush.bf16.msra.mxu0 0
    %3799 = vmatpush.bf16.msra.mxu0 0
    %3800 = vmatpush.bf16.msra.mxu0 0
    %3801 = vmatpush.bf16.msra.mxu0 0
    %3802 = vmatpush.bf16.msra.mxu0 0
    %3803 = vmatpush.bf16.msra.mxu0 0
    %3804 = vmatpush.bf16.msra.mxu0 %v3792
    %3805 = vmatmul.bf16.gmra.mxu0 %v3795
    %v3806 = vpop.f32.mrf.mxu0
    %v3807 = vadd.f32 0.0, %v3806
    %v3808 = vpop.f32.mrf.mxu0
    %v3809 = vadd.f32 0.0, %v3808
    %3810 = vdwg.mxu0
    %v3811 = vpack.c.bf16 %v3777, %v3777
    %v3812 = vpack.c.bf16 %v3779, %v3779
    %v3813 = vpack.c.bf16 %v3807, %v3807
    %v3814 = vpack.c.bf16 %v3809, %v3809
    %3819 = vrot.lane.b32.xlu0 %v3811, 64
    %v3820 = vpop.permute.xlu0 %3819
    %3821 = vrot.lane.b32.xlu0 %v3812, 64
    %v3822 = vpop.permute.xlu0 %3821
    %3823 = vrot.lane.b32.xlu0 %v3813, 64
    %v3824 = vpop.permute.xlu0 %3823
    %3825 = vrot.lane.b32.xlu0 %v3814, 64
    %v3826 = vpop.permute.xlu0 %3825
    %vm3831 = vcmask 1043968
    %3832 = vst.msk [vmem:[#allocation3] sm:$0xf] %vm3831, %v3820
    %3833 = vst.msk [vmem:[#allocation3 + $0x10] sm:$0xf] %vm3831, %v3822
    %3834 = vst.msk [vmem:[#allocation3 + $0x20] sm:$0xf] %vm3831, %v3824
    %3835 = vst.msk [vmem:[#allocation3 + $0x30] sm:$0xf] %vm3831, %v3826
    %v3836 = vld [vmem:[#allocation2 + $0x4] sm:$0xf]
    %v3837 = vld [vmem:[#allocation2 + $0x34] sm:$0xf]
    %v3838 = vld [vmem:[#allocation2 + $0x64] sm:$0xf]
    %v3839 = vld [vmem:[#allocation2 + $0x94] sm:$0xf]
    %v3840 = vld [vmem:[#allocation2 + $0x14] sm:$0xf]
    %v3841 = vld [vmem:[#allocation2 + $0x44] sm:$0xf]
    %v3842 = vld [vmem:[#allocation2 + $0x74] sm:$0xf]
    %v3843 = vld [vmem:[#allocation2 + $0xa4] sm:$0xf]
    %v3844 = vld [vmem:[#allocation2 + $0x24] sm:$0xf]
    %v3845 = vld [vmem:[#allocation2 + $0x54] sm:$0xf]
    %v3846 = vld [vmem:[#allocation2 + $0x84] sm:$0xf]
    %v3847 = vld [vmem:[#allocation2 + $0xb4] sm:$0xf]
    %v3850 = vunpack.c.l.b16 %v3836
    %v3851 = vunpack.c.l.b16 %v3837
    %v3852 = vpack.c.b16 %v3851, %v3850
    %v3855 = vunpack.c.l.b16 %v3840
    %v3856 = vunpack.c.l.b16 %v3841
    %v3857 = vpack.c.b16 %v3856, %v3855
    %v3859 = vsel %vm3458, %v3852, 0
    %v3862 = vsel %vm3458, %v3857, 0
    %3864 = vmatpush.bf16.xpose.msra.mxu0 0
    %3865 = vmatpush.bf16.xpose.msra.mxu0 0
    %3866 = vmatpush.bf16.xpose.msra.mxu0 0
    %3867 = vmatpush.bf16.xpose.msra.mxu0 0
    %3868 = vmatpush.bf16.xpose.msra.mxu0 0
    %3869 = vmatpush.bf16.xpose.msra.mxu0 0
    %3870 = vmatpush.bf16.xpose.msra.mxu0 0
    %3871 = vmatpush.bf16.xpose.msra.mxu0 %v3862
    %3872 = vmatmul.bf16.gmra.mxu0 %v3859
    %v3873 = vpop.f32.mrf.mxu0
    %v3874 = vadd.f32 0.0, %v3873
    %v3875 = vpop.f32.mrf.mxu0
    %v3876 = vadd.f32 0.0, %v3875
    %3877 = vdwg.mxu0
    %v3880 = vunpack.c.l.b16 %v3838
    %v3881 = vunpack.c.l.b16 %v3839
    %v3882 = vpack.c.b16 %v3881, %v3880
    %v3885 = vunpack.c.l.b16 %v3842
    %v3886 = vunpack.c.l.b16 %v3843
    %v3887 = vpack.c.b16 %v3886, %v3885
    %v3889 = vsel %vm3458, %v3882, 0
    %v3892 = vsel %vm3458, %v3887, 0
    %3894 = vmatpush.bf16.xpose.msra.mxu0 0
    %3895 = vmatpush.bf16.xpose.msra.mxu0 0
    %3896 = vmatpush.bf16.xpose.msra.mxu0 0
    %3897 = vmatpush.bf16.xpose.msra.mxu0 0
    %3898 = vmatpush.bf16.xpose.msra.mxu0 0
    %3899 = vmatpush.bf16.xpose.msra.mxu0 0
    %3900 = vmatpush.bf16.xpose.msra.mxu0 0
    %3901 = vmatpush.bf16.xpose.msra.mxu0 %v3892
    %3902 = vmatmul.bf16.gmra.mxu0 %v3889
    %v3903 = vpop.f32.mrf.mxu0
    %v3904 = vadd.f32 0.0, %v3903
    %v3905 = vpop.f32.mrf.mxu0
    %v3906 = vadd.f32 0.0, %v3905
    %3907 = vdwg.mxu0
    %v3908 = vsel %vm3509, %v3874, -inf
    %3909 = vmax.xlane.f32.xlu0 %v3908
    %v3910 = vpop.xlane.xlu0 %3909
    %v3911 = vsel %vm3509, %v3876, -inf
    %3912 = vmax.xlane.f32.xlu0 %v3911
    %v3913 = vpop.xlane.xlu0 %3912
    %v3914 = vsel %vm3509, %v3904, -inf
    %3915 = vmax.xlane.f32.xlu0 %v3914
    %v3916 = vpop.xlane.xlu0 %3915
    %v3917 = vsel %vm3509, %v3906, -inf
    %3918 = vmax.xlane.f32.xlu0 %v3917
    %v3919 = vpop.xlane.xlu0 %3918
    %v3920 = vsub.f32 %v3874, %v3910
    %v3921 = vsub.f32 %v3876, %v3913
    %v3922 = vsub.f32 %v3904, %v3916
    %v3923 = vsub.f32 %v3906, %v3919
    %v3924 = vmul.f32 %v3920, 1.442695
    %v3925 = vpow.pop %v3924
    %v3926 = vmul.f32 %v3921, 1.442695
    %v3927 = vpow.pop %v3926
    %v3928 = vmul.f32 %v3922, 1.442695
    %v3929 = vpow.pop %v3928
    %v3930 = vmul.f32 %v3923, 1.442695
    %v3931 = vpow.pop %v3930
    %v3932 = vsel %vm3509, %v3925, 0.0
    %3933 = vadd.xlane.f32.xlu0 %v3932
    %v3934 = vpop.xlane.xlu0 %3933
    %v3935 = vsel %vm3509, %v3927, 0.0
    %3936 = vadd.xlane.f32.xlu0 %v3935
    %v3937 = vpop.xlane.xlu0 %3936
    %v3938 = vsel %vm3509, %v3929, 0.0
    %3939 = vadd.xlane.f32.xlu0 %v3938
    %v3940 = vpop.xlane.xlu0 %3939
    %v3941 = vsel %vm3509, %v3931, 0.0
    %3942 = vadd.xlane.f32.xlu0 %v3941
    %v3943 = vpop.xlane.xlu0 %3942
    %v3944 = vrcp.pop %v3934
    %v3945 = vrcp.pop %v3937
    %v3946 = vrcp.pop %v3940
    %v3947 = vrcp.pop %v3943
    %v3948 = vmul.f32 %v3925, %v3944
    %v3949 = vmul.f32 %v3927, %v3945
    %v3950 = vmul.f32 %v3929, %v3946
    %v3951 = vmul.f32 %v3931, %v3947
    %v3952 = vpack.c.bf16 %v3948, %v3948
    %v3953 = vpack.c.bf16 %v3949, %v3949
    %v3954 = vpack.c.bf16 %v3950, %v3950
    %v3955 = vpack.c.bf16 %v3951, %v3951
    %v3958 = vunpack.c.l.b16 %v3952
    %v3959 = vunpack.c.l.b16 %v3953
    %v3960 = vpack.c.b16 %v3959, %v3958
    %v3963 = vunpack.c.l.b16 %v3844
    %v3964 = vunpack.c.l.b16 %v3845
    %v3965 = vpack.c.b16 %v3964, %v3963
    %v3968 = vsel %vm3509, %v3960, 0
    %3970 = vmatpush.bf16.msra.mxu0 0
    %3971 = vmatpush.bf16.msra.mxu0 0
    %3972 = vmatpush.bf16.msra.mxu0 0
    %3973 = vmatpush.bf16.msra.mxu0 0
    %3974 = vmatpush.bf16.msra.mxu0 0
    %3975 = vmatpush.bf16.msra.mxu0 0
    %3976 = vmatpush.bf16.msra.mxu0 0
    %3977 = vmatpush.bf16.msra.mxu0 %v3965
    %3978 = vmatmul.bf16.gmra.mxu0 %v3968
    %v3979 = vpop.f32.mrf.mxu0
    %v3980 = vadd.f32 0.0, %v3979
    %v3981 = vpop.f32.mrf.mxu0
    %v3982 = vadd.f32 0.0, %v3981
    %3983 = vdwg.mxu0
    %v3986 = vunpack.c.l.b16 %v3954
    %v3987 = vunpack.c.l.b16 %v3955
    %v3988 = vpack.c.b16 %v3987, %v3986
    %v3991 = vunpack.c.l.b16 %v3846
    %v3992 = vunpack.c.l.b16 %v3847
    %v3993 = vpack.c.b16 %v3992, %v3991
    %v3996 = vsel %vm3509, %v3988, 0
    %3998 = vmatpush.bf16.msra.mxu0 0
    %3999 = vmatpush.bf16.msra.mxu0 0
    %4000 = vmatpush.bf16.msra.mxu0 0
    %4001 = vmatpush.bf16.msra.mxu0 0
    %4002 = vmatpush.bf16.msra.mxu0 0
    %4003 = vmatpush.bf16.msra.mxu0 0
    %4004 = vmatpush.bf16.msra.mxu0 0
    %4005 = vmatpush.bf16.msra.mxu0 %v3993
    %4006 = vmatmul.bf16.gmra.mxu0 %v3996
    %v4007 = vpop.f32.mrf.mxu0
    %v4008 = vadd.f32 0.0, %v4007
    %v4009 = vpop.f32.mrf.mxu0
    %v4010 = vadd.f32 0.0, %v4009
    %4011 = vdwg.mxu0
    %v4012 = vpack.c.bf16 %v3980, %v3980
    %v4013 = vpack.c.bf16 %v3982, %v3982
    %v4014 = vpack.c.bf16 %v4008, %v4008
    %v4015 = vpack.c.bf16 %v4010, %v4010
    %4016 = vst.msk [vmem:[#allocation3 + $0x4] sm:$0xf] %vm3618, %v4012
    %4017 = vst.msk [vmem:[#allocation3 + $0x14] sm:$0xf] %vm3618, %v4013
    %4018 = vst.msk [vmem:[#allocation3 + $0x24] sm:$0xf] %vm3618, %v4014
    %4019 = vst.msk [vmem:[#allocation3 + $0x34] sm:$0xf] %vm3618, %v4015
    %v4020 = vld [vmem:[#allocation2 + $0x4] sm:$0xf]
    %v4021 = vld [vmem:[#allocation2 + $0x34] sm:$0xf]
    %v4022 = vld [vmem:[#allocation2 + $0x64] sm:$0xf]
    %v4023 = vld [vmem:[#allocation2 + $0x94] sm:$0xf]
    %v4024 = vld [vmem:[#allocation2 + $0x14] sm:$0xf]
    %v4025 = vld [vmem:[#allocation2 + $0x44] sm:$0xf]
    %v4026 = vld [vmem:[#allocation2 + $0x74] sm:$0xf]
    %v4027 = vld [vmem:[#allocation2 + $0xa4] sm:$0xf]
    %v4028 = vld [vmem:[#allocation2 + $0x24] sm:$0xf]
    %v4029 = vld [vmem:[#allocation2 + $0x54] sm:$0xf]
    %v4030 = vld [vmem:[#allocation2 + $0x84] sm:$0xf]
    %v4031 = vld [vmem:[#allocation2 + $0xb4] sm:$0xf]
    %v4034 = vunpack.c.l.b16 %v4020
    %v4035 = vunpack.c.l.b16 %v4021
    %v4036 = vpack.c.b16 %v4035, %v4034
    %4037 = vrot.lane.b32.xlu0 %v4036, 64
    %v4038 = vpop.permute.xlu0 %4037
    %v4041 = vunpack.c.l.b16 %v4024
    %v4042 = vunpack.c.l.b16 %v4025
    %v4043 = vpack.c.b16 %v4042, %v4041
    %4044 = vrot.lane.b32.xlu0 %v4043, 64
    %v4045 = vpop.permute.xlu0 %4044
    %v4047 = vsel %vm3458, %v4038, 0
    %v4050 = vsel %vm3458, %v4045, 0
    %4052 = vmatpush.bf16.xpose.msra.mxu0 0
    %4053 = vmatpush.bf16.xpose.msra.mxu0 0
    %4054 = vmatpush.bf16.xpose.msra.mxu0 0
    %4055 = vmatpush.bf16.xpose.msra.mxu0 0
    %4056 = vmatpush.bf16.xpose.msra.mxu0 0
    %4057 = vmatpush.bf16.xpose.msra.mxu0 0
    %4058 = vmatpush.bf16.xpose.msra.mxu0 0
    %4059 = vmatpush.bf16.xpose.msra.mxu0 %v4050
    %4060 = vmatmul.bf16.gmra.mxu0 %v4047
    %v4061 = vpop.f32.mrf.mxu0
    %v4062 = vadd.f32 0.0, %v4061
    %v4063 = vpop.f32.mrf.mxu0
    %v4064 = vadd.f32 0.0, %v4063
    %4065 = vdwg.mxu0
    %v4068 = vunpack.c.l.b16 %v4022
    %v4069 = vunpack.c.l.b16 %v4023
    %v4070 = vpack.c.b16 %v4069, %v4068
    %4071 = vrot.lane.b32.xlu0 %v4070, 64
    %v4072 = vpop.permute.xlu0 %4071
    %v4075 = vunpack.c.l.b16 %v4026
    %v4076 = vunpack.c.l.b16 %v4027
    %v4077 = vpack.c.b16 %v4076, %v4075
    %4078 = vrot.lane.b32.xlu0 %v4077, 64
    %v4079 = vpop.permute.xlu0 %4078
    %v4081 = vsel %vm3458, %v4072, 0
    %v4084 = vsel %vm3458, %v4079, 0
    %4086 = vmatpush.bf16.xpose.msra.mxu0 0
    %4087 = vmatpush.bf16.xpose.msra.mxu0 0
    %4088 = vmatpush.bf16.xpose.msra.mxu0 0
    %4089 = vmatpush.bf16.xpose.msra.mxu0 0
    %4090 = vmatpush.bf16.xpose.msra.mxu0 0
    %4091 = vmatpush.bf16.xpose.msra.mxu0 0
    %4092 = vmatpush.bf16.xpose.msra.mxu0 0
    %4093 = vmatpush.bf16.xpose.msra.mxu0 %v4084
    %4094 = vmatmul.bf16.gmra.mxu0 %v4081
    %v4095 = vpop.f32.mrf.mxu0
    %v4096 = vadd.f32 0.0, %v4095
    %v4097 = vpop.f32.mrf.mxu0
    %v4098 = vadd.f32 0.0, %v4097
    %4099 = vdwg.mxu0
    %v4100 = vsel %vm3509, %v4062, -inf
    %4101 = vmax.xlane.f32.xlu0 %v4100
    %v4102 = vpop.xlane.xlu0 %4101
    %v4103 = vsel %vm3509, %v4064, -inf
    %4104 = vmax.xlane.f32.xlu0 %v4103
    %v4105 = vpop.xlane.xlu0 %4104
    %v4106 = vsel %vm3509, %v4096, -inf
    %4107 = vmax.xlane.f32.xlu0 %v4106
    %v4108 = vpop.xlane.xlu0 %4107
    %v4109 = vsel %vm3509, %v4098, -inf
    %4110 = vmax.xlane.f32.xlu0 %v4109
    %v4111 = vpop.xlane.xlu0 %4110
    %v4112 = vsub.f32 %v4062, %v4102
    %v4113 = vsub.f32 %v4064, %v4105
    %v4114 = vsub.f32 %v4096, %v4108
    %v4115 = vsub.f32 %v4098, %v4111
    %v4116 = vmul.f32 %v4112, 1.442695
    %v4117 = vpow.pop %v4116
    %v4118 = vmul.f32 %v4113, 1.442695
    %v4119 = vpow.pop %v4118
    %v4120 = vmul.f32 %v4114, 1.442695
    %v4121 = vpow.pop %v4120
    %v4122 = vmul.f32 %v4115, 1.442695
    %v4123 = vpow.pop %v4122
    %v4124 = vsel %vm3509, %v4117, 0.0
    %4125 = vadd.xlane.f32.xlu0 %v4124
    %v4126 = vpop.xlane.xlu0 %4125
    %v4127 = vsel %vm3509, %v4119, 0.0
    %4128 = vadd.xlane.f32.xlu0 %v4127
    %v4129 = vpop.xlane.xlu0 %4128
    %v4130 = vsel %vm3509, %v4121, 0.0
    %4131 = vadd.xlane.f32.xlu0 %v4130
    %v4132 = vpop.xlane.xlu0 %4131
    %v4133 = vsel %vm3509, %v4123, 0.0
    %4134 = vadd.xlane.f32.xlu0 %v4133
    %v4135 = vpop.xlane.xlu0 %4134
    %v4136 = vrcp.pop %v4126
    %v4137 = vrcp.pop %v4129
    %v4138 = vrcp.pop %v4132
    %v4139 = vrcp.pop %v4135
    %v4140 = vmul.f32 %v4117, %v4136
    %v4141 = vmul.f32 %v4119, %v4137
    %v4142 = vmul.f32 %v4121, %v4138
    %v4143 = vmul.f32 %v4123, %v4139
    %v4144 = vpack.c.bf16 %v4140, %v4140
    %v4145 = vpack.c.bf16 %v4141, %v4141
    %v4146 = vpack.c.bf16 %v4142, %v4142
    %v4147 = vpack.c.bf16 %v4143, %v4143
    %v4150 = vunpack.c.l.b16 %v4144
    %v4151 = vunpack.c.l.b16 %v4145
    %v4152 = vpack.c.b16 %v4151, %v4150
    %v4155 = vunpack.c.l.b16 %v4028
    %v4156 = vunpack.c.l.b16 %v4029
    %v4157 = vpack.c.b16 %v4156, %v4155
    %4158 = vrot.lane.b32.xlu0 %v4157, 64
    %v4159 = vpop.permute.xlu0 %4158
    %v4162 = vsel %vm3509, %v4152, 0
    %4164 = vmatpush.bf16.msra.mxu0 0
    %4165 = vmatpush.bf16.msra.mxu0 0
    %4166 = vmatpush.bf16.msra.mxu0 0
    %4167 = vmatpush.bf16.msra.mxu0 0
    %4168 = vmatpush.bf16.msra.mxu0 0
    %4169 = vmatpush.bf16.msra.mxu0 0
    %4170 = vmatpush.bf16.msra.mxu0 0
    %4171 = vmatpush.bf16.msra.mxu0 %v4159
    %4172 = vmatmul.bf16.gmra.mxu0 %v4162
    %v4173 = vpop.f32.mrf.mxu0
    %v4174 = vadd.f32 0.0, %v4173
    %v4175 = vpop.f32.mrf.mxu0
    %v4176 = vadd.f32 0.0, %v4175
    %4177 = vdwg.mxu0
    %v4180 = vunpack.c.l.b16 %v4146
    %v4181 = vunpack.c.l.b16 %v4147
    %v4182 = vpack.c.b16 %v4181, %v4180
    %v4185 = vunpack.c.l.b16 %v4030
    %v4186 = vunpack.c.l.b16 %v4031
    %v4187 = vpack.c.b16 %v4186, %v4185
    %4188 = vrot.lane.b32.xlu0 %v4187, 64
    %v4189 = vpop.permute.xlu0 %4188
    %v4192 = vsel %vm3509, %v4182, 0
    %4194 = vmatpush.bf16.msra.mxu0 0
    %4195 = vmatpush.bf16.msra.mxu0 0
    %4196 = vmatpush.bf16.msra.mxu0 0
    %4197 = vmatpush.bf16.msra.mxu0 0
    %4198 = vmatpush.bf16.msra.mxu0 0
    %4199 = vmatpush.bf16.msra.mxu0 0
    %4200 = vmatpush.bf16.msra.mxu0 0
    %4201 = vmatpush.bf16.msra.mxu0 %v4189
    %4202 = vmatmul.bf16.gmra.mxu0 %v4192
    %v4203 = vpop.f32.mrf.mxu0
    %v4204 = vadd.f32 0.0, %v4203
    %v4205 = vpop.f32.mrf.mxu0
    %v4206 = vadd.f32 0.0, %v4205
    %4207 = vdwg.mxu0
    %v4208 = vpack.c.bf16 %v4174, %v4174
    %v4209 = vpack.c.bf16 %v4176, %v4176
    %v4210 = vpack.c.bf16 %v4204, %v4204
    %v4211 = vpack.c.bf16 %v4206, %v4206
    %4216 = vrot.lane.b32.xlu0 %v4208, 64
    %v4217 = vpop.permute.xlu0 %4216
    %4218 = vrot.lane.b32.xlu0 %v4209, 64
    %v4219 = vpop.permute.xlu0 %4218
    %4220 = vrot.lane.b32.xlu0 %v4210, 64
    %v4221 = vpop.permute.xlu0 %4220
    %4222 = vrot.lane.b32.xlu0 %v4211, 64
    %v4223 = vpop.permute.xlu0 %4222
    %4228 = vst.msk [vmem:[#allocation3 + $0x4] sm:$0xf] %vm3831, %v4217
    %4229 = vst.msk [vmem:[#allocation3 + $0x14] sm:$0xf] %vm3831, %v4219
    %4230 = vst.msk [vmem:[#allocation3 + $0x24] sm:$0xf] %vm3831, %v4221
    %4231 = vst.msk [vmem:[#allocation3 + $0x34] sm:$0xf] %vm3831, %v4223
    %v4232 = vld [vmem:[#allocation2 + $0x8] sm:$0xf]
    %v4233 = vld [vmem:[#allocation2 + $0x38] sm:$0xf]
    %v4234 = vld [vmem:[#allocation2 + $0x68] sm:$0xf]
    %v4235 = vld [vmem:[#allocation2 + $0x98] sm:$0xf]
    %v4236 = vld [vmem:[#allocation2 + $0x18] sm:$0xf]
    %v4237 = vld [vmem:[#allocation2 + $0x48] sm:$0xf]
    %v4238 = vld [vmem:[#allocation2 + $0x78] sm:$0xf]
    %v4239 = vld [vmem:[#allocation2 + $0xa8] sm:$0xf]
    %v4240 = vld [vmem:[#allocation2 + $0x28] sm:$0xf]
    %v4241 = vld [vmem:[#allocation2 + $0x58] sm:$0xf]
    %v4242 = vld [vmem:[#allocation2 + $0x88] sm:$0xf]
    %v4243 = vld [vmem:[#allocation2 + $0xb8] sm:$0xf]
    %v4246 = vunpack.c.l.b16 %v4232
    %v4247 = vunpack.c.l.b16 %v4233
    %v4248 = vpack.c.b16 %v4247, %v4246
    %v4251 = vunpack.c.l.b16 %v4236
    %v4252 = vunpack.c.l.b16 %v4237
    %v4253 = vpack.c.b16 %v4252, %v4251
    %v4255 = vsel %vm3458, %v4248, 0
    %v4258 = vsel %vm3458, %v4253, 0
    %4260 = vmatpush.bf16.xpose.msra.mxu0 0
    %4261 = vmatpush.bf16.xpose.msra.mxu0 0
    %4262 = vmatpush.bf16.xpose.msra.mxu0 0
    %4263 = vmatpush.bf16.xpose.msra.mxu0 0
    %4264 = vmatpush.bf16.xpose.msra.mxu0 0
    %4265 = vmatpush.bf16.xpose.msra.mxu0 0
    %4266 = vmatpush.bf16.xpose.msra.mxu0 0
    %4267 = vmatpush.bf16.xpose.msra.mxu0 %v4258
    %4268 = vmatmul.bf16.gmra.mxu0 %v4255
    %v4269 = vpop.f32.mrf.mxu0
    %v4270 = vadd.f32 0.0, %v4269
    %v4271 = vpop.f32.mrf.mxu0
    %v4272 = vadd.f32 0.0, %v4271
    %4273 = vdwg.mxu0
    %v4276 = vunpack.c.l.b16 %v4234
    %v4277 = vunpack.c.l.b16 %v4235
    %v4278 = vpack.c.b16 %v4277, %v4276
    %v4281 = vunpack.c.l.b16 %v4238
    %v4282 = vunpack.c.l.b16 %v4239
    %v4283 = vpack.c.b16 %v4282, %v4281
    %v4285 = vsel %vm3458, %v4278, 0
    %v4288 = vsel %vm3458, %v4283, 0
    %4290 = vmatpush.bf16.xpose.msra.mxu0 0
    %4291 = vmatpush.bf16.xpose.msra.mxu0 0
    %4292 = vmatpush.bf16.xpose.msra.mxu0 0
    %4293 = vmatpush.bf16.xpose.msra.mxu0 0
    %4294 = vmatpush.bf16.xpose.msra.mxu0 0
    %4295 = vmatpush.bf16.xpose.msra.mxu0 0
    %4296 = vmatpush.bf16.xpose.msra.mxu0 0
    %4297 = vmatpush.bf16.xpose.msra.mxu0 %v4288
    %4298 = vmatmul.bf16.gmra.mxu0 %v4285
    %v4299 = vpop.f32.mrf.mxu0
    %v4300 = vadd.f32 0.0, %v4299
    %v4301 = vpop.f32.mrf.mxu0
    %v4302 = vadd.f32 0.0, %v4301
    %4303 = vdwg.mxu0
    %v4304 = vsel %vm3509, %v4270, -inf
    %4305 = vmax.xlane.f32.xlu0 %v4304
    %v4306 = vpop.xlane.xlu0 %4305
    %v4307 = vsel %vm3509, %v4272, -inf
    %4308 = vmax.xlane.f32.xlu0 %v4307
    %v4309 = vpop.xlane.xlu0 %4308
    %v4310 = vsel %vm3509, %v4300, -inf
    %4311 = vmax.xlane.f32.xlu0 %v4310
    %v4312 = vpop.xlane.xlu0 %4311
    %v4313 = vsel %vm3509, %v4302, -inf
    %4314 = vmax.xlane.f32.xlu0 %v4313
    %v4315 = vpop.xlane.xlu0 %4314
    %v4316 = vsub.f32 %v4270, %v4306
    %v4317 = vsub.f32 %v4272, %v4309
    %v4318 = vsub.f32 %v4300, %v4312
    %v4319 = vsub.f32 %v4302, %v4315
    %v4320 = vmul.f32 %v4316, 1.442695
    %v4321 = vpow.pop %v4320
    %v4322 = vmul.f32 %v4317, 1.442695
    %v4323 = vpow.pop %v4322
    %v4324 = vmul.f32 %v4318, 1.442695
    %v4325 = vpow.pop %v4324
    %v4326 = vmul.f32 %v4319, 1.442695
    %v4327 = vpow.pop %v4326
    %v4328 = vsel %vm3509, %v4321, 0.0
    %4329 = vadd.xlane.f32.xlu0 %v4328
    %v4330 = vpop.xlane.xlu0 %4329
    %v4331 = vsel %vm3509, %v4323, 0.0
    %4332 = vadd.xlane.f32.xlu0 %v4331
    %v4333 = vpop.xlane.xlu0 %4332
    %v4334 = vsel %vm3509, %v4325, 0.0
    %4335 = vadd.xlane.f32.xlu0 %v4334
    %v4336 = vpop.xlane.xlu0 %4335
    %v4337 = vsel %vm3509, %v4327, 0.0
    %4338 = vadd.xlane.f32.xlu0 %v4337
    %v4339 = vpop.xlane.xlu0 %4338
    %v4340 = vrcp.pop %v4330
    %v4341 = vrcp.pop %v4333
    %v4342 = vrcp.pop %v4336
    %v4343 = vrcp.pop %v4339
    %v4344 = vmul.f32 %v4321, %v4340
    %v4345 = vmul.f32 %v4323, %v4341
    %v4346 = vmul.f32 %v4325, %v4342
    %v4347 = vmul.f32 %v4327, %v4343
    %v4348 = vpack.c.bf16 %v4344, %v4344
    %v4349 = vpack.c.bf16 %v4345, %v4345
    %v4350 = vpack.c.bf16 %v4346, %v4346
    %v4351 = vpack.c.bf16 %v4347, %v4347
    %v4354 = vunpack.c.l.b16 %v4348
    %v4355 = vunpack.c.l.b16 %v4349
    %v4356 = vpack.c.b16 %v4355, %v4354
    %v4359 = vunpack.c.l.b16 %v4240
    %v4360 = vunpack.c.l.b16 %v4241
    %v4361 = vpack.c.b16 %v4360, %v4359
    %v4364 = vsel %vm3509, %v4356, 0
    %4366 = vmatpush.bf16.msra.mxu0 0
    %4367 = vmatpush.bf16.msra.mxu0 0
    %4368 = vmatpush.bf16.msra.mxu0 0
    %4369 = vmatpush.bf16.msra.mxu0 0
    %4370 = vmatpush.bf16.msra.mxu0 0
    %4371 = vmatpush.bf16.msra.mxu0 0
    %4372 = vmatpush.bf16.msra.mxu0 0
    %4373 = vmatpush.bf16.msra.mxu0 %v4361
    %4374 = vmatmul.bf16.gmra.mxu0 %v4364
    %v4375 = vpop.f32.mrf.mxu0
    %v4376 = vadd.f32 0.0, %v4375
    %v4377 = vpop.f32.mrf.mxu0
    %v4378 = vadd.f32 0.0, %v4377
    %4379 = vdwg.mxu0
    %v4382 = vunpack.c.l.b16 %v4350
    %v4383 = vunpack.c.l.b16 %v4351
    %v4384 = vpack.c.b16 %v4383, %v4382
    %v4387 = vunpack.c.l.b16 %v4242
    %v4388 = vunpack.c.l.b16 %v4243
    %v4389 = vpack.c.b16 %v4388, %v4387
    %v4392 = vsel %vm3509, %v4384, 0
    %4394 = vmatpush.bf16.msra.mxu0 0
    %4395 = vmatpush.bf16.msra.mxu0 0
    %4396 = vmatpush.bf16.msra.mxu0 0
    %4397 = vmatpush.bf16.msra.mxu0 0
    %4398 = vmatpush.bf16.msra.mxu0 0
    %4399 = vmatpush.bf16.msra.mxu0 0
    %4400 = vmatpush.bf16.msra.mxu0 0
    %4401 = vmatpush.bf16.msra.mxu0 %v4389
    %4402 = vmatmul.bf16.gmra.mxu0 %v4392
    %v4403 = vpop.f32.mrf.mxu0
    %v4404 = vadd.f32 0.0, %v4403
    %v4405 = vpop.f32.mrf.mxu0
    %v4406 = vadd.f32 0.0, %v4405
    %4407 = vdwg.mxu0
    %v4408 = vpack.c.bf16 %v4376, %v4376
    %v4409 = vpack.c.bf16 %v4378, %v4378
    %v4410 = vpack.c.bf16 %v4404, %v4404
    %v4411 = vpack.c.bf16 %v4406, %v4406
    %4412 = vst.msk [vmem:[#allocation3 + $0x8] sm:$0xf] %vm3618, %v4408
    %4413 = vst.msk [vmem:[#allocation3 + $0x18] sm:$0xf] %vm3618, %v4409
    %4414 = vst.msk [vmem:[#allocation3 + $0x28] sm:$0xf] %vm3618, %v4410
    %4415 = vst.msk [vmem:[#allocation3 + $0x38] sm:$0xf] %vm3618, %v4411
    %v4416 = vld [vmem:[#allocation2 + $0x8] sm:$0xf]
    %v4417 = vld [vmem:[#allocation2 + $0x38] sm:$0xf]
    %v4418 = vld [vmem:[#allocation2 + $0x68] sm:$0xf]
    %v4419 = vld [vmem:[#allocation2 + $0x98] sm:$0xf]
    %v4420 = vld [vmem:[#allocation2 + $0x18] sm:$0xf]
    %v4421 = vld [vmem:[#allocation2 + $0x48] sm:$0xf]
    %v4422 = vld [vmem:[#allocation2 + $0x78] sm:$0xf]
    %v4423 = vld [vmem:[#allocation2 + $0xa8] sm:$0xf]
    %v4424 = vld [vmem:[#allocation2 + $0x28] sm:$0xf]
    %v4425 = vld [vmem:[#allocation2 + $0x58] sm:$0xf]
    %v4426 = vld [vmem:[#allocation2 + $0x88] sm:$0xf]
    %v4427 = vld [vmem:[#allocation2 + $0xb8] sm:$0xf]
    %v4430 = vunpack.c.l.b16 %v4416
    %v4431 = vunpack.c.l.b16 %v4417
    %v4432 = vpack.c.b16 %v4431, %v4430
    %4433 = vrot.lane.b32.xlu0 %v4432, 64
    %v4434 = vpop.permute.xlu0 %4433
    %v4437 = vunpack.c.l.b16 %v4420
    %v4438 = vunpack.c.l.b16 %v4421
    %v4439 = vpack.c.b16 %v4438, %v4437
    %4440 = vrot.lane.b32.xlu0 %v4439, 64
    %v4441 = vpop.permute.xlu0 %4440
    %v4443 = vsel %vm3458, %v4434, 0
    %v4446 = vsel %vm3458, %v4441, 0
    %4448 = vmatpush.bf16.xpose.msra.mxu0 0
    %4449 = vmatpush.bf16.xpose.msra.mxu0 0
    %4450 = vmatpush.bf16.xpose.msra.mxu0 0
    %4451 = vmatpush.bf16.xpose.msra.mxu0 0
    %4452 = vmatpush.bf16.xpose.msra.mxu0 0
    %4453 = vmatpush.bf16.xpose.msra.mxu0 0
    %4454 = vmatpush.bf16.xpose.msra.mxu0 0
    %4455 = vmatpush.bf16.xpose.msra.mxu0 %v4446
    %4456 = vmatmul.bf16.gmra.mxu0 %v4443
    %v4457 = vpop.f32.mrf.mxu0
    %v4458 = vadd.f32 0.0, %v4457
    %v4459 = vpop.f32.mrf.mxu0
    %v4460 = vadd.f32 0.0, %v4459
    %4461 = vdwg.mxu0
    %v4464 = vunpack.c.l.b16 %v4418
    %v4465 = vunpack.c.l.b16 %v4419
    %v4466 = vpack.c.b16 %v4465, %v4464
    %4467 = vrot.lane.b32.xlu0 %v4466, 64
    %v4468 = vpop.permute.xlu0 %4467
    %v4471 = vunpack.c.l.b16 %v4422
    %v4472 = vunpack.c.l.b16 %v4423
    %v4473 = vpack.c.b16 %v4472, %v4471
    %4474 = vrot.lane.b32.xlu0 %v4473, 64
    %v4475 = vpop.permute.xlu0 %4474
    %v4477 = vsel %vm3458, %v4468, 0
    %v4480 = vsel %vm3458, %v4475, 0
    %4482 = vmatpush.bf16.xpose.msra.mxu0 0
    %4483 = vmatpush.bf16.xpose.msra.mxu0 0
    %4484 = vmatpush.bf16.xpose.msra.mxu0 0
    %4485 = vmatpush.bf16.xpose.msra.mxu0 0
    %4486 = vmatpush.bf16.xpose.msra.mxu0 0
    %4487 = vmatpush.bf16.xpose.msra.mxu0 0
    %4488 = vmatpush.bf16.xpose.msra.mxu0 0
    %4489 = vmatpush.bf16.xpose.msra.mxu0 %v4480
    %4490 = vmatmul.bf16.gmra.mxu0 %v4477
    %v4491 = vpop.f32.mrf.mxu0
    %v4492 = vadd.f32 0.0, %v4491
    %v4493 = vpop.f32.mrf.mxu0
    %v4494 = vadd.f32 0.0, %v4493
    %4495 = vdwg.mxu0
    %v4496 = vsel %vm3509, %v4458, -inf
    %4497 = vmax.xlane.f32.xlu0 %v4496
    %v4498 = vpop.xlane.xlu0 %4497
    %v4499 = vsel %vm3509, %v4460, -inf
    %4500 = vmax.xlane.f32.xlu0 %v4499
    %v4501 = vpop.xlane.xlu0 %4500
    %v4502 = vsel %vm3509, %v4492, -inf
    %4503 = vmax.xlane.f32.xlu0 %v4502
    %v4504 = vpop.xlane.xlu0 %4503
    %v4505 = vsel %vm3509, %v4494, -inf
    %4506 = vmax.xlane.f32.xlu0 %v4505
    %v4507 = vpop.xlane.xlu0 %4506
    %v4508 = vsub.f32 %v4458, %v4498
    %v4509 = vsub.f32 %v4460, %v4501
    %v4510 = vsub.f32 %v4492, %v4504
    %v4511 = vsub.f32 %v4494, %v4507
    %v4512 = vmul.f32 %v4508, 1.442695
    %v4513 = vpow.pop %v4512
    %v4514 = vmul.f32 %v4509, 1.442695
    %v4515 = vpow.pop %v4514
    %v4516 = vmul.f32 %v4510, 1.442695
    %v4517 = vpow.pop %v4516
    %v4518 = vmul.f32 %v4511, 1.442695
    %v4519 = vpow.pop %v4518
    %v4520 = vsel %vm3509, %v4513, 0.0
    %4521 = vadd.xlane.f32.xlu0 %v4520
    %v4522 = vpop.xlane.xlu0 %4521
    %v4523 = vsel %vm3509, %v4515, 0.0
    %4524 = vadd.xlane.f32.xlu0 %v4523
    %v4525 = vpop.xlane.xlu0 %4524
    %v4526 = vsel %vm3509, %v4517, 0.0
    %4527 = vadd.xlane.f32.xlu0 %v4526
    %v4528 = vpop.xlane.xlu0 %4527
    %v4529 = vsel %vm3509, %v4519, 0.0
    %4530 = vadd.xlane.f32.xlu0 %v4529
    %v4531 = vpop.xlane.xlu0 %4530
    %v4532 = vrcp.pop %v4522
    %v4533 = vrcp.pop %v4525
    %v4534 = vrcp.pop %v4528
    %v4535 = vrcp.pop %v4531
    %v4536 = vmul.f32 %v4513, %v4532
    %v4537 = vmul.f32 %v4515, %v4533
    %v4538 = vmul.f32 %v4517, %v4534
    %v4539 = vmul.f32 %v4519, %v4535
    %v4540 = vpack.c.bf16 %v4536, %v4536
    %v4541 = vpack.c.bf16 %v4537, %v4537
    %v4542 = vpack.c.bf16 %v4538, %v4538
    %v4543 = vpack.c.bf16 %v4539, %v4539
    %v4546 = vunpack.c.l.b16 %v4540
    %v4547 = vunpack.c.l.b16 %v4541
    %v4548 = vpack.c.b16 %v4547, %v4546
    %v4551 = vunpack.c.l.b16 %v4424
    %v4552 = vunpack.c.l.b16 %v4425
    %v4553 = vpack.c.b16 %v4552, %v4551
    %4554 = vrot.lane.b32.xlu0 %v4553, 64
    %v4555 = vpop.permute.xlu0 %4554
    %v4558 = vsel %vm3509, %v4548, 0
    %4560 = vmatpush.bf16.msra.mxu0 0
    %4561 = vmatpush.bf16.msra.mxu0 0
    %4562 = vmatpush.bf16.msra.mxu0 0
    %4563 = vmatpush.bf16.msra.mxu0 0
    %4564 = vmatpush.bf16.msra.mxu0 0
    %4565 = vmatpush.bf16.msra.mxu0 0
    %4566 = vmatpush.bf16.msra.mxu0 0
    %4567 = vmatpush.bf16.msra.mxu0 %v4555
    %4568 = vmatmul.bf16.gmra.mxu0 %v4558
    %v4569 = vpop.f32.mrf.mxu0
    %v4570 = vadd.f32 0.0, %v4569
    %v4571 = vpop.f32.mrf.mxu0
    %v4572 = vadd.f32 0.0, %v4571
    %4573 = vdwg.mxu0
    %v4576 = vunpack.c.l.b16 %v4542
    %v4577 = vunpack.c.l.b16 %v4543
    %v4578 = vpack.c.b16 %v4577, %v4576
    %v4581 = vunpack.c.l.b16 %v4426
    %v4582 = vunpack.c.l.b16 %v4427
    %v4583 = vpack.c.b16 %v4582, %v4581
    %4584 = vrot.lane.b32.xlu0 %v4583, 64
    %v4585 = vpop.permute.xlu0 %4584
    %v4588 = vsel %vm3509, %v4578, 0
    %4590 = vmatpush.bf16.msra.mxu0 0
    %4591 = vmatpush.bf16.msra.mxu0 0
    %4592 = vmatpush.bf16.msra.mxu0 0
    %4593 = vmatpush.bf16.msra.mxu0 0
    %4594 = vmatpush.bf16.msra.mxu0 0
    %4595 = vmatpush.bf16.msra.mxu0 0
    %4596 = vmatpush.bf16.msra.mxu0 0
    %4597 = vmatpush.bf16.msra.mxu0 %v4585
    %4598 = vmatmul.bf16.gmra.mxu0 %v4588
    %v4599 = vpop.f32.mrf.mxu0
    %v4600 = vadd.f32 0.0, %v4599
    %v4601 = vpop.f32.mrf.mxu0
    %v4602 = vadd.f32 0.0, %v4601
    %4603 = vdwg.mxu0
    %v4604 = vpack.c.bf16 %v4570, %v4570
    %v4605 = vpack.c.bf16 %v4572, %v4572
    %v4606 = vpack.c.bf16 %v4600, %v4600
    %v4607 = vpack.c.bf16 %v4602, %v4602
    %4612 = vrot.lane.b32.xlu0 %v4604, 64
    %v4613 = vpop.permute.xlu0 %4612
    %4614 = vrot.lane.b32.xlu0 %v4605, 64
    %v4615 = vpop.permute.xlu0 %4614
    %4616 = vrot.lane.b32.xlu0 %v4606, 64
    %v4617 = vpop.permute.xlu0 %4616
    %4618 = vrot.lane.b32.xlu0 %v4607, 64
    %v4619 = vpop.permute.xlu0 %4618
    %4624 = vst.msk [vmem:[#allocation3 + $0x8] sm:$0xf] %vm3831, %v4613
    %4625 = vst.msk [vmem:[#allocation3 + $0x18] sm:$0xf] %vm3831, %v4615
    %4626 = vst.msk [vmem:[#allocation3 + $0x28] sm:$0xf] %vm3831, %v4617
    %4627 = vst.msk [vmem:[#allocation3 + $0x38] sm:$0xf] %vm3831, %v4619
    %v4628 = vld [vmem:[#allocation2 + $0xc] sm:$0xf]
    %v4629 = vld [vmem:[#allocation2 + $0x3c] sm:$0xf]
    %v4630 = vld [vmem:[#allocation2 + $0x6c] sm:$0xf]
    %v4631 = vld [vmem:[#allocation2 + $0x9c] sm:$0xf]
    %v4632 = vld [vmem:[#allocation2 + $0x1c] sm:$0xf]
    %v4633 = vld [vmem:[#allocation2 + $0x4c] sm:$0xf]
    %v4634 = vld [vmem:[#allocation2 + $0x7c] sm:$0xf]
    %v4635 = vld [vmem:[#allocation2 + $0xac] sm:$0xf]
    %v4636 = vld [vmem:[#allocation2 + $0x2c] sm:$0xf]
    %v4637 = vld [vmem:[#allocation2 + $0x5c] sm:$0xf]
    %v4638 = vld [vmem:[#allocation2 + $0x8c] sm:$0xf]
    %v4639 = vld [vmem:[#allocation2 + $0xbc] sm:$0xf]
    %v4642 = vunpack.c.l.b16 %v4628
    %v4643 = vunpack.c.l.b16 %v4629
    %v4644 = vpack.c.b16 %v4643, %v4642
    %v4647 = vunpack.c.l.b16 %v4632
    %v4648 = vunpack.c.l.b16 %v4633
    %v4649 = vpack.c.b16 %v4648, %v4647
    %v4651 = vsel %vm3458, %v4644, 0
    %v4654 = vsel %vm3458, %v4649, 0
    %4656 = vmatpush.bf16.xpose.msra.mxu0 0
    %4657 = vmatpush.bf16.xpose.msra.mxu0 0
    %4658 = vmatpush.bf16.xpose.msra.mxu0 0
    %4659 = vmatpush.bf16.xpose.msra.mxu0 0
    %4660 = vmatpush.bf16.xpose.msra.mxu0 0
    %4661 = vmatpush.bf16.xpose.msra.mxu0 0
    %4662 = vmatpush.bf16.xpose.msra.mxu0 0
    %4663 = vmatpush.bf16.xpose.msra.mxu0 %v4654
    %4664 = vmatmul.bf16.gmra.mxu0 %v4651
    %v4665 = vpop.f32.mrf.mxu0
    %v4666 = vadd.f32 0.0, %v4665
    %v4667 = vpop.f32.mrf.mxu0
    %v4668 = vadd.f32 0.0, %v4667
    %4669 = vdwg.mxu0
    %v4672 = vunpack.c.l.b16 %v4630
    %v4673 = vunpack.c.l.b16 %v4631
    %v4674 = vpack.c.b16 %v4673, %v4672
    %v4677 = vunpack.c.l.b16 %v4634
    %v4678 = vunpack.c.l.b16 %v4635
    %v4679 = vpack.c.b16 %v4678, %v4677
    %v4681 = vsel %vm3458, %v4674, 0
    %v4684 = vsel %vm3458, %v4679, 0
    %4686 = vmatpush.bf16.xpose.msra.mxu0 0
    %4687 = vmatpush.bf16.xpose.msra.mxu0 0
    %4688 = vmatpush.bf16.xpose.msra.mxu0 0
    %4689 = vmatpush.bf16.xpose.msra.mxu0 0
    %4690 = vmatpush.bf16.xpose.msra.mxu0 0
    %4691 = vmatpush.bf16.xpose.msra.mxu0 0
    %4692 = vmatpush.bf16.xpose.msra.mxu0 0
    %4693 = vmatpush.bf16.xpose.msra.mxu0 %v4684
    %4694 = vmatmul.bf16.gmra.mxu0 %v4681
    %v4695 = vpop.f32.mrf.mxu0
    %v4696 = vadd.f32 0.0, %v4695
    %v4697 = vpop.f32.mrf.mxu0
    %v4698 = vadd.f32 0.0, %v4697
    %4699 = vdwg.mxu0
    %v4700 = vsel %vm3509, %v4666, -inf
    %4701 = vmax.xlane.f32.xlu0 %v4700
    %v4702 = vpop.xlane.xlu0 %4701
    %v4703 = vsel %vm3509, %v4668, -inf
    %4704 = vmax.xlane.f32.xlu0 %v4703
    %v4705 = vpop.xlane.xlu0 %4704
    %v4706 = vsel %vm3509, %v4696, -inf
    %4707 = vmax.xlane.f32.xlu0 %v4706
    %v4708 = vpop.xlane.xlu0 %4707
    %v4709 = vsel %vm3509, %v4698, -inf
    %4710 = vmax.xlane.f32.xlu0 %v4709
    %v4711 = vpop.xlane.xlu0 %4710
    %v4712 = vsub.f32 %v4666, %v4702
    %v4713 = vsub.f32 %v4668, %v4705
    %v4714 = vsub.f32 %v4696, %v4708
    %v4715 = vsub.f32 %v4698, %v4711
    %v4716 = vmul.f32 %v4712, 1.442695
    %v4717 = vpow.pop %v4716
    %v4718 = vmul.f32 %v4713, 1.442695
    %v4719 = vpow.pop %v4718
    %v4720 = vmul.f32 %v4714, 1.442695
    %v4721 = vpow.pop %v4720
    %v4722 = vmul.f32 %v4715, 1.442695
    %v4723 = vpow.pop %v4722
    %v4724 = vsel %vm3509, %v4717, 0.0
    %4725 = vadd.xlane.f32.xlu0 %v4724
    %v4726 = vpop.xlane.xlu0 %4725
    %v4727 = vsel %vm3509, %v4719, 0.0
    %4728 = vadd.xlane.f32.xlu0 %v4727
    %v4729 = vpop.xlane.xlu0 %4728
    %v4730 = vsel %vm3509, %v4721, 0.0
    %4731 = vadd.xlane.f32.xlu0 %v4730
    %v4732 = vpop.xlane.xlu0 %4731
    %v4733 = vsel %vm3509, %v4723, 0.0
    %4734 = vadd.xlane.f32.xlu0 %v4733
    %v4735 = vpop.xlane.xlu0 %4734
    %v4736 = vrcp.pop %v4726
    %v4737 = vrcp.pop %v4729
    %v4738 = vrcp.pop %v4732
    %v4739 = vrcp.pop %v4735
    %v4740 = vmul.f32 %v4717, %v4736
    %v4741 = vmul.f32 %v4719, %v4737
    %v4742 = vmul.f32 %v4721, %v4738
    %v4743 = vmul.f32 %v4723, %v4739
    %v4744 = vpack.c.bf16 %v4740, %v4740
    %v4745 = vpack.c.bf16 %v4741, %v4741
    %v4746 = vpack.c.bf16 %v4742, %v4742
    %v4747 = vpack.c.bf16 %v4743, %v4743
    %v4750 = vunpack.c.l.b16 %v4744
    %v4751 = vunpack.c.l.b16 %v4745
    %v4752 = vpack.c.b16 %v4751, %v4750
    %v4755 = vunpack.c.l.b16 %v4636
    %v4756 = vunpack.c.l.b16 %v4637
    %v4757 = vpack.c.b16 %v4756, %v4755
    %v4760 = vsel %vm3509, %v4752, 0
    %4762 = vmatpush.bf16.msra.mxu0 0
    %4763 = vmatpush.bf16.msra.mxu0 0
    %4764 = vmatpush.bf16.msra.mxu0 0
    %4765 = vmatpush.bf16.msra.mxu0 0
    %4766 = vmatpush.bf16.msra.mxu0 0
    %4767 = vmatpush.bf16.msra.mxu0 0
    %4768 = vmatpush.bf16.msra.mxu0 0
    %4769 = vmatpush.bf16.msra.mxu0 %v4757
    %4770 = vmatmul.bf16.gmra.mxu0 %v4760
    %v4771 = vpop.f32.mrf.mxu0
    %v4772 = vadd.f32 0.0, %v4771
    %v4773 = vpop.f32.mrf.mxu0
    %v4774 = vadd.f32 0.0, %v4773
    %4775 = vdwg.mxu0
    %v4778 = vunpack.c.l.b16 %v4746
    %v4779 = vunpack.c.l.b16 %v4747
    %v4780 = vpack.c.b16 %v4779, %v4778
    %v4783 = vunpack.c.l.b16 %v4638
    %v4784 = vunpack.c.l.b16 %v4639
    %v4785 = vpack.c.b16 %v4784, %v4783
    %v4788 = vsel %vm3509, %v4780, 0
    %4790 = vmatpush.bf16.msra.mxu0 0
    %4791 = vmatpush.bf16.msra.mxu0 0
    %4792 = vmatpush.bf16.msra.mxu0 0
    %4793 = vmatpush.bf16.msra.mxu0 0
    %4794 = vmatpush.bf16.msra.mxu0 0
    %4795 = vmatpush.bf16.msra.mxu0 0
    %4796 = vmatpush.bf16.msra.mxu0 0
    %4797 = vmatpush.bf16.msra.mxu0 %v4785
    %4798 = vmatmul.bf16.gmra.mxu0 %v4788
    %v4799 = vpop.f32.mrf.mxu0
    %v4800 = vadd.f32 0.0, %v4799
    %v4801 = vpop.f32.mrf.mxu0
    %v4802 = vadd.f32 0.0, %v4801
    %4803 = vdwg.mxu0
    %v4804 = vpack.c.bf16 %v4772, %v4772
    %v4805 = vpack.c.bf16 %v4774, %v4774
    %v4806 = vpack.c.bf16 %v4800, %v4800
    %v4807 = vpack.c.bf16 %v4802, %v4802
    %4808 = vst.msk [vmem:[#allocation3 + $0xc] sm:$0xf] %vm3618, %v4804
    %4809 = vst.msk [vmem:[#allocation3 + $0x1c] sm:$0xf] %vm3618, %v4805
    %4810 = vst.msk [vmem:[#allocation3 + $0x2c] sm:$0xf] %vm3618, %v4806
    %4811 = vst.msk [vmem:[#allocation3 + $0x3c] sm:$0xf] %vm3618, %v4807
    %v4812 = vld [vmem:[#allocation2 + $0xc] sm:$0xf]
    %v4813 = vld [vmem:[#allocation2 + $0x3c] sm:$0xf]
    %v4814 = vld [vmem:[#allocation2 + $0x6c] sm:$0xf]
    %v4815 = vld [vmem:[#allocation2 + $0x9c] sm:$0xf]
    %v4816 = vld [vmem:[#allocation2 + $0x1c] sm:$0xf]
    %v4817 = vld [vmem:[#allocation2 + $0x4c] sm:$0xf]
    %v4818 = vld [vmem:[#allocation2 + $0x7c] sm:$0xf]
    %v4819 = vld [vmem:[#allocation2 + $0xac] sm:$0xf]
    %v4820 = vld [vmem:[#allocation2 + $0x2c] sm:$0xf]
    %v4821 = vld [vmem:[#allocation2 + $0x5c] sm:$0xf]
    %v4822 = vld [vmem:[#allocation2 + $0x8c] sm:$0xf]
    %v4823 = vld [vmem:[#allocation2 + $0xbc] sm:$0xf]
    %v4826 = vunpack.c.l.b16 %v4812
    %v4827 = vunpack.c.l.b16 %v4813
    %v4828 = vpack.c.b16 %v4827, %v4826
    %4829 = vrot.lane.b32.xlu0 %v4828, 64
    %v4830 = vpop.permute.xlu0 %4829
    %v4833 = vunpack.c.l.b16 %v4816
    %v4834 = vunpack.c.l.b16 %v4817
    %v4835 = vpack.c.b16 %v4834, %v4833
    %4836 = vrot.lane.b32.xlu0 %v4835, 64
    %v4837 = vpop.permute.xlu0 %4836
    %v4839 = vsel %vm3458, %v4830, 0
    %v4842 = vsel %vm3458, %v4837, 0
    %4844 = vmatpush.bf16.xpose.msra.mxu0 0
    %4845 = vmatpush.bf16.xpose.msra.mxu0 0
    %4846 = vmatpush.bf16.xpose.msra.mxu0 0
    %4847 = vmatpush.bf16.xpose.msra.mxu0 0
    %4848 = vmatpush.bf16.xpose.msra.mxu0 0
    %4849 = vmatpush.bf16.xpose.msra.mxu0 0
    %4850 = vmatpush.bf16.xpose.msra.mxu0 0
    %4851 = vmatpush.bf16.xpose.msra.mxu0 %v4842
    %4852 = vmatmul.bf16.gmra.mxu0 %v4839
    %v4853 = vpop.f32.mrf.mxu0
    %v4854 = vadd.f32 0.0, %v4853
    %v4855 = vpop.f32.mrf.mxu0
    %v4856 = vadd.f32 0.0, %v4855
    %4857 = vdwg.mxu0
    %v4860 = vunpack.c.l.b16 %v4814
    %v4861 = vunpack.c.l.b16 %v4815
    %v4862 = vpack.c.b16 %v4861, %v4860
    %4863 = vrot.lane.b32.xlu0 %v4862, 64
    %v4864 = vpop.permute.xlu0 %4863
    %v4867 = vunpack.c.l.b16 %v4818
    %v4868 = vunpack.c.l.b16 %v4819
    %v4869 = vpack.c.b16 %v4868, %v4867
    %4870 = vrot.lane.b32.xlu0 %v4869, 64
    %v4871 = vpop.permute.xlu0 %4870
    %v4873 = vsel %vm3458, %v4864, 0
    %v4876 = vsel %vm3458, %v4871, 0
    %4878 = vmatpush.bf16.xpose.msra.mxu0 0
    %4879 = vmatpush.bf16.xpose.msra.mxu0 0
    %4880 = vmatpush.bf16.xpose.msra.mxu0 0
    %4881 = vmatpush.bf16.xpose.msra.mxu0 0
    %4882 = vmatpush.bf16.xpose.msra.mxu0 0
    %4883 = vmatpush.bf16.xpose.msra.mxu0 0
    %4884 = vmatpush.bf16.xpose.msra.mxu0 0
    %4885 = vmatpush.bf16.xpose.msra.mxu0 %v4876
    %4886 = vmatmul.bf16.gmra.mxu0 %v4873
    %v4887 = vpop.f32.mrf.mxu0
    %v4888 = vadd.f32 0.0, %v4887
    %v4889 = vpop.f32.mrf.mxu0
    %v4890 = vadd.f32 0.0, %v4889
    %4891 = vdwg.mxu0
    %v4892 = vsel %vm3509, %v4854, -inf
    %4893 = vmax.xlane.f32.xlu0 %v4892
    %v4894 = vpop.xlane.xlu0 %4893
    %v4895 = vsel %vm3509, %v4856, -inf
    %4896 = vmax.xlane.f32.xlu0 %v4895
    %v4897 = vpop.xlane.xlu0 %4896
    %v4898 = vsel %vm3509, %v4888, -inf
    %4899 = vmax.xlane.f32.xlu0 %v4898
    %v4900 = vpop.xlane.xlu0 %4899
    %v4901 = vsel %vm3509, %v4890, -inf
    %4902 = vmax.xlane.f32.xlu0 %v4901
    %v4903 = vpop.xlane.xlu0 %4902
    %v4904 = vsub.f32 %v4854, %v4894
    %v4905 = vsub.f32 %v4856, %v4897
    %v4906 = vsub.f32 %v4888, %v4900
    %v4907 = vsub.f32 %v4890, %v4903
    %v4908 = vmul.f32 %v4904, 1.442695
    %v4909 = vpow.pop %v4908
    %v4910 = vmul.f32 %v4905, 1.442695
    %v4911 = vpow.pop %v4910
    %v4912 = vmul.f32 %v4906, 1.442695
    %v4913 = vpow.pop %v4912
    %v4914 = vmul.f32 %v4907, 1.442695
    %v4915 = vpow.pop %v4914
    %v4916 = vsel %vm3509, %v4909, 0.0
    %4917 = vadd.xlane.f32.xlu0 %v4916
    %v4918 = vpop.xlane.xlu0 %4917
    %v4919 = vsel %vm3509, %v4911, 0.0
    %4920 = vadd.xlane.f32.xlu0 %v4919
    %v4921 = vpop.xlane.xlu0 %4920
    %v4922 = vsel %vm3509, %v4913, 0.0
    %4923 = vadd.xlane.f32.xlu0 %v4922
    %v4924 = vpop.xlane.xlu0 %4923
    %v4925 = vsel %vm3509, %v4915, 0.0
    %4926 = vadd.xlane.f32.xlu0 %v4925
    %v4927 = vpop.xlane.xlu0 %4926
    %v4928 = vrcp.pop %v4918
    %v4929 = vrcp.pop %v4921
    %v4930 = vrcp.pop %v4924
    %v4931 = vrcp.pop %v4927
    %v4932 = vmul.f32 %v4909, %v4928
    %v4933 = vmul.f32 %v4911, %v4929
    %v4934 = vmul.f32 %v4913, %v4930
    %v4935 = vmul.f32 %v4915, %v4931
    %v4936 = vpack.c.bf16 %v4932, %v4932
    %v4937 = vpack.c.bf16 %v4933, %v4933
    %v4938 = vpack.c.bf16 %v4934, %v4934
    %v4939 = vpack.c.bf16 %v4935, %v4935
    %v4942 = vunpack.c.l.b16 %v4936
    %v4943 = vunpack.c.l.b16 %v4937
    %v4944 = vpack.c.b16 %v4943, %v4942
    %v4947 = vunpack.c.l.b16 %v4820
    %v4948 = vunpack.c.l.b16 %v4821
    %v4949 = vpack.c.b16 %v4948, %v4947
    %4950 = vrot.lane.b32.xlu0 %v4949, 64
    %v4951 = vpop.permute.xlu0 %4950
    %v4954 = vsel %vm3509, %v4944, 0
    %4956 = vmatpush.bf16.msra.mxu0 0
    %4957 = vmatpush.bf16.msra.mxu0 0
    %4958 = vmatpush.bf16.msra.mxu0 0
    %4959 = vmatpush.bf16.msra.mxu0 0
    %4960 = vmatpush.bf16.msra.mxu0 0
    %4961 = vmatpush.bf16.msra.mxu0 0
    %4962 = vmatpush.bf16.msra.mxu0 0
    %4963 = vmatpush.bf16.msra.mxu0 %v4951
    %4964 = vmatmul.bf16.gmra.mxu0 %v4954
    %v4965 = vpop.f32.mrf.mxu0
    %v4966 = vadd.f32 0.0, %v4965
    %v4967 = vpop.f32.mrf.mxu0
    %v4968 = vadd.f32 0.0, %v4967
    %4969 = vdwg.mxu0
    %v4972 = vunpack.c.l.b16 %v4938
    %v4973 = vunpack.c.l.b16 %v4939
    %v4974 = vpack.c.b16 %v4973, %v4972
    %v4977 = vunpack.c.l.b16 %v4822
    %v4978 = vunpack.c.l.b16 %v4823
    %v4979 = vpack.c.b16 %v4978, %v4977
    %4980 = vrot.lane.b32.xlu0 %v4979, 64
    %v4981 = vpop.permute.xlu0 %4980
    %v4984 = vsel %vm3509, %v4974, 0
    %4986 = vmatpush.bf16.msra.mxu0 0
    %4987 = vmatpush.bf16.msra.mxu0 0
    %4988 = vmatpush.bf16.msra.mxu0 0
    %4989 = vmatpush.bf16.msra.mxu0 0
    %4990 = vmatpush.bf16.msra.mxu0 0
    %4991 = vmatpush.bf16.msra.mxu0 0
    %4992 = vmatpush.bf16.msra.mxu0 0
    %4993 = vmatpush.bf16.msra.mxu0 %v4981
    %4994 = vmatmul.bf16.gmra.mxu0 %v4984
    %v4995 = vpop.f32.mrf.mxu0
    %v4996 = vadd.f32 0.0, %v4995
    %v4997 = vpop.f32.mrf.mxu0
    %v4998 = vadd.f32 0.0, %v4997
    %4999 = vdwg.mxu0
    %v5000 = vpack.c.bf16 %v4966, %v4966
    %v5001 = vpack.c.bf16 %v4968, %v4968
    %v5002 = vpack.c.bf16 %v4996, %v4996
    %v5003 = vpack.c.bf16 %v4998, %v4998
    %5008 = vrot.lane.b32.xlu0 %v5000, 64
    %v5009 = vpop.permute.xlu0 %5008
    %5010 = vrot.lane.b32.xlu0 %v5001, 64
    %v5011 = vpop.permute.xlu0 %5010
    %5012 = vrot.lane.b32.xlu0 %v5002, 64
    %v5013 = vpop.permute.xlu0 %5012
    %5014 = vrot.lane.b32.xlu0 %v5003, 64
    %v5015 = vpop.permute.xlu0 %5014
    %5020 = vst.msk [vmem:[#allocation3 + $0xc] sm:$0xf] %vm3831, %v5009
    %5021 = vst.msk [vmem:[#allocation3 + $0x1c] sm:$0xf] %vm3831, %v5011
    %5022 = vst.msk [vmem:[#allocation3 + $0x2c] sm:$0xf] %vm3831, %v5013
    %5023 = vst.msk [vmem:[#allocation3 + $0x3c] sm:$0xf] %vm3831, %v5015
    %v5024 = vld [vmem:[#allocation3] sm:$0xff]
    %v5025 = vld [vmem:[#allocation3 + $0x8] sm:$0xff]
    %v5026 = vld [vmem:[#allocation3 + $0x10] sm:$0xff]
    %v5027 = vld [vmem:[#allocation3 + $0x18] sm:$0xff]
    %v5028 = vld [vmem:[#allocation3 + $0x20] sm:$0xff]
    %v5029 = vld [vmem:[#allocation3 + $0x28] sm:$0xff]
    %v5030 = vld [vmem:[#allocation3 + $0x30] sm:$0xff]
    %v5031 = vld [vmem:[#allocation3 + $0x38] sm:$0xff]
    %v5032 = vld [vmem:[#allocation10] sm:$0xff]
    %v5033 = vld [vmem:[#allocation10 + $0x8] sm:$0xff]
    %v5034 = vld [vmem:[#allocation10 + $0x10] sm:$0xff]
    %v5035 = vld [vmem:[#allocation10 + $0x18] sm:$0xff]
    %v5036 = vld [vmem:[#allocation10 + $0x20] sm:$0xff]
    %v5037 = vld [vmem:[#allocation10 + $0x28] sm:$0xff]
    %v5038 = vld [vmem:[#allocation10 + $0x30] sm:$0xff]
    %v5039 = vld [vmem:[#allocation10 + $0x38] sm:$0xff]
    %v5040 = vld [vmem:[#allocation10 + $0x40] sm:$0xff]
    %v5041 = vld [vmem:[#allocation10 + $0x48] sm:$0xff]
    %v5042 = vld [vmem:[#allocation10 + $0x50] sm:$0xff]
    %v5043 = vld [vmem:[#allocation10 + $0x58] sm:$0xff]
    %v5044 = vld [vmem:[#allocation10 + $0x60] sm:$0xff]
    %v5045 = vld [vmem:[#allocation10 + $0x68] sm:$0xff]
    %v5046 = vld [vmem:[#allocation10 + $0x70] sm:$0xff]
    %v5047 = vld [vmem:[#allocation10 + $0x78] sm:$0xff]
    %v5048 = vld [vmem:[#allocation10 + $0x80] sm:$0xff]
    %v5049 = vld [vmem:[#allocation10 + $0x88] sm:$0xff]
    %v5050 = vld [vmem:[#allocation10 + $0x90] sm:$0xff]
    %v5051 = vld [vmem:[#allocation10 + $0x98] sm:$0xff]
    %v5052 = vld [vmem:[#allocation10 + $0xa0] sm:$0xff]
    %v5053 = vld [vmem:[#allocation10 + $0xa8] sm:$0xff]
    %v5054 = vld [vmem:[#allocation10 + $0xb0] sm:$0xff]
    %v5055 = vld [vmem:[#allocation10 + $0xb8] sm:$0xff]
    %v5056 = vld [vmem:[#allocation10 + $0xc0] sm:$0xff]
    %v5057 = vld [vmem:[#allocation10 + $0xc8] sm:$0xff]
    %v5058 = vld [vmem:[#allocation10 + $0xd0] sm:$0xff]
    %v5059 = vld [vmem:[#allocation10 + $0xd8] sm:$0xff]
    %v5060 = vld [vmem:[#allocation10 + $0xe0] sm:$0xff]
    %v5061 = vld [vmem:[#allocation10 + $0xe8] sm:$0xff]
    %v5062 = vld [vmem:[#allocation10 + $0xf0] sm:$0xff]
    %v5063 = vld [vmem:[#allocation10 + $0xf8] sm:$0xff]
    %v5064 = vld [vmem:[#allocation10 + $0x100] sm:$0xff]
    %v5065 = vld [vmem:[#allocation10 + $0x108] sm:$0xff]
    %v5066 = vld [vmem:[#allocation10 + $0x110] sm:$0xff]
    %v5067 = vld [vmem:[#allocation10 + $0x118] sm:$0xff]
    %v5068 = vld [vmem:[#allocation10 + $0x120] sm:$0xff]
    %v5069 = vld [vmem:[#allocation10 + $0x128] sm:$0xff]
    %v5070 = vld [vmem:[#allocation10 + $0x130] sm:$0xff]
    %v5071 = vld [vmem:[#allocation10 + $0x138] sm:$0xff]
    %v5072 = vld [vmem:[#allocation10 + $0x140] sm:$0xff]
    %v5073 = vld [vmem:[#allocation10 + $0x148] sm:$0xff]
    %v5074 = vld [vmem:[#allocation10 + $0x150] sm:$0xff]
    %v5075 = vld [vmem:[#allocation10 + $0x158] sm:$0xff]
    %v5076 = vld [vmem:[#allocation10 + $0x160] sm:$0xff]
    %v5077 = vld [vmem:[#allocation10 + $0x168] sm:$0xff]
    %v5078 = vld [vmem:[#allocation10 + $0x170] sm:$0xff]
    %v5079 = vld [vmem:[#allocation10 + $0x178] sm:$0xff]
    %v5080 = vld [vmem:[#allocation10 + $0x180] sm:$0xff]
    %v5081 = vld [vmem:[#allocation10 + $0x188] sm:$0xff]
    %v5082 = vld [vmem:[#allocation10 + $0x190] sm:$0xff]
    %v5083 = vld [vmem:[#allocation10 + $0x198] sm:$0xff]
    %v5084 = vld [vmem:[#allocation10 + $0x1a0] sm:$0xff]
    %v5085 = vld [vmem:[#allocation10 + $0x1a8] sm:$0xff]
    %v5086 = vld [vmem:[#allocation10 + $0x1b0] sm:$0xff]
    %v5087 = vld [vmem:[#allocation10 + $0x1b8] sm:$0xff]
    %v5088 = vld [vmem:[#allocation10 + $0x1c0] sm:$0xff]
    %v5089 = vld [vmem:[#allocation10 + $0x1c8] sm:$0xff]
    %v5090 = vld [vmem:[#allocation10 + $0x1d0] sm:$0xff]
    %v5091 = vld [vmem:[#allocation10 + $0x1d8] sm:$0xff]
    %v5092 = vld [vmem:[#allocation10 + $0x1e0] sm:$0xff]
    %v5093 = vld [vmem:[#allocation10 + $0x1e8] sm:$0xff]
    %v5094 = vld [vmem:[#allocation10 + $0x1f0] sm:$0xff]
    %v5095 = vld [vmem:[#allocation10 + $0x1f8] sm:$0xff]
    %v5096 = vld [vmem:[#allocation10 + $0x200] sm:$0xff]
    %v5097 = vld [vmem:[#allocation10 + $0x208] sm:$0xff]
    %v5098 = vld [vmem:[#allocation10 + $0x210] sm:$0xff]
    %v5099 = vld [vmem:[#allocation10 + $0x218] sm:$0xff]
    %v5100 = vld [vmem:[#allocation10 + $0x220] sm:$0xff]
    %v5101 = vld [vmem:[#allocation10 + $0x228] sm:$0xff]
    %v5102 = vld [vmem:[#allocation10 + $0x230] sm:$0xff]
    %v5103 = vld [vmem:[#allocation10 + $0x238] sm:$0xff]
    %v5104 = vld [vmem:[#allocation10 + $0x240] sm:$0xff]
    %v5105 = vld [vmem:[#allocation10 + $0x248] sm:$0xff]
    %v5106 = vld [vmem:[#allocation10 + $0x250] sm:$0xff]
    %v5107 = vld [vmem:[#allocation10 + $0x258] sm:$0xff]
    %v5108 = vld [vmem:[#allocation10 + $0x260] sm:$0xff]
    %v5109 = vld [vmem:[#allocation10 + $0x268] sm:$0xff]
    %v5110 = vld [vmem:[#allocation10 + $0x270] sm:$0xff]
    %v5111 = vld [vmem:[#allocation10 + $0x278] sm:$0xff]
    %v5112 = vld [vmem:[#allocation10 + $0x280] sm:$0xff]
    %v5113 = vld [vmem:[#allocation10 + $0x288] sm:$0xff]
    %v5114 = vld [vmem:[#allocation10 + $0x290] sm:$0xff]
    %v5115 = vld [vmem:[#allocation10 + $0x298] sm:$0xff]
    %v5116 = vld [vmem:[#allocation10 + $0x2a0] sm:$0xff]
    %v5117 = vld [vmem:[#allocation10 + $0x2a8] sm:$0xff]
    %v5118 = vld [vmem:[#allocation10 + $0x2b0] sm:$0xff]
    %v5119 = vld [vmem:[#allocation10 + $0x2b8] sm:$0xff]
    %v5120 = vld [vmem:[#allocation10 + $0x2c0] sm:$0xff]
    %v5121 = vld [vmem:[#allocation10 + $0x2c8] sm:$0xff]
    %v5122 = vld [vmem:[#allocation10 + $0x2d0] sm:$0xff]
    %v5123 = vld [vmem:[#allocation10 + $0x2d8] sm:$0xff]
    %v5124 = vld [vmem:[#allocation10 + $0x2e0] sm:$0xff]
    %v5125 = vld [vmem:[#allocation10 + $0x2e8] sm:$0xff]
    %v5126 = vld [vmem:[#allocation10 + $0x2f0] sm:$0xff]
    %v5127 = vld [vmem:[#allocation10 + $0x2f8] sm:$0xff]
    %v5128 = vld [vmem:[#allocation10 + $0x300] sm:$0xff]
    %v5129 = vld [vmem:[#allocation10 + $0x308] sm:$0xff]
    %v5130 = vld [vmem:[#allocation10 + $0x310] sm:$0xff]
    %v5131 = vld [vmem:[#allocation10 + $0x318] sm:$0xff]
    %v5132 = vld [vmem:[#allocation10 + $0x320] sm:$0xff]
    %v5133 = vld [vmem:[#allocation10 + $0x328] sm:$0xff]
    %v5134 = vld [vmem:[#allocation10 + $0x330] sm:$0xff]
    %v5135 = vld [vmem:[#allocation10 + $0x338] sm:$0xff]
    %v5136 = vld [vmem:[#allocation10 + $0x340] sm:$0xff]
    %v5137 = vld [vmem:[#allocation10 + $0x348] sm:$0xff]
    %v5138 = vld [vmem:[#allocation10 + $0x350] sm:$0xff]
    %v5139 = vld [vmem:[#allocation10 + $0x358] sm:$0xff]
    %v5140 = vld [vmem:[#allocation10 + $0x360] sm:$0xff]
    %v5141 = vld [vmem:[#allocation10 + $0x368] sm:$0xff]
    %v5142 = vld [vmem:[#allocation10 + $0x370] sm:$0xff]
    %v5143 = vld [vmem:[#allocation10 + $0x378] sm:$0xff]
    %v5144 = vld [vmem:[#allocation10 + $0x380] sm:$0xff]
    %v5145 = vld [vmem:[#allocation10 + $0x388] sm:$0xff]
    %v5146 = vld [vmem:[#allocation10 + $0x390] sm:$0xff]
    %v5147 = vld [vmem:[#allocation10 + $0x398] sm:$0xff]
    %v5148 = vld [vmem:[#allocation10 + $0x3a0] sm:$0xff]
    %v5149 = vld [vmem:[#allocation10 + $0x3a8] sm:$0xff]
    %v5150 = vld [vmem:[#allocation10 + $0x3b0] sm:$0xff]
    %v5151 = vld [vmem:[#allocation10 + $0x3b8] sm:$0xff]
    %v5152 = vld [vmem:[#allocation10 + $0x3c0] sm:$0xff]
    %v5153 = vld [vmem:[#allocation10 + $0x3c8] sm:$0xff]
    %v5154 = vld [vmem:[#allocation10 + $0x3d0] sm:$0xff]
    %v5155 = vld [vmem:[#allocation10 + $0x3d8] sm:$0xff]
    %v5156 = vld [vmem:[#allocation10 + $0x3e0] sm:$0xff]
    %v5157 = vld [vmem:[#allocation10 + $0x3e8] sm:$0xff]
    %v5158 = vld [vmem:[#allocation10 + $0x3f0] sm:$0xff]
    %v5159 = vld [vmem:[#allocation10 + $0x3f8] sm:$0xff]
    %v5160 = vld [vmem:[#allocation12] sm:$0xf]
    %v5162 = vperm.slane %v5160, 0
    %v5163 = vperm.slane %v5160, 1
    %v5164 = vperm.slane %v5160, 2
    %v5165 = vperm.slane %v5160, 3
    %v5178 = vunpack.c.l.b16 %v5024
    %v5179 = vunpack.c.h.b16 %v5024
    %v5180 = vunpack.c.l.b16 %v5025
    %v5181 = vunpack.c.h.b16 %v5025
    %v5182 = vunpack.c.l.b16 %v5026
    %v5183 = vunpack.c.h.b16 %v5026
    %v5184 = vunpack.c.l.b16 %v5027
    %v5185 = vunpack.c.h.b16 %v5027
    %v5186 = vunpack.c.l.b16 %v5028
    %v5187 = vunpack.c.h.b16 %v5028
    %v5188 = vunpack.c.l.b16 %v5029
    %v5189 = vunpack.c.h.b16 %v5029
    %v5190 = vunpack.c.l.b16 %v5030
    %v5191 = vunpack.c.h.b16 %v5030
    %v5192 = vunpack.c.l.b16 %v5031
    %v5193 = vunpack.c.h.b16 %v5031
    %v5194 = vpack.c.b16 %v5182, %v5178
    %v5195 = vpack.c.b16 %v5183, %v5179
    %v5196 = vpack.c.b16 %v5184, %v5180
    %v5197 = vpack.c.b16 %v5185, %v5181
    %v5198 = vpack.c.b16 %v5190, %v5186
    %v5199 = vpack.c.b16 %v5191, %v5187
    %v5200 = vpack.c.b16 %v5192, %v5188
    %v5201 = vpack.c.b16 %v5193, %v5189
    %v5338 = vunpack.c.l.b16 %v5032
    %v5339 = vunpack.c.h.b16 %v5032
    %v5340 = vunpack.c.l.b16 %v5033
    %v5341 = vunpack.c.h.b16 %v5033
    %v5342 = vunpack.c.l.b16 %v5034
    %v5343 = vunpack.c.h.b16 %v5034
    %v5344 = vunpack.c.l.b16 %v5035
    %v5345 = vunpack.c.h.b16 %v5035
    %v5346 = vunpack.c.l.b16 %v5036
    %v5347 = vunpack.c.h.b16 %v5036
    %v5348 = vunpack.c.l.b16 %v5037
    %v5349 = vunpack.c.h.b16 %v5037
    %v5350 = vunpack.c.l.b16 %v5038
    %v5351 = vunpack.c.h.b16 %v5038
    %v5352 = vunpack.c.l.b16 %v5039
    %v5353 = vunpack.c.h.b16 %v5039
    %v5354 = vunpack.c.l.b16 %v5040
    %v5355 = vunpack.c.h.b16 %v5040
    %v5356 = vunpack.c.l.b16 %v5041
    %v5357 = vunpack.c.h.b16 %v5041
    %v5358 = vunpack.c.l.b16 %v5042
    %v5359 = vunpack.c.h.b16 %v5042
    %v5360 = vunpack.c.l.b16 %v5043
    %v5361 = vunpack.c.h.b16 %v5043
    %v5362 = vunpack.c.l.b16 %v5044
    %v5363 = vunpack.c.h.b16 %v5044
    %v5364 = vunpack.c.l.b16 %v5045
    %v5365 = vunpack.c.h.b16 %v5045
    %v5366 = vunpack.c.l.b16 %v5046
    %v5367 = vunpack.c.h.b16 %v5046
    %v5368 = vunpack.c.l.b16 %v5047
    %v5369 = vunpack.c.h.b16 %v5047
    %v5370 = vunpack.c.l.b16 %v5048
    %v5371 = vunpack.c.h.b16 %v5048
    %v5372 = vunpack.c.l.b16 %v5049
    %v5373 = vunpack.c.h.b16 %v5049
    %v5374 = vunpack.c.l.b16 %v5050
    %v5375 = vunpack.c.h.b16 %v5050
    %v5376 = vunpack.c.l.b16 %v5051
    %v5377 = vunpack.c.h.b16 %v5051
    %v5378 = vunpack.c.l.b16 %v5052
    %v5379 = vunpack.c.h.b16 %v5052
    %v5380 = vunpack.c.l.b16 %v5053
    %v5381 = vunpack.c.h.b16 %v5053
    %v5382 = vunpack.c.l.b16 %v5054
    %v5383 = vunpack.c.h.b16 %v5054
    %v5384 = vunpack.c.l.b16 %v5055
    %v5385 = vunpack.c.h.b16 %v5055
    %v5386 = vunpack.c.l.b16 %v5056
    %v5387 = vunpack.c.h.b16 %v5056
    %v5388 = vunpack.c.l.b16 %v5057
    %v5389 = vunpack.c.h.b16 %v5057
    %v5390 = vunpack.c.l.b16 %v5058
    %v5391 = vunpack.c.h.b16 %v5058
    %v5392 = vunpack.c.l.b16 %v5059
    %v5393 = vunpack.c.h.b16 %v5059
    %v5394 = vunpack.c.l.b16 %v5060
    %v5395 = vunpack.c.h.b16 %v5060
    %v5396 = vunpack.c.l.b16 %v5061
    %v5397 = vunpack.c.h.b16 %v5061
    %v5398 = vunpack.c.l.b16 %v5062
    %v5399 = vunpack.c.h.b16 %v5062
    %v5400 = vunpack.c.l.b16 %v5063
    %v5401 = vunpack.c.h.b16 %v5063
    %v5402 = vunpack.c.l.b16 %v5064
    %v5403 = vunpack.c.h.b16 %v5064
    %v5404 = vunpack.c.l.b16 %v5065
    %v5405 = vunpack.c.h.b16 %v5065
    %v5406 = vunpack.c.l.b16 %v5066
    %v5407 = vunpack.c.h.b16 %v5066
    %v5408 = vunpack.c.l.b16 %v5067
    %v5409 = vunpack.c.h.b16 %v5067
    %v5410 = vunpack.c.l.b16 %v5068
    %v5411 = vunpack.c.h.b16 %v5068
    %v5412 = vunpack.c.l.b16 %v5069
    %v5413 = vunpack.c.h.b16 %v5069
    %v5414 = vunpack.c.l.b16 %v5070
    %v5415 = vunpack.c.h.b16 %v5070
    %v5416 = vunpack.c.l.b16 %v5071
    %v5417 = vunpack.c.h.b16 %v5071
    %v5418 = vunpack.c.l.b16 %v5072
    %v5419 = vunpack.c.h.b16 %v5072
    %v5420 = vunpack.c.l.b16 %v5073
    %v5421 = vunpack.c.h.b16 %v5073
    %v5422 = vunpack.c.l.b16 %v5074
    %v5423 = vunpack.c.h.b16 %v5074
    %v5424 = vunpack.c.l.b16 %v5075
    %v5425 = vunpack.c.h.b16 %v5075
    %v5426 = vunpack.c.l.b16 %v5076
    %v5427 = vunpack.c.h.b16 %v5076
    %v5428 = vunpack.c.l.b16 %v5077
    %v5429 = vunpack.c.h.b16 %v5077
    %v5430 = vunpack.c.l.b16 %v5078
    %v5431 = vunpack.c.h.b16 %v5078
    %v5432 = vunpack.c.l.b16 %v5079
    %v5433 = vunpack.c.h.b16 %v5079
    %v5434 = vunpack.c.l.b16 %v5080
    %v5435 = vunpack.c.h.b16 %v5080
    %v5436 = vunpack.c.l.b16 %v5081
    %v5437 = vunpack.c.h.b16 %v5081
    %v5438 = vunpack.c.l.b16 %v5082
    %v5439 = vunpack.c.h.b16 %v5082
    %v5440 = vunpack.c.l.b16 %v5083
    %v5441 = vunpack.c.h.b16 %v5083
    %v5442 = vunpack.c.l.b16 %v5084
    %v5443 = vunpack.c.h.b16 %v5084
    %v5444 = vunpack.c.l.b16 %v5085
    %v5445 = vunpack.c.h.b16 %v5085
    %v5446 = vunpack.c.l.b16 %v5086
    %v5447 = vunpack.c.h.b16 %v5086
    %v5448 = vunpack.c.l.b16 %v5087
    %v5449 = vunpack.c.h.b16 %v5087
    %v5450 = vunpack.c.l.b16 %v5088
    %v5451 = vunpack.c.h.b16 %v5088
    %v5452 = vunpack.c.l.b16 %v5089
    %v5453 = vunpack.c.h.b16 %v5089
    %v5454 = vunpack.c.l.b16 %v5090
    %v5455 = vunpack.c.h.b16 %v5090
    %v5456 = vunpack.c.l.b16 %v5091
    %v5457 = vunpack.c.h.b16 %v5091
    %v5458 = vunpack.c.l.b16 %v5092
    %v5459 = vunpack.c.h.b16 %v5092
    %v5460 = vunpack.c.l.b16 %v5093
    %v5461 = vunpack.c.h.b16 %v5093
    %v5462 = vunpack.c.l.b16 %v5094
    %v5463 = vunpack.c.h.b16 %v5094
    %v5464 = vunpack.c.l.b16 %v5095
    %v5465 = vunpack.c.h.b16 %v5095
    %v5466 = vunpack.c.l.b16 %v5096
    %v5467 = vunpack.c.h.b16 %v5096
    %v5468 = vunpack.c.l.b16 %v5097
    %v5469 = vunpack.c.h.b16 %v5097
    %v5470 = vunpack.c.l.b16 %v5098
    %v5471 = vunpack.c.h.b16 %v5098
    %v5472 = vunpack.c.l.b16 %v5099
    %v5473 = vunpack.c.h.b16 %v5099
    %v5474 = vunpack.c.l.b16 %v5100
    %v5475 = vunpack.c.h.b16 %v5100
    %v5476 = vunpack.c.l.b16 %v5101
    %v5477 = vunpack.c.h.b16 %v5101
    %v5478 = vunpack.c.l.b16 %v5102
    %v5479 = vunpack.c.h.b16 %v5102
    %v5480 = vunpack.c.l.b16 %v5103
    %v5481 = vunpack.c.h.b16 %v5103
    %v5482 = vunpack.c.l.b16 %v5104
    %v5483 = vunpack.c.h.b16 %v5104
    %v5484 = vunpack.c.l.b16 %v5105
    %v5485 = vunpack.c.h.b16 %v5105
    %v5486 = vunpack.c.l.b16 %v5106
    %v5487 = vunpack.c.h.b16 %v5106
    %v5488 = vunpack.c.l.b16 %v5107
    %v5489 = vunpack.c.h.b16 %v5107
    %v5490 = vunpack.c.l.b16 %v5108
    %v5491 = vunpack.c.h.b16 %v5108
    %v5492 = vunpack.c.l.b16 %v5109
    %v5493 = vunpack.c.h.b16 %v5109
    %v5494 = vunpack.c.l.b16 %v5110
    %v5495 = vunpack.c.h.b16 %v5110
    %v5496 = vunpack.c.l.b16 %v5111
    %v5497 = vunpack.c.h.b16 %v5111
    %v5498 = vunpack.c.l.b16 %v5112
    %v5499 = vunpack.c.h.b16 %v5112
    %v5500 = vunpack.c.l.b16 %v5113
    %v5501 = vunpack.c.h.b16 %v5113
    %v5502 = vunpack.c.l.b16 %v5114
    %v5503 = vunpack.c.h.b16 %v5114
    %v5504 = vunpack.c.l.b16 %v5115
    %v5505 = vunpack.c.h.b16 %v5115
    %v5506 = vunpack.c.l.b16 %v5116
    %v5507 = vunpack.c.h.b16 %v5116
    %v5508 = vunpack.c.l.b16 %v5117
    %v5509 = vunpack.c.h.b16 %v5117
    %v5510 = vunpack.c.l.b16 %v5118
    %v5511 = vunpack.c.h.b16 %v5118
    %v5512 = vunpack.c.l.b16 %v5119
    %v5513 = vunpack.c.h.b16 %v5119
    %v5514 = vunpack.c.l.b16 %v5120
    %v5515 = vunpack.c.h.b16 %v5120
    %v5516 = vunpack.c.l.b16 %v5121
    %v5517 = vunpack.c.h.b16 %v5121
    %v5518 = vunpack.c.l.b16 %v5122
    %v5519 = vunpack.c.h.b16 %v5122
    %v5520 = vunpack.c.l.b16 %v5123
    %v5521 = vunpack.c.h.b16 %v5123
    %v5522 = vunpack.c.l.b16 %v5124
    %v5523 = vunpack.c.h.b16 %v5124
    %v5524 = vunpack.c.l.b16 %v5125
    %v5525 = vunpack.c.h.b16 %v5125
    %v5526 = vunpack.c.l.b16 %v5126
    %v5527 = vunpack.c.h.b16 %v5126
    %v5528 = vunpack.c.l.b16 %v5127
    %v5529 = vunpack.c.h.b16 %v5127
    %v5530 = vunpack.c.l.b16 %v5128
    %v5531 = vunpack.c.h.b16 %v5128
    %v5532 = vunpack.c.l.b16 %v5129
    %v5533 = vunpack.c.h.b16 %v5129
    %v5534 = vunpack.c.l.b16 %v5130
    %v5535 = vunpack.c.h.b16 %v5130
    %v5536 = vunpack.c.l.b16 %v5131
    %v5537 = vunpack.c.h.b16 %v5131
    %v5538 = vunpack.c.l.b16 %v5132
    %v5539 = vunpack.c.h.b16 %v5132
    %v5540 = vunpack.c.l.b16 %v5133
    %v5541 = vunpack.c.h.b16 %v5133
    %v5542 = vunpack.c.l.b16 %v5134
    %v5543 = vunpack.c.h.b16 %v5134
    %v5544 = vunpack.c.l.b16 %v5135
    %v5545 = vunpack.c.h.b16 %v5135
    %v5546 = vunpack.c.l.b16 %v5136
    %v5547 = vunpack.c.h.b16 %v5136
    %v5548 = vunpack.c.l.b16 %v5137
    %v5549 = vunpack.c.h.b16 %v5137
    %v5550 = vunpack.c.l.b16 %v5138
    %v5551 = vunpack.c.h.b16 %v5138
    %v5552 = vunpack.c.l.b16 %v5139
    %v5553 = vunpack.c.h.b16 %v5139
    %v5554 = vunpack.c.l.b16 %v5140
    %v5555 = vunpack.c.h.b16 %v5140
    %v5556 = vunpack.c.l.b16 %v5141
    %v5557 = vunpack.c.h.b16 %v5141
    %v5558 = vunpack.c.l.b16 %v5142
    %v5559 = vunpack.c.h.b16 %v5142
    %v5560 = vunpack.c.l.b16 %v5143
    %v5561 = vunpack.c.h.b16 %v5143
    %v5562 = vunpack.c.l.b16 %v5144
    %v5563 = vunpack.c.h.b16 %v5144
    %v5564 = vunpack.c.l.b16 %v5145
    %v5565 = vunpack.c.h.b16 %v5145
    %v5566 = vunpack.c.l.b16 %v5146
    %v5567 = vunpack.c.h.b16 %v5146
    %v5568 = vunpack.c.l.b16 %v5147
    %v5569 = vunpack.c.h.b16 %v5147
    %v5570 = vunpack.c.l.b16 %v5148
    %v5571 = vunpack.c.h.b16 %v5148
    %v5572 = vunpack.c.l.b16 %v5149
    %v5573 = vunpack.c.h.b16 %v5149
    %v5574 = vunpack.c.l.b16 %v5150
    %v5575 = vunpack.c.h.b16 %v5150
    %v5576 = vunpack.c.l.b16 %v5151
    %v5577 = vunpack.c.h.b16 %v5151
    %v5578 = vunpack.c.l.b16 %v5152
    %v5579 = vunpack.c.h.b16 %v5152
    %v5580 = vunpack.c.l.b16 %v5153
    %v5581 = vunpack.c.h.b16 %v5153
    %v5582 = vunpack.c.l.b16 %v5154
    %v5583 = vunpack.c.h.b16 %v5154
    %v5584 = vunpack.c.l.b16 %v5155
    %v5585 = vunpack.c.h.b16 %v5155
    %v5586 = vunpack.c.l.b16 %v5156
    %v5587 = vunpack.c.h.b16 %v5156
    %v5588 = vunpack.c.l.b16 %v5157
    %v5589 = vunpack.c.h.b16 %v5157
    %v5590 = vunpack.c.l.b16 %v5158
    %v5591 = vunpack.c.h.b16 %v5158
    %v5592 = vunpack.c.l.b16 %v5159
    %v5593 = vunpack.c.h.b16 %v5159
    %v5594 = vpack.c.b16 %v5342, %v5338
    %v5595 = vpack.c.b16 %v5343, %v5339
    %v5596 = vpack.c.b16 %v5344, %v5340
    %v5597 = vpack.c.b16 %v5345, %v5341
    %v5598 = vpack.c.b16 %v5350, %v5346
    %v5599 = vpack.c.b16 %v5351, %v5347
    %v5600 = vpack.c.b16 %v5352, %v5348
    %v5601 = vpack.c.b16 %v5353, %v5349
    %v5602 = vpack.c.b16 %v5358, %v5354
    %v5603 = vpack.c.b16 %v5359, %v5355
    %v5604 = vpack.c.b16 %v5360, %v5356
    %v5605 = vpack.c.b16 %v5361, %v5357
    %v5606 = vpack.c.b16 %v5366, %v5362
    %v5607 = vpack.c.b16 %v5367, %v5363
    %v5608 = vpack.c.b16 %v5368, %v5364
    %v5609 = vpack.c.b16 %v5369, %v5365
    %v5610 = vpack.c.b16 %v5374, %v5370
    %v5611 = vpack.c.b16 %v5375, %v5371
    %v5612 = vpack.c.b16 %v5376, %v5372
    %v5613 = vpack.c.b16 %v5377, %v5373
    %v5614 = vpack.c.b16 %v5382, %v5378
    %v5615 = vpack.c.b16 %v5383, %v5379
    %v5616 = vpack.c.b16 %v5384, %v5380
    %v5617 = vpack.c.b16 %v5385, %v5381
    %v5618 = vpack.c.b16 %v5390, %v5386
    %v5619 = vpack.c.b16 %v5391, %v5387
    %v5620 = vpack.c.b16 %v5392, %v5388
    %v5621 = vpack.c.b16 %v5393, %v5389
    %v5622 = vpack.c.b16 %v5398, %v5394
    %v5623 = vpack.c.b16 %v5399, %v5395
    %v5624 = vpack.c.b16 %v5400, %v5396
    %v5625 = vpack.c.b16 %v5401, %v5397
    %v5626 = vpack.c.b16 %v5406, %v5402
    %v5627 = vpack.c.b16 %v5407, %v5403
    %v5628 = vpack.c.b16 %v5408, %v5404
    %v5629 = vpack.c.b16 %v5409, %v5405
    %v5630 = vpack.c.b16 %v5414, %v5410
    %v5631 = vpack.c.b16 %v5415, %v5411
    %v5632 = vpack.c.b16 %v5416, %v5412
    %v5633 = vpack.c.b16 %v5417, %v5413
    %v5634 = vpack.c.b16 %v5422, %v5418
    %v5635 = vpack.c.b16 %v5423, %v5419
    %v5636 = vpack.c.b16 %v5424, %v5420
    %v5637 = vpack.c.b16 %v5425, %v5421
    %v5638 = vpack.c.b16 %v5430, %v5426
    %v5639 = vpack.c.b16 %v5431, %v5427
    %v5640 = vpack.c.b16 %v5432, %v5428
    %v5641 = vpack.c.b16 %v5433, %v5429
    %v5642 = vpack.c.b16 %v5438, %v5434
    %v5643 = vpack.c.b16 %v5439, %v5435
    %v5644 = vpack.c.b16 %v5440, %v5436
    %v5645 = vpack.c.b16 %v5441, %v5437
    %v5646 = vpack.c.b16 %v5446, %v5442
    %v5647 = vpack.c.b16 %v5447, %v5443
    %v5648 = vpack.c.b16 %v5448, %v5444
    %v5649 = vpack.c.b16 %v5449, %v5445
    %v5650 = vpack.c.b16 %v5454, %v5450
    %v5651 = vpack.c.b16 %v5455, %v5451
    %v5652 = vpack.c.b16 %v5456, %v5452
    %v5653 = vpack.c.b16 %v5457, %v5453
    %v5654 = vpack.c.b16 %v5462, %v5458
    %v5655 = vpack.c.b16 %v5463, %v5459
    %v5656 = vpack.c.b16 %v5464, %v5460
    %v5657 = vpack.c.b16 %v5465, %v5461
    %v5658 = vpack.c.b16 %v5470, %v5466
    %v5659 = vpack.c.b16 %v5471, %v5467
    %v5660 = vpack.c.b16 %v5472, %v5468
    %v5661 = vpack.c.b16 %v5473, %v5469
    %v5662 = vpack.c.b16 %v5478, %v5474
    %v5663 = vpack.c.b16 %v5479, %v5475
    %v5664 = vpack.c.b16 %v5480, %v5476
    %v5665 = vpack.c.b16 %v5481, %v5477
    %v5666 = vpack.c.b16 %v5486, %v5482
    %v5667 = vpack.c.b16 %v5487, %v5483
    %v5668 = vpack.c.b16 %v5488, %v5484
    %v5669 = vpack.c.b16 %v5489, %v5485
    %v5670 = vpack.c.b16 %v5494, %v5490
    %v5671 = vpack.c.b16 %v5495, %v5491
    %v5672 = vpack.c.b16 %v5496, %v5492
    %v5673 = vpack.c.b16 %v5497, %v5493
    %v5674 = vpack.c.b16 %v5502, %v5498
    %v5675 = vpack.c.b16 %v5503, %v5499
    %v5676 = vpack.c.b16 %v5504, %v5500
    %v5677 = vpack.c.b16 %v5505, %v5501
    %v5678 = vpack.c.b16 %v5510, %v5506
    %v5679 = vpack.c.b16 %v5511, %v5507
    %v5680 = vpack.c.b16 %v5512, %v5508
    %v5681 = vpack.c.b16 %v5513, %v5509
    %v5682 = vpack.c.b16 %v5518, %v5514
    %v5683 = vpack.c.b16 %v5519, %v5515
    %v5684 = vpack.c.b16 %v5520, %v5516
    %v5685 = vpack.c.b16 %v5521, %v5517
    %v5686 = vpack.c.b16 %v5526, %v5522
    %v5687 = vpack.c.b16 %v5527, %v5523
    %v5688 = vpack.c.b16 %v5528, %v5524
    %v5689 = vpack.c.b16 %v5529, %v5525
    %v5690 = vpack.c.b16 %v5534, %v5530
    %v5691 = vpack.c.b16 %v5535, %v5531
    %v5692 = vpack.c.b16 %v5536, %v5532
    %v5693 = vpack.c.b16 %v5537, %v5533
    %v5694 = vpack.c.b16 %v5542, %v5538
    %v5695 = vpack.c.b16 %v5543, %v5539
    %v5696 = vpack.c.b16 %v5544, %v5540
    %v5697 = vpack.c.b16 %v5545, %v5541
    %v5698 = vpack.c.b16 %v5550, %v5546
    %v5699 = vpack.c.b16 %v5551, %v5547
    %v5700 = vpack.c.b16 %v5552, %v5548
    %v5701 = vpack.c.b16 %v5553, %v5549
    %v5702 = vpack.c.b16 %v5558, %v5554
    %v5703 = vpack.c.b16 %v5559, %v5555
    %v5704 = vpack.c.b16 %v5560, %v5556
    %v5705 = vpack.c.b16 %v5561, %v5557
    %v5706 = vpack.c.b16 %v5566, %v5562
    %v5707 = vpack.c.b16 %v5567, %v5563
    %v5708 = vpack.c.b16 %v5568, %v5564
    %v5709 = vpack.c.b16 %v5569, %v5565
    %v5710 = vpack.c.b16 %v5574, %v5570
    %v5711 = vpack.c.b16 %v5575, %v5571
    %v5712 = vpack.c.b16 %v5576, %v5572
    %v5713 = vpack.c.b16 %v5577, %v5573
    %v5714 = vpack.c.b16 %v5582, %v5578
    %v5715 = vpack.c.b16 %v5583, %v5579
    %v5716 = vpack.c.b16 %v5584, %v5580
    %v5717 = vpack.c.b16 %v5585, %v5581
    %v5718 = vpack.c.b16 %v5590, %v5586
    %v5719 = vpack.c.b16 %v5591, %v5587
    %v5720 = vpack.c.b16 %v5592, %v5588
    %v5721 = vpack.c.b16 %v5593, %v5589
    %5850 = vmatpush.bf16.msra.mxu0 %v5622
    %5851 = vmatpush.bf16.msra.mxu0 %v5618
    %5852 = vmatpush.bf16.msra.mxu0 %v5614
    %5853 = vmatpush.bf16.msra.mxu0 %v5610
    %5854 = vmatpush.bf16.msra.mxu0 %v5606
    %5855 = vmatpush.bf16.msra.mxu0 %v5602
    %5856 = vmatpush.bf16.msra.mxu0 %v5598
    %5857 = vmatpush.bf16.msra.mxu0 %v5594
    %5858 = vmatmul.bf16.gmra.mxu0 %v5194
    %v5859 = vpop.f32.mrf.mxu0
    %v5860 = vadd.f32 %v5162, %v5859
    %v5861 = vpop.f32.mrf.mxu0
    %v5862 = vadd.f32 %v5162, %v5861
    %5863 = vmatmul.bf16.gmra.mxu0 %v5198
    %v5864 = vpop.f32.mrf.mxu0
    %v5865 = vadd.f32 %v5162, %v5864
    %v5866 = vpop.f32.mrf.mxu0
    %v5867 = vadd.f32 %v5162, %v5866
    %5868 = vdwg.mxu0
    %5869 = vmatpush.bf16.msra.mxu0 %v5654
    %5870 = vmatpush.bf16.msra.mxu0 %v5650
    %5871 = vmatpush.bf16.msra.mxu0 %v5646
    %5872 = vmatpush.bf16.msra.mxu0 %v5642
    %5873 = vmatpush.bf16.msra.mxu0 %v5638
    %5874 = vmatpush.bf16.msra.mxu0 %v5634
    %5875 = vmatpush.bf16.msra.mxu0 %v5630
    %5876 = vmatpush.bf16.msra.mxu0 %v5626
    %5877 = vmatmul.bf16.gmra.mxu0 %v5195
    %v5878 = vpop.f32.mrf.mxu0
    %v5879 = vadd.f32 %v5860, %v5878
    %v5880 = vpop.f32.mrf.mxu0
    %v5881 = vadd.f32 %v5862, %v5880
    %5882 = vmatmul.bf16.gmra.mxu0 %v5199
    %v5883 = vpop.f32.mrf.mxu0
    %v5884 = vadd.f32 %v5865, %v5883
    %v5885 = vpop.f32.mrf.mxu0
    %v5886 = vadd.f32 %v5867, %v5885
    %5887 = vdwg.mxu0
    %5888 = vmatpush.bf16.msra.mxu0 %v5686
    %5889 = vmatpush.bf16.msra.mxu0 %v5682
    %5890 = vmatpush.bf16.msra.mxu0 %v5678
    %5891 = vmatpush.bf16.msra.mxu0 %v5674
    %5892 = vmatpush.bf16.msra.mxu0 %v5670
    %5893 = vmatpush.bf16.msra.mxu0 %v5666
    %5894 = vmatpush.bf16.msra.mxu0 %v5662
    %5895 = vmatpush.bf16.msra.mxu0 %v5658
    %5896 = vmatmul.bf16.gmra.mxu0 %v5196
    %v5897 = vpop.f32.mrf.mxu0
    %v5898 = vadd.f32 %v5879, %v5897
    %v5899 = vpop.f32.mrf.mxu0
    %v5900 = vadd.f32 %v5881, %v5899
    %5901 = vmatmul.bf16.gmra.mxu0 %v5200
    %v5902 = vpop.f32.mrf.mxu0
    %v5903 = vadd.f32 %v5884, %v5902
    %v5904 = vpop.f32.mrf.mxu0
    %v5905 = vadd.f32 %v5886, %v5904
    %5906 = vdwg.mxu0
    %5907 = vmatpush.bf16.msra.mxu0 %v5718
    %5908 = vmatpush.bf16.msra.mxu0 %v5714
    %5909 = vmatpush.bf16.msra.mxu0 %v5710
    %5910 = vmatpush.bf16.msra.mxu0 %v5706
    %5911 = vmatpush.bf16.msra.mxu0 %v5702
    %5912 = vmatpush.bf16.msra.mxu0 %v5698
    %5913 = vmatpush.bf16.msra.mxu0 %v5694
    %5914 = vmatpush.bf16.msra.mxu0 %v5690
    %5915 = vmatmul.bf16.gmra.mxu0 %v5197
    %v5916 = vpop.f32.mrf.mxu0
    %v5917 = vadd.f32 %v5898, %v5916
    %v5918 = vpop.f32.mrf.mxu0
    %v5919 = vadd.f32 %v5900, %v5918
    %5920 = vmatmul.bf16.gmra.mxu0 %v5201
    %v5921 = vpop.f32.mrf.mxu0
    %v5922 = vadd.f32 %v5903, %v5921
    %v5923 = vpop.f32.mrf.mxu0
    %v5924 = vadd.f32 %v5905, %v5923
    %5925 = vdwg.mxu0
    %5926 = vmatpush.bf16.msra.mxu0 %v5623
    %5927 = vmatpush.bf16.msra.mxu0 %v5619
    %5928 = vmatpush.bf16.msra.mxu0 %v5615
    %5929 = vmatpush.bf16.msra.mxu0 %v5611
    %5930 = vmatpush.bf16.msra.mxu0 %v5607
    %5931 = vmatpush.bf16.msra.mxu0 %v5603
    %5932 = vmatpush.bf16.msra.mxu0 %v5599
    %5933 = vmatpush.bf16.msra.mxu0 %v5595
    %5934 = vmatmul.bf16.gmra.mxu0 %v5194
    %v5935 = vpop.f32.mrf.mxu0
    %v5936 = vadd.f32 %v5163, %v5935
    %v5937 = vpop.f32.mrf.mxu0
    %v5938 = vadd.f32 %v5163, %v5937
    %5939 = vmatmul.bf16.gmra.mxu0 %v5198
    %v5940 = vpop.f32.mrf.mxu0
    %v5941 = vadd.f32 %v5163, %v5940
    %v5942 = vpop.f32.mrf.mxu0
    %v5943 = vadd.f32 %v5163, %v5942
    %5944 = vdwg.mxu0
    %5945 = vmatpush.bf16.msra.mxu0 %v5655
    %5946 = vmatpush.bf16.msra.mxu0 %v5651
    %5947 = vmatpush.bf16.msra.mxu0 %v5647
    %5948 = vmatpush.bf16.msra.mxu0 %v5643
    %5949 = vmatpush.bf16.msra.mxu0 %v5639
    %5950 = vmatpush.bf16.msra.mxu0 %v5635
    %5951 = vmatpush.bf16.msra.mxu0 %v5631
    %5952 = vmatpush.bf16.msra.mxu0 %v5627
    %5953 = vmatmul.bf16.gmra.mxu0 %v5195
    %v5954 = vpop.f32.mrf.mxu0
    %v5955 = vadd.f32 %v5936, %v5954
    %v5956 = vpop.f32.mrf.mxu0
    %v5957 = vadd.f32 %v5938, %v5956
    %5958 = vmatmul.bf16.gmra.mxu0 %v5199
    %v5959 = vpop.f32.mrf.mxu0
    %v5960 = vadd.f32 %v5941, %v5959
    %v5961 = vpop.f32.mrf.mxu0
    %v5962 = vadd.f32 %v5943, %v5961
    %5963 = vdwg.mxu0
    %5964 = vmatpush.bf16.msra.mxu0 %v5687
    %5965 = vmatpush.bf16.msra.mxu0 %v5683
    %5966 = vmatpush.bf16.msra.mxu0 %v5679
    %5967 = vmatpush.bf16.msra.mxu0 %v5675
    %5968 = vmatpush.bf16.msra.mxu0 %v5671
    %5969 = vmatpush.bf16.msra.mxu0 %v5667
    %5970 = vmatpush.bf16.msra.mxu0 %v5663
    %5971 = vmatpush.bf16.msra.mxu0 %v5659
    %5972 = vmatmul.bf16.gmra.mxu0 %v5196
    %v5973 = vpop.f32.mrf.mxu0
    %v5974 = vadd.f32 %v5955, %v5973
    %v5975 = vpop.f32.mrf.mxu0
    %v5976 = vadd.f32 %v5957, %v5975
    %5977 = vmatmul.bf16.gmra.mxu0 %v5200
    %v5978 = vpop.f32.mrf.mxu0
    %v5979 = vadd.f32 %v5960, %v5978
    %v5980 = vpop.f32.mrf.mxu0
    %v5981 = vadd.f32 %v5962, %v5980
    %5982 = vdwg.mxu0
    %5983 = vmatpush.bf16.msra.mxu0 %v5719
    %5984 = vmatpush.bf16.msra.mxu0 %v5715
    %5985 = vmatpush.bf16.msra.mxu0 %v5711
    %5986 = vmatpush.bf16.msra.mxu0 %v5707
    %5987 = vmatpush.bf16.msra.mxu0 %v5703
    %5988 = vmatpush.bf16.msra.mxu0 %v5699
    %5989 = vmatpush.bf16.msra.mxu0 %v5695
    %5990 = vmatpush.bf16.msra.mxu0 %v5691
    %5991 = vmatmul.bf16.gmra.mxu0 %v5197
    %v5992 = vpop.f32.mrf.mxu0
    %v5993 = vadd.f32 %v5974, %v5992
    %v5994 = vpop.f32.mrf.mxu0
    %v5995 = vadd.f32 %v5976, %v5994
    %5996 = vmatmul.bf16.gmra.mxu0 %v5201
    %v5997 = vpop.f32.mrf.mxu0
    %v5998 = vadd.f32 %v5979, %v5997
    %v5999 = vpop.f32.mrf.mxu0
    %v6000 = vadd.f32 %v5981, %v5999
    %6001 = vdwg.mxu0
    %6002 = vmatpush.bf16.msra.mxu0 %v5624
    %6003 = vmatpush.bf16.msra.mxu0 %v5620
    %6004 = vmatpush.bf16.msra.mxu0 %v5616
    %6005 = vmatpush.bf16.msra.mxu0 %v5612
    %6006 = vmatpush.bf16.msra.mxu0 %v5608
    %6007 = vmatpush.bf16.msra.mxu0 %v5604
    %6008 = vmatpush.bf16.msra.mxu0 %v5600
    %6009 = vmatpush.bf16.msra.mxu0 %v5596
    %6010 = vmatmul.bf16.gmra.mxu0 %v5194
    %v6011 = vpop.f32.mrf.mxu0
    %v6012 = vadd.f32 %v5164, %v6011
    %v6013 = vpop.f32.mrf.mxu0
    %v6014 = vadd.f32 %v5164, %v6013
    %6015 = vmatmul.bf16.gmra.mxu0 %v5198
    %v6016 = vpop.f32.mrf.mxu0
    %v6017 = vadd.f32 %v5164, %v6016
    %v6018 = vpop.f32.mrf.mxu0
    %v6019 = vadd.f32 %v5164, %v6018
    %6020 = vdwg.mxu0
    %6021 = vmatpush.bf16.msra.mxu0 %v5656
    %6022 = vmatpush.bf16.msra.mxu0 %v5652
    %6023 = vmatpush.bf16.msra.mxu0 %v5648
    %6024 = vmatpush.bf16.msra.mxu0 %v5644
    %6025 = vmatpush.bf16.msra.mxu0 %v5640
    %6026 = vmatpush.bf16.msra.mxu0 %v5636
    %6027 = vmatpush.bf16.msra.mxu0 %v5632
    %6028 = vmatpush.bf16.msra.mxu0 %v5628
    %6029 = vmatmul.bf16.gmra.mxu0 %v5195
    %v6030 = vpop.f32.mrf.mxu0
    %v6031 = vadd.f32 %v6012, %v6030
    %v6032 = vpop.f32.mrf.mxu0
    %v6033 = vadd.f32 %v6014, %v6032
    %6034 = vmatmul.bf16.gmra.mxu0 %v5199
    %v6035 = vpop.f32.mrf.mxu0
    %v6036 = vadd.f32 %v6017, %v6035
    %v6037 = vpop.f32.mrf.mxu0
    %v6038 = vadd.f32 %v6019, %v6037
    %6039 = vdwg.mxu0
    %6040 = vmatpush.bf16.msra.mxu0 %v5688
    %6041 = vmatpush.bf16.msra.mxu0 %v5684
    %6042 = vmatpush.bf16.msra.mxu0 %v5680
    %6043 = vmatpush.bf16.msra.mxu0 %v5676
    %6044 = vmatpush.bf16.msra.mxu0 %v5672
    %6045 = vmatpush.bf16.msra.mxu0 %v5668
    %6046 = vmatpush.bf16.msra.mxu0 %v5664
    %6047 = vmatpush.bf16.msra.mxu0 %v5660
    %6048 = vmatmul.bf16.gmra.mxu0 %v5196
    %v6049 = vpop.f32.mrf.mxu0
    %v6050 = vadd.f32 %v6031, %v6049
    %v6051 = vpop.f32.mrf.mxu0
    %v6052 = vadd.f32 %v6033, %v6051
    %6053 = vmatmul.bf16.gmra.mxu0 %v5200
    %v6054 = vpop.f32.mrf.mxu0
    %v6055 = vadd.f32 %v6036, %v6054
    %v6056 = vpop.f32.mrf.mxu0
    %v6057 = vadd.f32 %v6038, %v6056
    %6058 = vdwg.mxu0
    %6059 = vmatpush.bf16.msra.mxu0 %v5720
    %6060 = vmatpush.bf16.msra.mxu0 %v5716
    %6061 = vmatpush.bf16.msra.mxu0 %v5712
    %6062 = vmatpush.bf16.msra.mxu0 %v5708
    %6063 = vmatpush.bf16.msra.mxu0 %v5704
    %6064 = vmatpush.bf16.msra.mxu0 %v5700
    %6065 = vmatpush.bf16.msra.mxu0 %v5696
    %6066 = vmatpush.bf16.msra.mxu0 %v5692
    %6067 = vmatmul.bf16.gmra.mxu0 %v5197
    %v6068 = vpop.f32.mrf.mxu0
    %v6069 = vadd.f32 %v6050, %v6068
    %v6070 = vpop.f32.mrf.mxu0
    %v6071 = vadd.f32 %v6052, %v6070
    %6072 = vmatmul.bf16.gmra.mxu0 %v5201
    %v6073 = vpop.f32.mrf.mxu0
    %v6074 = vadd.f32 %v6055, %v6073
    %v6075 = vpop.f32.mrf.mxu0
    %v6076 = vadd.f32 %v6057, %v6075
    %6077 = vdwg.mxu0
    %6078 = vmatpush.bf16.msra.mxu0 %v5625
    %6079 = vmatpush.bf16.msra.mxu0 %v5621
    %6080 = vmatpush.bf16.msra.mxu0 %v5617
    %6081 = vmatpush.bf16.msra.mxu0 %v5613
    %6082 = vmatpush.bf16.msra.mxu0 %v5609
    %6083 = vmatpush.bf16.msra.mxu0 %v5605
    %6084 = vmatpush.bf16.msra.mxu0 %v5601
    %6085 = vmatpush.bf16.msra.mxu0 %v5597
    %6086 = vmatmul.bf16.gmra.mxu0 %v5194
    %v6087 = vpop.f32.mrf.mxu0
    %v6088 = vadd.f32 %v5165, %v6087
    %v6089 = vpop.f32.mrf.mxu0
    %v6090 = vadd.f32 %v5165, %v6089
    %6091 = vmatmul.bf16.gmra.mxu0 %v5198
    %v6092 = vpop.f32.mrf.mxu0
    %v6093 = vadd.f32 %v5165, %v6092
    %v6094 = vpop.f32.mrf.mxu0
    %v6095 = vadd.f32 %v5165, %v6094
    %6096 = vdwg.mxu0
    %6097 = vmatpush.bf16.msra.mxu0 %v5657
    %6098 = vmatpush.bf16.msra.mxu0 %v5653
    %6099 = vmatpush.bf16.msra.mxu0 %v5649
    %6100 = vmatpush.bf16.msra.mxu0 %v5645
    %6101 = vmatpush.bf16.msra.mxu0 %v5641
    %6102 = vmatpush.bf16.msra.mxu0 %v5637
    %6103 = vmatpush.bf16.msra.mxu0 %v5633
    %6104 = vmatpush.bf16.msra.mxu0 %v5629
    %6105 = vmatmul.bf16.gmra.mxu0 %v5195
    %v6106 = vpop.f32.mrf.mxu0
    %v6107 = vadd.f32 %v6088, %v6106
    %v6108 = vpop.f32.mrf.mxu0
    %v6109 = vadd.f32 %v6090, %v6108
    %6110 = vmatmul.bf16.gmra.mxu0 %v5199
    %v6111 = vpop.f32.mrf.mxu0
    %v6112 = vadd.f32 %v6093, %v6111
    %v6113 = vpop.f32.mrf.mxu0
    %v6114 = vadd.f32 %v6095, %v6113
    %6115 = vdwg.mxu0
    %6116 = vmatpush.bf16.msra.mxu0 %v5689
    %6117 = vmatpush.bf16.msra.mxu0 %v5685
    %6118 = vmatpush.bf16.msra.mxu0 %v5681
    %6119 = vmatpush.bf16.msra.mxu0 %v5677
    %6120 = vmatpush.bf16.msra.mxu0 %v5673
    %6121 = vmatpush.bf16.msra.mxu0 %v5669
    %6122 = vmatpush.bf16.msra.mxu0 %v5665
    %6123 = vmatpush.bf16.msra.mxu0 %v5661
    %6124 = vmatmul.bf16.gmra.mxu0 %v5196
    %v6125 = vpop.f32.mrf.mxu0
    %v6126 = vadd.f32 %v6107, %v6125
    %v6127 = vpop.f32.mrf.mxu0
    %v6128 = vadd.f32 %v6109, %v6127
    %6129 = vmatmul.bf16.gmra.mxu0 %v5200
    %v6130 = vpop.f32.mrf.mxu0
    %v6131 = vadd.f32 %v6112, %v6130
    %v6132 = vpop.f32.mrf.mxu0
    %v6133 = vadd.f32 %v6114, %v6132
    %6134 = vdwg.mxu0
    %6135 = vmatpush.bf16.msra.mxu0 %v5721
    %6136 = vmatpush.bf16.msra.mxu0 %v5717
    %6137 = vmatpush.bf16.msra.mxu0 %v5713
    %6138 = vmatpush.bf16.msra.mxu0 %v5709
    %6139 = vmatpush.bf16.msra.mxu0 %v5705
    %6140 = vmatpush.bf16.msra.mxu0 %v5701
    %6141 = vmatpush.bf16.msra.mxu0 %v5697
    %6142 = vmatpush.bf16.msra.mxu0 %v5693
    %6143 = vmatmul.bf16.gmra.mxu0 %v5197
    %v6144 = vpop.f32.mrf.mxu0
    %v6145 = vadd.f32 %v6126, %v6144
    %v6146 = vpop.f32.mrf.mxu0
    %v6147 = vadd.f32 %v6128, %v6146
    %6148 = vmatmul.bf16.gmra.mxu0 %v5201
    %v6149 = vpop.f32.mrf.mxu0
    %v6150 = vadd.f32 %v6131, %v6149
    %v6151 = vpop.f32.mrf.mxu0
    %v6152 = vadd.f32 %v6133, %v6151
    %6153 = vdwg.mxu0
    %6154 = vst [vmem:[#allocation13] sm:$0xff] %v5917
    %6155 = vst [vmem:[#allocation13 + $0x8] sm:$0xff] %v5993
    %6156 = vst [vmem:[#allocation13 + $0x10] sm:$0xff] %v6069
    %6157 = vst [vmem:[#allocation13 + $0x18] sm:$0xff] %v6145
    %6158 = vst [vmem:[#allocation13 + $0x20] sm:$0xff] %v5919
    %6159 = vst [vmem:[#allocation13 + $0x28] sm:$0xff] %v5995
    %6160 = vst [vmem:[#allocation13 + $0x30] sm:$0xff] %v6071
    %6161 = vst [vmem:[#allocation13 + $0x38] sm:$0xff] %v6147
    %6162 = vst [vmem:[#allocation13 + $0x40] sm:$0xff] %v5922
    %6163 = vst [vmem:[#allocation13 + $0x48] sm:$0xff] %v5998
    %6164 = vst [vmem:[#allocation13 + $0x50] sm:$0xff] %v6074
    %6165 = vst [vmem:[#allocation13 + $0x58] sm:$0xff] %v6150
    %6166 = vst [vmem:[#allocation13 + $0x60] sm:$0xff] %v5924
    %6167 = vst [vmem:[#allocation13 + $0x68] sm:$0xff] %v6000
    %6168 = vst [vmem:[#allocation13 + $0x70] sm:$0xff] %v6076
    %6169 = vst [vmem:[#allocation13 + $0x78] sm:$0xff] %v6152
    // Predicated region
    $region42: #{tpu_custom_call.1} parent=1 // pred_check
      _
    $region43: #{tpu_custom_call.1} parent=1 // pred_check_branch
      %6171 = sbr.rel (0) target = $region45
    $region44: #{tpu_custom_call.1} parent=1 // pred_region
      %6173 = vsyncadd [#allocation6], 0
      %s6174 = sshll.u32 [#allocation13], 4
      %s6175 = int_to_ptr.vmem [resolvable:$true] %s6174
      %s6176 = sshll.u32 %s5, 4
      %s6177 = int_to_ptr.hbm [resolvable:$true] %s6176
      %6182 = dma.vmem_to_hbm [thread:$0]  %s6175, 2048, %s6177, [#allocation6], 512, 512, 32
    $region45: #{tpu_custom_call.1} parent=1 // pred_fallthru
      _
    // Predicated region
    $region46: #{tpu_custom_call.1} parent=1 // pred_check
      _
    $region47: #{tpu_custom_call.1} parent=1 // pred_check_branch
      %6184 = sbr.rel (0) target = $region49
    $region48: #{tpu_custom_call.1} parent=1 // pred_region
      %6186 = dma.done [#allocation6], 2048
    $region49: #{tpu_custom_call.1} parent=1 // pred_fallthru
      _
    %6187 = vsyncpa [#allocation5], 1
    %6188 = vsyncpa [#allocation8], 1
    %6189 = vsyncpa [#allocation11], 1
    %6190 = vsyncpa [#allocation6], 1

</llo_original>
